<compile_context>
chip_gen: v7x
topology: tpu7x:2x2x1
jax: 0.10.0
libtpu: 0.0.40
codegen_flags: <defaults>
</compile_context>

<pallas_src>
import functools

import jax
import jax.numpy as jnp
from jax.experimental import pallas as pl
from jax.experimental.pallas import tpu as pltpu


# ----------------------------------------------------------------------------
# Fused Pallas kernel: GCN x2 -> encoder layers -> fc, all in VMEM
# ----------------------------------------------------------------------------
def _layernorm(x, g, b, eps=1e-5):
    # f32 elementwise on purpose (keep VPU path f32; only matmul operands are bf16).
    mu = jnp.mean(x, axis=-1, keepdims=True)
    var = jnp.mean((x - mu) ** 2, axis=-1, keepdims=True)
    return (x - mu) * jax.lax.rsqrt(var + eps) * g + b


def _fused_forward_kernel(a_ref, x_ref,
                          g1w_ref, g1b_ref, g2w_ref, g2b_ref,
                          wa_ref, ba_ref, ln1g_ref, ln1b_ref,
                          w1_ref, b1_ref, w2_ref, b2_ref,
                          ln2g_ref, ln2b_ref,
                          fcw_ref, fcb_ref,
                          o_ref, *, num_layers):
    a = a_ref[...]                                       # (N, N) bf16 normalized adjacency
    xin = x_ref[...].astype(jnp.bfloat16)                # (N, input_dim) bf16 matmul operand

    # ---- GCN stack: relu(A @ (X W1) + b1) ; A @ (h W2) + b2 ------------------
    xw = jnp.dot(xin, g1w_ref[...], preferred_element_type=jnp.float32)
    h = jnp.dot(a, xw.astype(jnp.bfloat16),
                preferred_element_type=jnp.float32) + g1b_ref[...]
    h = jnp.maximum(h, 0.0).astype(jnp.bfloat16)         # fused ReLU + bf16 downcast
    hw = jnp.dot(h, g2w_ref[...], preferred_element_type=jnp.float32)
    x = jnp.dot(a, hw.astype(jnp.bfloat16),
                preferred_element_type=jnp.float32) + g2b_ref[...]   # f32 (N, E)

    # ---- Transformer encoder layers (seq_len == 1 => MHA == out_proj(V(x))) ---
    for l in range(num_layers):                          # static unroll, fine at small L
        # attention path folded to a single bf16 matmul (weights folded offline)
        attn = jnp.dot(x.astype(jnp.bfloat16), wa_ref[l],
                       preferred_element_type=jnp.float32) + ba_ref[l]
        x = _layernorm(x + attn, ln1g_ref[l], ln1b_ref[l])
        # feed-forward: lin1 + ReLU(+downcast) + lin2 fused; (N, dim_ff) never leaves VMEM
        hh = jnp.dot(x.astype(jnp.bfloat16), w1_ref[l],
                     preferred_element_type=jnp.float32) + b1_ref[l]
        hh = jnp.maximum(hh, 0.0).astype(jnp.bfloat16)
        ff = jnp.dot(hh, w2_ref[l], preferred_element_type=jnp.float32) + b2_ref[l]
        x = _layernorm(x + ff, ln2g_ref[l], ln2b_ref[l])

    # ---- final fc -------------------------------------------------------------
    o_ref[...] = jnp.dot(x.astype(jnp.bfloat16), fcw_ref[...],
                         preferred_element_type=jnp.float32) + fcb_ref[...]


def _full_spec(shape):
    nd = len(shape)
    return pl.BlockSpec(shape, lambda *_a, _nd=nd: (0,) * _nd)


def fused_forward(*args):
    (a_norm, x, g1w, g1b, g2w, g2b,
     wa, ba, ln1g, ln1b, w1, b1, w2, b2, ln2g, ln2b, fcw, fcb) = args
    num_layers = wa.shape[0]
    n = x.shape[0]
    out_dim = fcw.shape[1]
    return pl.pallas_call(
        functools.partial(_fused_forward_kernel, num_layers=num_layers),
        out_shape=jax.ShapeDtypeStruct((n, out_dim), jnp.float32),
        in_specs=[_full_spec(a.shape) for a in args],
        out_specs=_full_spec((n, out_dim)),
        compiler_params=pltpu.CompilerParams(
            vmem_limit_bytes=32 * 1024 * 1024),   # headroom over v5e's 16 MiB default
    )(*args)


# ----------------------------------------------------------------------------
# Model glue (plain JAX)
# ----------------------------------------------------------------------------
def gcn_normalized_adjacency(edge_index, num_nodes):
    """Dense D^-1/2 (A + I) D^-1/2, PyG gcn_norm semantics, returned in bf16.

    Duplicate edges are counted; self-loops are only added to nodes that don't
    already have one (add_remaining_self_loops)."""
    src, dst = edge_index[0], edge_index[1]
    a = jnp.zeros((num_nodes, num_nodes), jnp.float32).at[dst, src].add(1.0)
    diag = jnp.diagonal(a)
    a_hat = a + jnp.diag(jnp.where(diag > 0.0, 0.0, 1.0))
    deg = a_hat.sum(axis=1)
    dinv = jnp.where(deg > 0.0, jax.lax.rsqrt(deg), 0.0)
    return (a_hat * dinv[:, None] * dinv[None, :]).astype(jnp.bfloat16)


def init_params(key, input_dim, hidden_dim, output_dim, num_layers, dim_ff):
    def nrm(k, shape, scale=0.05):
        return scale * jax.random.normal(k, shape, jnp.float32)

    keys = iter(jax.random.split(key, 64))
    p = {
        "gcn1_w": nrm(next(keys), (input_dim, hidden_dim)),
        "gcn1_b": jnp.zeros((1, hidden_dim), jnp.float32),
        "gcn2_w": nrm(next(keys), (hidden_dim, hidden_dim)),
        "gcn2_b": jnp.zeros((1, hidden_dim), jnp.float32),
        "fc_w": nrm(next(keys), (hidden_dim, output_dim)),
        "fc_b": jnp.zeros((1, output_dim), jnp.float32),
        "layers": [],
    }
    for _ in range(num_layers):
        E = hidden_dim
        p["layers"].append({
            "in_proj_w": nrm(next(keys), (3 * E, E)),       # torch (out, in) layout
            "in_proj_b": jnp.zeros((3 * E,), jnp.float32),
            "out_proj_w": nrm(next(keys), (E, E)),
            "out_proj_b": jnp.zeros((1, E), jnp.float32),
            "lin1_w": nrm(next(keys), (dim_ff, E)),
            "lin1_b": jnp.zeros((1, dim_ff), jnp.float32),
            "lin2_w": nrm(next(keys), (E, dim_ff)),
            "lin2_b": jnp.zeros((1, E), jnp.float32),
            "ln1_g": jnp.ones((1, E), jnp.float32),
            "ln1_b": jnp.zeros((1, E), jnp.float32),
            "ln2_g": jnp.ones((1, E), jnp.float32),
            "ln2_b": jnp.zeros((1, E), jnp.float32),
        })
    return p


def prepare_params(params):
    """One-time (EAGER, outside jit) weight folding + layout + bf16 casts.

    Returns a tuple of ready-to-use kernel operands; only the adjacency build
    remains per-call work."""
    E = params["gcn1_w"].shape[1]

    wa, ba, ln1g, ln1b, w1, b1, w2, b2, ln2g, ln2b = ([] for _ in range(10))
    for lp in params["layers"]:
        w_v = lp["in_proj_w"][2 * E:3 * E]          # (E, E), torch (out, in)
        b_v = lp["in_proj_b"][2 * E:3 * E]          # (E,)
        # seq_len == 1: attn(x) = (x @ w_v.T + b_v) @ out_proj_w.T + out_proj_b
        #             = x @ (out_proj_w @ w_v).T + (b_v @ out_proj_w.T + out_proj_b)
        wa.append((lp["out_proj_w"] @ w_v).T.astype(jnp.bfloat16))          # (E, E)
        ba.append((b_v @ lp["out_proj_w"].T).reshape(1, E) + lp["out_proj_b"])
        ln1g.append(lp["ln1_g"]); ln1b.append(lp["ln1_b"])
        w1.append(lp["lin1_w"].T.astype(jnp.bfloat16))                      # (E, FF)
        b1.append(lp["lin1_b"])
        w2.append(lp["lin2_w"].T.astype(jnp.bfloat16))                      # (FF, E)
        b2.append(lp["lin2_b"])
        ln2g.append(lp["ln2_g"]); ln2b.append(lp["ln2_b"])

    stack = lambda xs: jnp.stack(xs, axis=0)
    prepped = (params["gcn1_w"].astype(jnp.bfloat16), params["gcn1_b"],
               params["gcn2_w"].astype(jnp.bfloat16), params["gcn2_b"],
               stack(wa), stack(ba), stack(ln1g), stack(ln1b),
               stack(w1), stack(b1), stack(w2), stack(b2),
               stack(ln2g), stack(ln2b),
               params["fc_w"].astype(jnp.bfloat16), params["fc_b"])
    return jax.tree_util.tree_map(jax.block_until_ready, prepped)


@jax.jit
def gcn_transformer_forward(prepped, x, edge_index):
    # Only the adjacency build (depends on edge_index) runs per call; all
    # weight folding/casting/stacking was hoisted into prepare_params().
    a_norm = gcn_normalized_adjacency(edge_index, x.shape[0])
    return fused_forward(a_norm, x, *prepped)


# ----------------------------------------------------------------------------
if __name__ == "__main__":
    NUM_NODES = 16
    INPUT_DIM = 8
    HIDDEN_DIM = 32
    OUTPUT_DIM = 4
    NUM_LAYERS = 2
    DIM_FF = 2048  # torch TransformerEncoderLayer default dim_feedforward

    key = jax.random.PRNGKey(0)
    k_x, k_e, k_p = jax.random.split(key, 3)

    x = jax.random.normal(k_x, (NUM_NODES, INPUT_DIM), jnp.float32)
    edge_index = jax.random.randint(k_e, (2, 40), 0, NUM_NODES, dtype=jnp.int32)

    params = init_params(k_p, INPUT_DIM, HIDDEN_DIM, OUTPUT_DIM, NUM_LAYERS, DIM_FF)
    prepped = prepare_params(params)            # one-time, eager, outside jit

    out = gcn_transformer_forward(prepped, x, edge_index)
    out = jax.block_until_ready(out)

    assert out.shape == (NUM_NODES, OUTPUT_DIM), out.shape
    assert bool(jnp.all(jnp.isfinite(out)))
    print("KERNEL_OK")
</pallas_src>

<mosaic_0001>
module attributes {stable_mosaic.version = 11 : i64} {
  func.func @_fused_forward_kernel(%arg0: memref<16x16xbf16, #tpu.memory_space<vmem>>, %arg1: memref<16x8xf32, #tpu.memory_space<vmem>>, %arg2: memref<8x32xbf16, #tpu.memory_space<vmem>>, %arg3: memref<1x32xf32, #tpu.memory_space<vmem>>, %arg4: memref<32x32xbf16, #tpu.memory_space<vmem>>, %arg5: memref<1x32xf32, #tpu.memory_space<vmem>>, %arg6: memref<2x32x32xbf16, #tpu.memory_space<vmem>>, %arg7: memref<2x1x32xf32, #tpu.memory_space<vmem>>, %arg8: memref<2x1x32xf32, #tpu.memory_space<vmem>>, %arg9: memref<2x1x32xf32, #tpu.memory_space<vmem>>, %arg10: memref<2x32x2048xbf16, #tpu.memory_space<vmem>>, %arg11: memref<2x1x2048xf32, #tpu.memory_space<vmem>>, %arg12: memref<2x2048x32xbf16, #tpu.memory_space<vmem>>, %arg13: memref<2x1x32xf32, #tpu.memory_space<vmem>>, %arg14: memref<2x1x32xf32, #tpu.memory_space<vmem>>, %arg15: memref<2x1x32xf32, #tpu.memory_space<vmem>>, %arg16: memref<32x4xbf16, #tpu.memory_space<vmem>>, %arg17: memref<1x4xf32, #tpu.memory_space<vmem>>, %arg18: memref<16x4xf32, #tpu.memory_space<vmem>>) attributes {dimension_semantics = [], scalar_prefetch = 0 : i64, scratch_operands = 0 : i64, tpu.core_type = #tpu.core_type<tc>} {
    %c0 = arith.constant 0 : index
    %c0_0 = arith.constant 0 : index
    %0 = vector.load %arg0[%c0, %c0_0] : memref<16x16xbf16, #tpu.memory_space<vmem>>, vector<16x16xbf16>
    %c0_1 = arith.constant 0 : index
    %c0_2 = arith.constant 0 : index
    %1 = vector.load %arg1[%c0_1, %c0_2] : memref<16x8xf32, #tpu.memory_space<vmem>>, vector<16x8xf32>
    %2 = arith.truncf %1 : vector<16x8xf32> to vector<16x8xbf16>
    %c0_3 = arith.constant 0 : index
    %c0_4 = arith.constant 0 : index
    %3 = vector.load %arg2[%c0_3, %c0_4] : memref<8x32xbf16, #tpu.memory_space<vmem>>, vector<8x32xbf16>
    %cst = arith.constant dense<0.000000e+00> : vector<16x32xf32>
    %4 = tpu.matmul %2, %3, %cst {dimension_numbers = #tpu.dot_dimension_numbers<[1], [0], [0], [1], [0, 0, 1, 1], [], []>} : vector<16x8xbf16>, vector<8x32xbf16>, vector<16x32xf32> -> vector<16x32xf32>
    %5 = arith.truncf %4 : vector<16x32xf32> to vector<16x32xbf16>
    %cst_5 = arith.constant dense<0.000000e+00> : vector<16x32xf32>
    %6 = tpu.matmul %0, %5, %cst_5 {dimension_numbers = #tpu.dot_dimension_numbers<[1], [0], [0], [1], [0, 0, 1, 1], [], []>} : vector<16x16xbf16>, vector<16x32xbf16>, vector<16x32xf32> -> vector<16x32xf32>
    %c0_6 = arith.constant 0 : index
    %c0_7 = arith.constant 0 : index
    %7 = vector.load %arg3[%c0_6, %c0_7] : memref<1x32xf32, #tpu.memory_space<vmem>>, vector<1x32xf32>
    %8 = vector.broadcast %7 : vector<1x32xf32> to vector<16x32xf32>
    %9 = arith.addf %6, %8 : vector<16x32xf32>
    %cst_8 = arith.constant 0.000000e+00 : f32
    %10 = vector.broadcast %cst_8 : f32 to vector<16x32xf32>
    %11 = arith.maximumf %9, %10 : vector<16x32xf32>
    %12 = arith.truncf %11 : vector<16x32xf32> to vector<16x32xbf16>
    %c0_9 = arith.constant 0 : index
    %c0_10 = arith.constant 0 : index
    %13 = vector.load %arg4[%c0_9, %c0_10] : memref<32x32xbf16, #tpu.memory_space<vmem>>, vector<32x32xbf16>
    %cst_11 = arith.constant dense<0.000000e+00> : vector<16x32xf32>
    %14 = tpu.matmul %12, %13, %cst_11 {dimension_numbers = #tpu.dot_dimension_numbers<[1], [0], [0], [1], [0, 0, 1, 1], [], []>} : vector<16x32xbf16>, vector<32x32xbf16>, vector<16x32xf32> -> vector<16x32xf32>
    %15 = arith.truncf %14 : vector<16x32xf32> to vector<16x32xbf16>
    %cst_12 = arith.constant dense<0.000000e+00> : vector<16x32xf32>
    %16 = tpu.matmul %0, %15, %cst_12 {dimension_numbers = #tpu.dot_dimension_numbers<[1], [0], [0], [1], [0, 0, 1, 1], [], []>} : vector<16x16xbf16>, vector<16x32xbf16>, vector<16x32xf32> -> vector<16x32xf32>
    %c0_13 = arith.constant 0 : index
    %c0_14 = arith.constant 0 : index
    %17 = vector.load %arg5[%c0_13, %c0_14] : memref<1x32xf32, #tpu.memory_space<vmem>>, vector<1x32xf32>
    %18 = vector.broadcast %17 : vector<1x32xf32> to vector<16x32xf32>
    %19 = arith.addf %16, %18 : vector<16x32xf32>
    %20 = arith.truncf %19 : vector<16x32xf32> to vector<16x32xbf16>
    %c0_15 = arith.constant 0 : index
    %c0_16 = arith.constant 0 : index
    %c0_17 = arith.constant 0 : index
    %21 = vector.load %arg6[%c0_15, %c0_16, %c0_17] : memref<2x32x32xbf16, #tpu.memory_space<vmem>>, vector<1x32x32xbf16>
    %22 = vector.shape_cast %21 : vector<1x32x32xbf16> to vector<32x32xbf16>
    %cst_18 = arith.constant dense<0.000000e+00> : vector<16x32xf32>
    %23 = tpu.matmul %20, %22, %cst_18 {dimension_numbers = #tpu.dot_dimension_numbers<[1], [0], [0], [1], [0, 0, 1, 1], [], []>} : vector<16x32xbf16>, vector<32x32xbf16>, vector<16x32xf32> -> vector<16x32xf32>
    %c0_19 = arith.constant 0 : index
    %c0_20 = arith.constant 0 : index
    %c0_21 = arith.constant 0 : index
    %24 = vector.load %arg7[%c0_19, %c0_20, %c0_21] : memref<2x1x32xf32, #tpu.memory_space<vmem>>, vector<1x1x32xf32>
    %25 = vector.shape_cast %24 : vector<1x1x32xf32> to vector<1x32xf32>
    %26 = vector.broadcast %25 : vector<1x32xf32> to vector<16x32xf32>
    %27 = arith.addf %23, %26 : vector<16x32xf32>
    %28 = arith.addf %19, %27 : vector<16x32xf32>
    %c0_22 = arith.constant 0 : index
    %c0_23 = arith.constant 0 : index
    %c0_24 = arith.constant 0 : index
    %29 = vector.load %arg8[%c0_22, %c0_23, %c0_24] : memref<2x1x32xf32, #tpu.memory_space<vmem>>, vector<1x1x32xf32>
    %30 = vector.shape_cast %29 : vector<1x1x32xf32> to vector<1x32xf32>
    %c0_25 = arith.constant 0 : index
    %c0_26 = arith.constant 0 : index
    %c0_27 = arith.constant 0 : index
    %31 = vector.load %arg9[%c0_25, %c0_26, %c0_27] : memref<2x1x32xf32, #tpu.memory_space<vmem>>, vector<1x1x32xf32>
    %32 = vector.shape_cast %31 : vector<1x1x32xf32> to vector<1x32xf32>
    %cst_28 = arith.constant dense<0.000000e+00> : vector<16xf32>
    %33 = vector.multi_reduction <add>, %28, %cst_28 [1] : vector<16x32xf32> to vector<16xf32>
    %34 = vector.shape_cast %33 : vector<16xf32> to vector<16x1xf32>
    %cst_29 = arith.constant 3.200000e+01 : f32
    %35 = vector.broadcast %cst_29 : f32 to vector<16x1xf32>
    %36 = arith.divf %34, %35 : vector<16x1xf32>
    %37 = vector.broadcast %36 : vector<16x1xf32> to vector<16x32xf32>
    %38 = arith.subf %28, %37 : vector<16x32xf32>
    %39 = arith.mulf %38, %38 : vector<16x32xf32>
    %cst_30 = arith.constant dense<0.000000e+00> : vector<16xf32>
    %40 = vector.multi_reduction <add>, %39, %cst_30 [1] : vector<16x32xf32> to vector<16xf32>
    %41 = vector.shape_cast %40 : vector<16xf32> to vector<16x1xf32>
    %cst_31 = arith.constant 3.200000e+01 : f32
    %42 = vector.broadcast %cst_31 : f32 to vector<16x1xf32>
    %43 = arith.divf %41, %42 : vector<16x1xf32>
    %44 = vector.broadcast %36 : vector<16x1xf32> to vector<16x32xf32>
    %45 = arith.subf %28, %44 : vector<16x32xf32>
    %cst_32 = arith.constant 9.99999974E-6 : f32
    %46 = vector.broadcast %cst_32 : f32 to vector<16x1xf32>
    %47 = arith.addf %43, %46 : vector<16x1xf32>
    %48 = math.rsqrt %47 : vector<16x1xf32>
    %49 = vector.broadcast %48 : vector<16x1xf32> to vector<16x32xf32>
    %50 = arith.mulf %45, %49 : vector<16x32xf32>
    %51 = vector.broadcast %30 : vector<1x32xf32> to vector<16x32xf32>
    %52 = arith.mulf %50, %51 : vector<16x32xf32>
    %53 = vector.broadcast %32 : vector<1x32xf32> to vector<16x32xf32>
    %54 = arith.addf %52, %53 : vector<16x32xf32>
    %55 = arith.truncf %54 : vector<16x32xf32> to vector<16x32xbf16>
    %c0_33 = arith.constant 0 : index
    %c0_34 = arith.constant 0 : index
    %c0_35 = arith.constant 0 : index
    %56 = vector.load %arg10[%c0_33, %c0_34, %c0_35] : memref<2x32x2048xbf16, #tpu.memory_space<vmem>>, vector<1x32x2048xbf16>
    %57 = vector.shape_cast %56 : vector<1x32x2048xbf16> to vector<32x2048xbf16>
    %cst_36 = arith.constant dense<0.000000e+00> : vector<16x2048xf32>
    %58 = tpu.matmul %55, %57, %cst_36 {dimension_numbers = #tpu.dot_dimension_numbers<[1], [0], [0], [1], [0, 0, 1, 1], [], []>} : vector<16x32xbf16>, vector<32x2048xbf16>, vector<16x2048xf32> -> vector<16x2048xf32>
    %c0_37 = arith.constant 0 : index
    %c0_38 = arith.constant 0 : index
    %c0_39 = arith.constant 0 : index
    %59 = vector.load %arg11[%c0_37, %c0_38, %c0_39] : memref<2x1x2048xf32, #tpu.memory_space<vmem>>, vector<1x1x2048xf32>
    %60 = vector.shape_cast %59 : vector<1x1x2048xf32> to vector<1x2048xf32>
    %61 = vector.broadcast %60 : vector<1x2048xf32> to vector<16x2048xf32>
    %62 = arith.addf %58, %61 : vector<16x2048xf32>
    %cst_40 = arith.constant 0.000000e+00 : f32
    %63 = vector.broadcast %cst_40 : f32 to vector<16x2048xf32>
    %64 = arith.maximumf %62, %63 : vector<16x2048xf32>
    %65 = arith.truncf %64 : vector<16x2048xf32> to vector<16x2048xbf16>
    %c0_41 = arith.constant 0 : index
    %c0_42 = arith.constant 0 : index
    %c0_43 = arith.constant 0 : index
    %66 = vector.load %arg12[%c0_41, %c0_42, %c0_43] : memref<2x2048x32xbf16, #tpu.memory_space<vmem>>, vector<1x2048x32xbf16>
    %67 = vector.shape_cast %66 : vector<1x2048x32xbf16> to vector<2048x32xbf16>
    %cst_44 = arith.constant dense<0.000000e+00> : vector<16x32xf32>
    %68 = tpu.matmul %65, %67, %cst_44 {dimension_numbers = #tpu.dot_dimension_numbers<[1], [0], [0], [1], [0, 0, 1, 1], [], []>} : vector<16x2048xbf16>, vector<2048x32xbf16>, vector<16x32xf32> -> vector<16x32xf32>
    %c0_45 = arith.constant 0 : index
    %c0_46 = arith.constant 0 : index
    %c0_47 = arith.constant 0 : index
    %69 = vector.load %arg13[%c0_45, %c0_46, %c0_47] : memref<2x1x32xf32, #tpu.memory_space<vmem>>, vector<1x1x32xf32>
    %70 = vector.shape_cast %69 : vector<1x1x32xf32> to vector<1x32xf32>
    %71 = vector.broadcast %70 : vector<1x32xf32> to vector<16x32xf32>
    %72 = arith.addf %68, %71 : vector<16x32xf32>
    %73 = arith.addf %54, %72 : vector<16x32xf32>
    %c0_48 = arith.constant 0 : index
    %c0_49 = arith.constant 0 : index
    %c0_50 = arith.constant 0 : index
    %74 = vector.load %arg14[%c0_48, %c0_49, %c0_50] : memref<2x1x32xf32, #tpu.memory_space<vmem>>, vector<1x1x32xf32>
    %75 = vector.shape_cast %74 : vector<1x1x32xf32> to vector<1x32xf32>
    %c0_51 = arith.constant 0 : index
    %c0_52 = arith.constant 0 : index
    %c0_53 = arith.constant 0 : index
    %76 = vector.load %arg15[%c0_51, %c0_52, %c0_53] : memref<2x1x32xf32, #tpu.memory_space<vmem>>, vector<1x1x32xf32>
    %77 = vector.shape_cast %76 : vector<1x1x32xf32> to vector<1x32xf32>
    %cst_54 = arith.constant dense<0.000000e+00> : vector<16xf32>
    %78 = vector.multi_reduction <add>, %73, %cst_54 [1] : vector<16x32xf32> to vector<16xf32>
    %79 = vector.shape_cast %78 : vector<16xf32> to vector<16x1xf32>
    %cst_55 = arith.constant 3.200000e+01 : f32
    %80 = vector.broadcast %cst_55 : f32 to vector<16x1xf32>
    %81 = arith.divf %79, %80 : vector<16x1xf32>
    %82 = vector.broadcast %81 : vector<16x1xf32> to vector<16x32xf32>
    %83 = arith.subf %73, %82 : vector<16x32xf32>
    %84 = arith.mulf %83, %83 : vector<16x32xf32>
    %cst_56 = arith.constant dense<0.000000e+00> : vector<16xf32>
    %85 = vector.multi_reduction <add>, %84, %cst_56 [1] : vector<16x32xf32> to vector<16xf32>
    %86 = vector.shape_cast %85 : vector<16xf32> to vector<16x1xf32>
    %cst_57 = arith.constant 3.200000e+01 : f32
    %87 = vector.broadcast %cst_57 : f32 to vector<16x1xf32>
    %88 = arith.divf %86, %87 : vector<16x1xf32>
    %89 = vector.broadcast %81 : vector<16x1xf32> to vector<16x32xf32>
    %90 = arith.subf %73, %89 : vector<16x32xf32>
    %cst_58 = arith.constant 9.99999974E-6 : f32
    %91 = vector.broadcast %cst_58 : f32 to vector<16x1xf32>
    %92 = arith.addf %88, %91 : vector<16x1xf32>
    %93 = math.rsqrt %92 : vector<16x1xf32>
    %94 = vector.broadcast %93 : vector<16x1xf32> to vector<16x32xf32>
    %95 = arith.mulf %90, %94 : vector<16x32xf32>
    %96 = vector.broadcast %75 : vector<1x32xf32> to vector<16x32xf32>
    %97 = arith.mulf %95, %96 : vector<16x32xf32>
    %98 = vector.broadcast %77 : vector<1x32xf32> to vector<16x32xf32>
    %99 = arith.addf %97, %98 : vector<16x32xf32>
    %100 = arith.truncf %99 : vector<16x32xf32> to vector<16x32xbf16>
    %c1 = arith.constant 1 : index
    %c0_59 = arith.constant 0 : index
    %c0_60 = arith.constant 0 : index
    %101 = vector.load %arg6[%c1, %c0_59, %c0_60] : memref<2x32x32xbf16, #tpu.memory_space<vmem>>, vector<1x32x32xbf16>
    %102 = vector.shape_cast %101 : vector<1x32x32xbf16> to vector<32x32xbf16>
    %cst_61 = arith.constant dense<0.000000e+00> : vector<16x32xf32>
    %103 = tpu.matmul %100, %102, %cst_61 {dimension_numbers = #tpu.dot_dimension_numbers<[1], [0], [0], [1], [0, 0, 1, 1], [], []>} : vector<16x32xbf16>, vector<32x32xbf16>, vector<16x32xf32> -> vector<16x32xf32>
    %c1_62 = arith.constant 1 : index
    %c0_63 = arith.constant 0 : index
    %c0_64 = arith.constant 0 : index
    %104 = vector.load %arg7[%c1_62, %c0_63, %c0_64] : memref<2x1x32xf32, #tpu.memory_space<vmem>>, vector<1x1x32xf32>
    %105 = vector.shape_cast %104 : vector<1x1x32xf32> to vector<1x32xf32>
    %106 = vector.broadcast %105 : vector<1x32xf32> to vector<16x32xf32>
    %107 = arith.addf %103, %106 : vector<16x32xf32>
    %108 = arith.addf %99, %107 : vector<16x32xf32>
    %c1_65 = arith.constant 1 : index
    %c0_66 = arith.constant 0 : index
    %c0_67 = arith.constant 0 : index
    %109 = vector.load %arg8[%c1_65, %c0_66, %c0_67] : memref<2x1x32xf32, #tpu.memory_space<vmem>>, vector<1x1x32xf32>
    %110 = vector.shape_cast %109 : vector<1x1x32xf32> to vector<1x32xf32>
    %c1_68 = arith.constant 1 : index
    %c0_69 = arith.constant 0 : index
    %c0_70 = arith.constant 0 : index
    %111 = vector.load %arg9[%c1_68, %c0_69, %c0_70] : memref<2x1x32xf32, #tpu.memory_space<vmem>>, vector<1x1x32xf32>
    %112 = vector.shape_cast %111 : vector<1x1x32xf32> to vector<1x32xf32>
    %cst_71 = arith.constant dense<0.000000e+00> : vector<16xf32>
    %113 = vector.multi_reduction <add>, %108, %cst_71 [1] : vector<16x32xf32> to vector<16xf32>
    %114 = vector.shape_cast %113 : vector<16xf32> to vector<16x1xf32>
    %cst_72 = arith.constant 3.200000e+01 : f32
    %115 = vector.broadcast %cst_72 : f32 to vector<16x1xf32>
    %116 = arith.divf %114, %115 : vector<16x1xf32>
    %117 = vector.broadcast %116 : vector<16x1xf32> to vector<16x32xf32>
    %118 = arith.subf %108, %117 : vector<16x32xf32>
    %119 = arith.mulf %118, %118 : vector<16x32xf32>
    %cst_73 = arith.constant dense<0.000000e+00> : vector<16xf32>
    %120 = vector.multi_reduction <add>, %119, %cst_73 [1] : vector<16x32xf32> to vector<16xf32>
    %121 = vector.shape_cast %120 : vector<16xf32> to vector<16x1xf32>
    %cst_74 = arith.constant 3.200000e+01 : f32
    %122 = vector.broadcast %cst_74 : f32 to vector<16x1xf32>
    %123 = arith.divf %121, %122 : vector<16x1xf32>
    %124 = vector.broadcast %116 : vector<16x1xf32> to vector<16x32xf32>
    %125 = arith.subf %108, %124 : vector<16x32xf32>
    %cst_75 = arith.constant 9.99999974E-6 : f32
    %126 = vector.broadcast %cst_75 : f32 to vector<16x1xf32>
    %127 = arith.addf %123, %126 : vector<16x1xf32>
    %128 = math.rsqrt %127 : vector<16x1xf32>
    %129 = vector.broadcast %128 : vector<16x1xf32> to vector<16x32xf32>
    %130 = arith.mulf %125, %129 : vector<16x32xf32>
    %131 = vector.broadcast %110 : vector<1x32xf32> to vector<16x32xf32>
    %132 = arith.mulf %130, %131 : vector<16x32xf32>
    %133 = vector.broadcast %112 : vector<1x32xf32> to vector<16x32xf32>
    %134 = arith.addf %132, %133 : vector<16x32xf32>
    %135 = arith.truncf %134 : vector<16x32xf32> to vector<16x32xbf16>
    %c1_76 = arith.constant 1 : index
    %c0_77 = arith.constant 0 : index
    %c0_78 = arith.constant 0 : index
    %136 = vector.load %arg10[%c1_76, %c0_77, %c0_78] : memref<2x32x2048xbf16, #tpu.memory_space<vmem>>, vector<1x32x2048xbf16>
    %137 = vector.shape_cast %136 : vector<1x32x2048xbf16> to vector<32x2048xbf16>
    %cst_79 = arith.constant dense<0.000000e+00> : vector<16x2048xf32>
    %138 = tpu.matmul %135, %137, %cst_79 {dimension_numbers = #tpu.dot_dimension_numbers<[1], [0], [0], [1], [0, 0, 1, 1], [], []>} : vector<16x32xbf16>, vector<32x2048xbf16>, vector<16x2048xf32> -> vector<16x2048xf32>
    %c1_80 = arith.constant 1 : index
    %c0_81 = arith.constant 0 : index
    %c0_82 = arith.constant 0 : index
    %139 = vector.load %arg11[%c1_80, %c0_81, %c0_82] : memref<2x1x2048xf32, #tpu.memory_space<vmem>>, vector<1x1x2048xf32>
    %140 = vector.shape_cast %139 : vector<1x1x2048xf32> to vector<1x2048xf32>
    %141 = vector.broadcast %140 : vector<1x2048xf32> to vector<16x2048xf32>
    %142 = arith.addf %138, %141 : vector<16x2048xf32>
    %cst_83 = arith.constant 0.000000e+00 : f32
    %143 = vector.broadcast %cst_83 : f32 to vector<16x2048xf32>
    %144 = arith.maximumf %142, %143 : vector<16x2048xf32>
    %145 = arith.truncf %144 : vector<16x2048xf32> to vector<16x2048xbf16>
    %c1_84 = arith.constant 1 : index
    %c0_85 = arith.constant 0 : index
    %c0_86 = arith.constant 0 : index
    %146 = vector.load %arg12[%c1_84, %c0_85, %c0_86] : memref<2x2048x32xbf16, #tpu.memory_space<vmem>>, vector<1x2048x32xbf16>
    %147 = vector.shape_cast %146 : vector<1x2048x32xbf16> to vector<2048x32xbf16>
    %cst_87 = arith.constant dense<0.000000e+00> : vector<16x32xf32>
    %148 = tpu.matmul %145, %147, %cst_87 {dimension_numbers = #tpu.dot_dimension_numbers<[1], [0], [0], [1], [0, 0, 1, 1], [], []>} : vector<16x2048xbf16>, vector<2048x32xbf16>, vector<16x32xf32> -> vector<16x32xf32>
    %c1_88 = arith.constant 1 : index
    %c0_89 = arith.constant 0 : index
    %c0_90 = arith.constant 0 : index
    %149 = vector.load %arg13[%c1_88, %c0_89, %c0_90] : memref<2x1x32xf32, #tpu.memory_space<vmem>>, vector<1x1x32xf32>
    %150 = vector.shape_cast %149 : vector<1x1x32xf32> to vector<1x32xf32>
    %151 = vector.broadcast %150 : vector<1x32xf32> to vector<16x32xf32>
    %152 = arith.addf %148, %151 : vector<16x32xf32>
    %153 = arith.addf %134, %152 : vector<16x32xf32>
    %c1_91 = arith.constant 1 : index
    %c0_92 = arith.constant 0 : index
    %c0_93 = arith.constant 0 : index
    %154 = vector.load %arg14[%c1_91, %c0_92, %c0_93] : memref<2x1x32xf32, #tpu.memory_space<vmem>>, vector<1x1x32xf32>
    %155 = vector.shape_cast %154 : vector<1x1x32xf32> to vector<1x32xf32>
    %c1_94 = arith.constant 1 : index
    %c0_95 = arith.constant 0 : index
    %c0_96 = arith.constant 0 : index
    %156 = vector.load %arg15[%c1_94, %c0_95, %c0_96] : memref<2x1x32xf32, #tpu.memory_space<vmem>>, vector<1x1x32xf32>
    %157 = vector.shape_cast %156 : vector<1x1x32xf32> to vector<1x32xf32>
    %cst_97 = arith.constant dense<0.000000e+00> : vector<16xf32>
    %158 = vector.multi_reduction <add>, %153, %cst_97 [1] : vector<16x32xf32> to vector<16xf32>
    %159 = vector.shape_cast %158 : vector<16xf32> to vector<16x1xf32>
    %cst_98 = arith.constant 3.200000e+01 : f32
    %160 = vector.broadcast %cst_98 : f32 to vector<16x1xf32>
    %161 = arith.divf %159, %160 : vector<16x1xf32>
    %162 = vector.broadcast %161 : vector<16x1xf32> to vector<16x32xf32>
    %163 = arith.subf %153, %162 : vector<16x32xf32>
    %164 = arith.mulf %163, %163 : vector<16x32xf32>
    %cst_99 = arith.constant dense<0.000000e+00> : vector<16xf32>
    %165 = vector.multi_reduction <add>, %164, %cst_99 [1] : vector<16x32xf32> to vector<16xf32>
    %166 = vector.shape_cast %165 : vector<16xf32> to vector<16x1xf32>
    %cst_100 = arith.constant 3.200000e+01 : f32
    %167 = vector.broadcast %cst_100 : f32 to vector<16x1xf32>
    %168 = arith.divf %166, %167 : vector<16x1xf32>
    %169 = vector.broadcast %161 : vector<16x1xf32> to vector<16x32xf32>
    %170 = arith.subf %153, %169 : vector<16x32xf32>
    %cst_101 = arith.constant 9.99999974E-6 : f32
    %171 = vector.broadcast %cst_101 : f32 to vector<16x1xf32>
    %172 = arith.addf %168, %171 : vector<16x1xf32>
    %173 = math.rsqrt %172 : vector<16x1xf32>
    %174 = vector.broadcast %173 : vector<16x1xf32> to vector<16x32xf32>
    %175 = arith.mulf %170, %174 : vector<16x32xf32>
    %176 = vector.broadcast %155 : vector<1x32xf32> to vector<16x32xf32>
    %177 = arith.mulf %175, %176 : vector<16x32xf32>
    %178 = vector.broadcast %157 : vector<1x32xf32> to vector<16x32xf32>
    %179 = arith.addf %177, %178 : vector<16x32xf32>
    %180 = arith.truncf %179 : vector<16x32xf32> to vector<16x32xbf16>
    %c0_102 = arith.constant 0 : index
    %c0_103 = arith.constant 0 : index
    %181 = vector.load %arg16[%c0_102, %c0_103] : memref<32x4xbf16, #tpu.memory_space<vmem>>, vector<32x4xbf16>
    %cst_104 = arith.constant dense<0.000000e+00> : vector<16x4xf32>
    %182 = tpu.matmul %180, %181, %cst_104 {dimension_numbers = #tpu.dot_dimension_numbers<[1], [0], [0], [1], [0, 0, 1, 1], [], []>} : vector<16x32xbf16>, vector<32x4xbf16>, vector<16x4xf32> -> vector<16x4xf32>
    %c0_105 = arith.constant 0 : index
    %c0_106 = arith.constant 0 : index
    %183 = vector.load %arg17[%c0_105, %c0_106] : memref<1x4xf32, #tpu.memory_space<vmem>>, vector<1x4xf32>
    %184 = vector.broadcast %183 : vector<1x4xf32> to vector<16x4xf32>
    %185 = arith.addf %182, %184 : vector<16x4xf32>
    %c0_107 = arith.constant 0 : index
    %c0_108 = arith.constant 0 : index
    %186 = vector.load %arg18[%c0_107, %c0_108] : memref<16x4xf32, #tpu.memory_space<vmem>>, vector<16x4xf32>
    tpu.vector_store %arg18[%c0_107, %c0_108], %185 {strides = array<i32>} : memref<16x4xf32, #tpu.memory_space<vmem>>, vector<16x4xf32>,
    return
  }
}

</mosaic_0001>

<llo_original>
// kernel: gcn_transformer_forward.1
$region0: #{gcn_transformer_forward.1}
  #allocation0 [shape = 'u32[]', space=smem, size = 0x4, offset = 0x4, fixed_abs, tag = 'smem constant byte address 0x4 - core index']
  #allocation1 [shape = 'u32[144,128]{1,0:T(1,128)}', space=vmem, size = 0x12000, scoped, tag = 'internal scratch']
  %s0 = inlined_call_operand.vmem [shape: bf16[16,16], index: 0, kind: input, shape index: {}]
  %s1 = inlined_call_operand.vmem [shape: f32[16,8], index: 1, kind: input, shape index: {}]
  %s2 = inlined_call_operand.vmem [shape: bf16[8,32], index: 2, kind: input, shape index: {}]
  %s3 = inlined_call_operand.vmem [shape: f32[1,32], index: 3, kind: input, shape index: {}]
  %s4 = inlined_call_operand.vmem [shape: bf16[32,32], index: 4, kind: input, shape index: {}]
  %s5 = inlined_call_operand.vmem [shape: f32[1,32], index: 5, kind: input, shape index: {}]
  %s6 = inlined_call_operand.vmem [shape: bf16[2,32,32], index: 6, kind: input, shape index: {}]
  %s7 = inlined_call_operand.vmem [shape: f32[2,1,32], index: 7, kind: input, shape index: {}]
  %s8 = inlined_call_operand.vmem [shape: f32[2,1,32], index: 8, kind: input, shape index: {}]
  %s9 = inlined_call_operand.vmem [shape: f32[2,1,32], index: 9, kind: input, shape index: {}]
  %s10 = inlined_call_operand.vmem [shape: bf16[2,32,2048], index: 10, kind: input, shape index: {}]
  %s11 = inlined_call_operand.vmem [shape: f32[2,1,2048], index: 11, kind: input, shape index: {}]
  %s12 = inlined_call_operand.vmem [shape: bf16[2,2048,32], index: 12, kind: input, shape index: {}]
  %s13 = inlined_call_operand.vmem [shape: f32[2,1,32], index: 13, kind: input, shape index: {}]
  %s14 = inlined_call_operand.vmem [shape: f32[2,1,32], index: 14, kind: input, shape index: {}]
  %s15 = inlined_call_operand.vmem [shape: f32[2,1,32], index: 15, kind: input, shape index: {}]
  %s16 = inlined_call_operand.vmem [shape: bf16[32,4], index: 16, kind: input, shape index: {}]
  %s17 = inlined_call_operand.vmem [shape: f32[1,4], index: 17, kind: input, shape index: {}]
  %s18 = inlined_call_operand.vmem [shape: f32[16,4], index: 18, kind: output, shape index: {}]
  %s19 = sld [smem:[#allocation0]]
  $region82: #{gcn_transformer_forward.1} parent=0
    _
  %s21 = ssub.s32 1, %s19
  %s22 = scalar_select 0, %s21, %s19
  // Predicated region
  $region2: #{gcn_transformer_forward.1} parent=0 // pred_check
    _
  $region3: #{gcn_transformer_forward.1} parent=0 // pred_check_branch
    %24 = sbr.rel (0) target = $region5
  $region4: #{gcn_transformer_forward.1} parent=0 // pred_region
    _
  $region5: #{gcn_transformer_forward.1} parent=0 // pred_fallthru
    _
  // Predicated region
  $region6: #{gcn_transformer_forward.1} parent=0 // pred_check
    _
  $region7: #{gcn_transformer_forward.1} parent=0 // pred_check_branch
    %26 = sbr.rel (0) target = $region9
  $region8: #{gcn_transformer_forward.1} parent=0 // pred_region
    _
  $region9: #{gcn_transformer_forward.1} parent=0 // pred_fallthru
    _
  // Predicated region
  $region10: #{gcn_transformer_forward.1} parent=0 // pred_check
    _
  $region11: #{gcn_transformer_forward.1} parent=0 // pred_check_branch
    %28 = sbr.rel (0) target = $region13
  $region12: #{gcn_transformer_forward.1} parent=0 // pred_region
    _
  $region13: #{gcn_transformer_forward.1} parent=0 // pred_fallthru
    _
  // Predicated region
  $region14: #{gcn_transformer_forward.1} parent=0 // pred_check
    _
  $region15: #{gcn_transformer_forward.1} parent=0 // pred_check_branch
    %30 = sbr.rel (0) target = $region17
  $region16: #{gcn_transformer_forward.1} parent=0 // pred_region
    _
  $region17: #{gcn_transformer_forward.1} parent=0 // pred_fallthru
    _
  // Predicated region
  $region18: #{gcn_transformer_forward.1} parent=0 // pred_check
    _
  $region19: #{gcn_transformer_forward.1} parent=0 // pred_check_branch
    %32 = sbr.rel (0) target = $region21
  $region20: #{gcn_transformer_forward.1} parent=0 // pred_region
    _
  $region21: #{gcn_transformer_forward.1} parent=0 // pred_fallthru
    _
  // Predicated region
  $region22: #{gcn_transformer_forward.1} parent=0 // pred_check
    _
  $region23: #{gcn_transformer_forward.1} parent=0 // pred_check_branch
    %34 = sbr.rel (0) target = $region25
  $region24: #{gcn_transformer_forward.1} parent=0 // pred_region
    _
  $region25: #{gcn_transformer_forward.1} parent=0 // pred_fallthru
    _
  // Predicated region
  $region26: #{gcn_transformer_forward.1} parent=0 // pred_check
    _
  $region27: #{gcn_transformer_forward.1} parent=0 // pred_check_branch
    %36 = sbr.rel (0) target = $region29
  $region28: #{gcn_transformer_forward.1} parent=0 // pred_region
    _
  $region29: #{gcn_transformer_forward.1} parent=0 // pred_fallthru
    _
  // Predicated region
  $region30: #{gcn_transformer_forward.1} parent=0 // pred_check
    _
  $region31: #{gcn_transformer_forward.1} parent=0 // pred_check_branch
    %38 = sbr.rel (0) target = $region33
  $region32: #{gcn_transformer_forward.1} parent=0 // pred_region
    _
  $region33: #{gcn_transformer_forward.1} parent=0 // pred_fallthru
    _
  // Predicated region
  $region34: #{gcn_transformer_forward.1} parent=0 // pred_check
    _
  $region35: #{gcn_transformer_forward.1} parent=0 // pred_check_branch
    %40 = sbr.rel (0) target = $region37
  $region36: #{gcn_transformer_forward.1} parent=0 // pred_region
    _
  $region37: #{gcn_transformer_forward.1} parent=0 // pred_fallthru
    _
  // Predicated region
  $region38: #{gcn_transformer_forward.1} parent=0 // pred_check
    _
  $region39: #{gcn_transformer_forward.1} parent=0 // pred_check_branch
    %42 = sbr.rel (0) target = $region41
  $region40: #{gcn_transformer_forward.1} parent=0 // pred_region
    _
  $region41: #{gcn_transformer_forward.1} parent=0 // pred_fallthru
    _
  // Predicated region
  $region42: #{gcn_transformer_forward.1} parent=0 // pred_check
    _
  $region43: #{gcn_transformer_forward.1} parent=0 // pred_check_branch
    %44 = sbr.rel (0) target = $region45
  $region44: #{gcn_transformer_forward.1} parent=0 // pred_region
    _
  $region45: #{gcn_transformer_forward.1} parent=0 // pred_fallthru
    _
  // Predicated region
  $region46: #{gcn_transformer_forward.1} parent=0 // pred_check
    _
  $region47: #{gcn_transformer_forward.1} parent=0 // pred_check_branch
    %46 = sbr.rel (0) target = $region49
  $region48: #{gcn_transformer_forward.1} parent=0 // pred_region
    _
  $region49: #{gcn_transformer_forward.1} parent=0 // pred_fallthru
    _
  // Predicated region
  $region50: #{gcn_transformer_forward.1} parent=0 // pred_check
    _
  $region51: #{gcn_transformer_forward.1} parent=0 // pred_check_branch
    %48 = sbr.rel (0) target = $region53
  $region52: #{gcn_transformer_forward.1} parent=0 // pred_region
    _
  $region53: #{gcn_transformer_forward.1} parent=0 // pred_fallthru
    _
  // Predicated region
  $region54: #{gcn_transformer_forward.1} parent=0 // pred_check
    _
  $region55: #{gcn_transformer_forward.1} parent=0 // pred_check_branch
    %50 = sbr.rel (0) target = $region57
  $region56: #{gcn_transformer_forward.1} parent=0 // pred_region
    _
  $region57: #{gcn_transformer_forward.1} parent=0 // pred_fallthru
    _
  // Predicated region
  $region58: #{gcn_transformer_forward.1} parent=0 // pred_check
    _
  $region59: #{gcn_transformer_forward.1} parent=0 // pred_check_branch
    %52 = sbr.rel (0) target = $region61
  $region60: #{gcn_transformer_forward.1} parent=0 // pred_region
    _
  $region61: #{gcn_transformer_forward.1} parent=0 // pred_fallthru
    _
  // Predicated region
  $region62: #{gcn_transformer_forward.1} parent=0 // pred_check
    _
  $region63: #{gcn_transformer_forward.1} parent=0 // pred_check_branch
    %54 = sbr.rel (0) target = $region65
  $region64: #{gcn_transformer_forward.1} parent=0 // pred_region
    _
  $region65: #{gcn_transformer_forward.1} parent=0 // pred_fallthru
    _
  // Predicated region
  $region66: #{gcn_transformer_forward.1} parent=0 // pred_check
    _
  $region67: #{gcn_transformer_forward.1} parent=0 // pred_check_branch
    %56 = sbr.rel (0) target = $region69
  $region68: #{gcn_transformer_forward.1} parent=0 // pred_region
    _
  $region69: #{gcn_transformer_forward.1} parent=0 // pred_fallthru
    _
  // Predicated region
  $region70: #{gcn_transformer_forward.1} parent=0 // pred_check
    _
  $region71: #{gcn_transformer_forward.1} parent=0 // pred_check_branch
    %58 = sbr.rel (0) target = $region73
  $region72: #{gcn_transformer_forward.1} parent=0 // pred_region
    _
  $region73: #{gcn_transformer_forward.1} parent=0 // pred_fallthru
    _
  %v60 = vld [vmem:[%s0] sm:$0xf]
  %v61 = vld [vmem:[%s0 + $0x4] sm:$0xf]
  %v62 = vld [vmem:[%s1] sm:$0xff]
  %v63 = vld [vmem:[%s1 + $0x8] sm:$0xff]
  %v64 = vpack.c.bf16 %v63, %v62
  %v65 = vld [vmem:[%s2] sm:$0xf]
  %vm66 = vcmask 64512
  %v68 = vsel %vm66, %v64, 0
  %vm70 = vcmask 1043456
  %v72 = vsel %vm70, %v65, 0
  %74 = vmatprep.subr.bf16.mxu0 0
  %75 = vmatpush1.bf16.msra.mxu0 %v72
  %76 = vmatprep.subr.bf16.mxu0 0
  %77 = vmatpush1.bf16.msra.mxu0 0
  %78 = vmatprep.subr.bf16.mxu0 0
  %79 = vmatpush1.bf16.msra.mxu0 0
  %80 = vmatprep.subr.bf16.mxu0 0
  %81 = vmatpush1.bf16.msra.mxu0 0
  %82 = vmatprep.subr.bf16.mxu0 0
  %83 = vmatpush1.bf16.msra.mxu0 0
  %84 = vmatprep.subr.bf16.mxu0 0
  %85 = vmatpush1.bf16.msra.mxu0 0
  %86 = vmatprep.subr.bf16.mxu0 0
  %87 = vmatpush1.bf16.msra.mxu0 0
  %88 = vmatprep.subr.bf16.mxu0 0
  %89 = vmatpush1.bf16.msra.mxu0 0
  %90 = vmatprep.subr.bf16.mxu0 0
  %91 = vmatpush1.bf16.msra.mxu0 0
  %92 = vmatprep.subr.bf16.mxu0 0
  %93 = vmatpush1.bf16.msra.mxu0 0
  %94 = vmatprep.subr.bf16.mxu0 0
  %95 = vmatpush1.bf16.msra.mxu0 0
  %96 = vmatprep.subr.bf16.mxu0 0
  %97 = vmatpush1.bf16.msra.mxu0 0
  %98 = vmatprep.subr.bf16.mxu0 0
  %99 = vmatpush1.bf16.msra.mxu0 0
  %100 = vmatprep.subr.bf16.mxu0 0
  %101 = vmatpush1.bf16.msra.mxu0 0
  %102 = vmatprep.subr.bf16.mxu0 0
  %103 = vmatpush1.bf16.msra.mxu0 0
  %104 = vmatprep.subr.bf16.mxu0 0
  %105 = vmatpush1.bf16.msra.mxu0 0
  %106 = vmatprep.mubr.bf16.mxu0 0
  %107 = vmatmul.mubr.bf16.gmra.mrb[0].mxu0 %v68
  %v108 = vpop.f32.mrb[0].mxu0
  %v109 = vadd.f32 0.0, %v108
  %v110 = vpop.f32.mrb[0].mxu0
  %v111 = vpop.f32.mrb[0].mxu0
  %v112 = vadd.f32 0.0, %v111
  %v113 = vpop.f32.mrb[0].mxu0
  %114 = vdwg.mxu0
  %v115 = vpack.c.bf16 %v112, %v109
  %v116 = vld [vmem:[%s3] sm:$0x1]
  %v118 = vlaneseq
  %v119 = vshrl.u32 %v118, 7
  %v120 = vsub.s32 0, %v119
  %v121 = vrot.slane %v116, %v120
  %v125 = vunpack.c.l.b16 %v60
  %v126 = vunpack.c.l.b16 %v61
  %v127 = vpack.c.b16 %v126, %v125
  %vm128 = vcmask 130048
  %v130 = vsel %vm128, %v127, 0
  %132 = vmatprep.subr.bf16.mxu0 0
  %133 = vmatpush1.bf16.msra.mxu0 %v115
  %134 = vmatprep.subr.bf16.mxu0 0
  %135 = vmatpush1.bf16.msra.mxu0 0
  %136 = vmatprep.subr.bf16.mxu0 0
  %137 = vmatpush1.bf16.msra.mxu0 0
  %138 = vmatprep.subr.bf16.mxu0 0
  %139 = vmatpush1.bf16.msra.mxu0 0
  %140 = vmatprep.subr.bf16.mxu0 0
  %141 = vmatpush1.bf16.msra.mxu0 0
  %142 = vmatprep.subr.bf16.mxu0 0
  %143 = vmatpush1.bf16.msra.mxu0 0
  %144 = vmatprep.subr.bf16.mxu0 0
  %145 = vmatpush1.bf16.msra.mxu0 0
  %146 = vmatprep.subr.bf16.mxu0 0
  %147 = vmatpush1.bf16.msra.mxu0 0
  %148 = vmatprep.subr.bf16.mxu0 0
  %149 = vmatpush1.bf16.msra.mxu0 0
  %150 = vmatprep.subr.bf16.mxu0 0
  %151 = vmatpush1.bf16.msra.mxu0 0
  %152 = vmatprep.subr.bf16.mxu0 0
  %153 = vmatpush1.bf16.msra.mxu0 0
  %154 = vmatprep.subr.bf16.mxu0 0
  %155 = vmatpush1.bf16.msra.mxu0 0
  %156 = vmatprep.subr.bf16.mxu0 0
  %157 = vmatpush1.bf16.msra.mxu0 0
  %158 = vmatprep.subr.bf16.mxu0 0
  %159 = vmatpush1.bf16.msra.mxu0 0
  %160 = vmatprep.subr.bf16.mxu0 0
  %161 = vmatpush1.bf16.msra.mxu0 0
  %162 = vmatprep.subr.bf16.mxu0 0
  %163 = vmatpush1.bf16.msra.mxu0 0
  %164 = vmatprep.mubr.bf16.mxu0 0
  %165 = vmatmul.mubr.bf16.gmra.mrb[0].mxu0 %v130
  %v166 = vpop.f32.mrb[0].mxu0
  %v167 = vadd.f32 %v121, %v166
  %v168 = vpop.f32.mrb[0].mxu0
  %v169 = vpop.f32.mrb[0].mxu0
  %v170 = vadd.f32 %v121, %v169
  %v171 = vpop.f32.mrb[0].mxu0
  %172 = vdwg.mxu0
  %v173 = vmax.f32 %v167, 0.0
  %v174 = vmax.f32 %v170, 0.0
  %v175 = vpack.c.bf16 %v174, %v173
  %v176 = vld [vmem:[%s4] sm:$0xf]
  %v177 = vld [vmem:[%s4 + $0x4] sm:$0xf]
  %v178 = vld [vmem:[%s4 + $0x8] sm:$0xf]
  %v179 = vld [vmem:[%s4 + $0xc] sm:$0xf]
  %v184 = vunpack.c.l.b16 %v176
  %v185 = vunpack.c.l.b16 %v177
  %v186 = vunpack.c.l.b16 %v178
  %v187 = vunpack.c.l.b16 %v179
  %v188 = vpack.c.b16 %v185, %v184
  %v189 = vpack.c.b16 %v187, %v186
  %vm192 = vcmask 261120
  %v194 = vsel %vm192, %v175, 0
  %196 = vmatprep.subr.bf16.mxu0 0
  %197 = vmatpush1.bf16.msra.mxu0 %v188
  %198 = vmatprep.subr.bf16.mxu0 0
  %199 = vmatpush1.bf16.msra.mxu0 %v189
  %200 = vmatprep.subr.bf16.mxu0 0
  %201 = vmatpush1.bf16.msra.mxu0 0
  %202 = vmatprep.subr.bf16.mxu0 0
  %203 = vmatpush1.bf16.msra.mxu0 0
  %204 = vmatprep.subr.bf16.mxu0 0
  %205 = vmatpush1.bf16.msra.mxu0 0
  %206 = vmatprep.subr.bf16.mxu0 0
  %207 = vmatpush1.bf16.msra.mxu0 0
  %208 = vmatprep.subr.bf16.mxu0 0
  %209 = vmatpush1.bf16.msra.mxu0 0
  %210 = vmatprep.subr.bf16.mxu0 0
  %211 = vmatpush1.bf16.msra.mxu0 0
  %212 = vmatprep.subr.bf16.mxu0 0
  %213 = vmatpush1.bf16.msra.mxu0 0
  %214 = vmatprep.subr.bf16.mxu0 0
  %215 = vmatpush1.bf16.msra.mxu0 0
  %216 = vmatprep.subr.bf16.mxu0 0
  %217 = vmatpush1.bf16.msra.mxu0 0
  %218 = vmatprep.subr.bf16.mxu0 0
  %219 = vmatpush1.bf16.msra.mxu0 0
  %220 = vmatprep.subr.bf16.mxu0 0
  %221 = vmatpush1.bf16.msra.mxu0 0
  %222 = vmatprep.subr.bf16.mxu0 0
  %223 = vmatpush1.bf16.msra.mxu0 0
  %224 = vmatprep.subr.bf16.mxu0 0
  %225 = vmatpush1.bf16.msra.mxu0 0
  %226 = vmatprep.subr.bf16.mxu0 0
  %227 = vmatpush1.bf16.msra.mxu0 0
  %228 = vmatprep.mubr.bf16.mxu0 0
  %229 = vmatmul.mubr.bf16.gmra.mrb[0].mxu0 %v194
  %v230 = vpop.f32.mrb[0].mxu0
  %v231 = vadd.f32 0.0, %v230
  %v232 = vpop.f32.mrb[0].mxu0
  %v233 = vpop.f32.mrb[0].mxu0
  %v234 = vadd.f32 0.0, %v233
  %v235 = vpop.f32.mrb[0].mxu0
  %236 = vdwg.mxu0
  %v237 = vpack.c.bf16 %v234, %v231
  %v238 = vld [vmem:[%s5] sm:$0x1]
  %v240 = vlaneseq
  %v241 = vshrl.u32 %v240, 7
  %v242 = vsub.s32 0, %v241
  %v243 = vrot.slane %v238, %v242
  %245 = vmatprep.subr.bf16.mxu0 0
  %246 = vmatpush1.bf16.msra.mxu0 %v237
  %247 = vmatprep.subr.bf16.mxu0 0
  %248 = vmatpush1.bf16.msra.mxu0 0
  %249 = vmatprep.subr.bf16.mxu0 0
  %250 = vmatpush1.bf16.msra.mxu0 0
  %251 = vmatprep.subr.bf16.mxu0 0
  %252 = vmatpush1.bf16.msra.mxu0 0
  %253 = vmatprep.subr.bf16.mxu0 0
  %254 = vmatpush1.bf16.msra.mxu0 0
  %255 = vmatprep.subr.bf16.mxu0 0
  %256 = vmatpush1.bf16.msra.mxu0 0
  %257 = vmatprep.subr.bf16.mxu0 0
  %258 = vmatpush1.bf16.msra.mxu0 0
  %259 = vmatprep.subr.bf16.mxu0 0
  %260 = vmatpush1.bf16.msra.mxu0 0
  %261 = vmatprep.subr.bf16.mxu0 0
  %262 = vmatpush1.bf16.msra.mxu0 0
  %263 = vmatprep.subr.bf16.mxu0 0
  %264 = vmatpush1.bf16.msra.mxu0 0
  %265 = vmatprep.subr.bf16.mxu0 0
  %266 = vmatpush1.bf16.msra.mxu0 0
  %267 = vmatprep.subr.bf16.mxu0 0
  %268 = vmatpush1.bf16.msra.mxu0 0
  %269 = vmatprep.subr.bf16.mxu0 0
  %270 = vmatpush1.bf16.msra.mxu0 0
  %271 = vmatprep.subr.bf16.mxu0 0
  %272 = vmatpush1.bf16.msra.mxu0 0
  %273 = vmatprep.subr.bf16.mxu0 0
  %274 = vmatpush1.bf16.msra.mxu0 0
  %275 = vmatprep.subr.bf16.mxu0 0
  %276 = vmatpush1.bf16.msra.mxu0 0
  %277 = vmatprep.mubr.bf16.mxu0 0
  %278 = vmatmul.mubr.bf16.gmra.mrb[0].mxu0 %v130
  %v279 = vpop.f32.mrb[0].mxu0
  %v280 = vadd.f32 %v243, %v279
  %v281 = vpop.f32.mrb[0].mxu0
  %v282 = vpop.f32.mrb[0].mxu0
  %v283 = vadd.f32 %v243, %v282
  %v284 = vpop.f32.mrb[0].mxu0
  %285 = vdwg.mxu0
  %v286 = vpack.c.bf16 %v283, %v280
  %v287 = vld [vmem:[%s6] sm:$0xf]
  %v288 = vld [vmem:[%s6 + $0x4] sm:$0xf]
  %v289 = vld [vmem:[%s6 + $0x8] sm:$0xf]
  %v290 = vld [vmem:[%s6 + $0xc] sm:$0xf]
  %v291 = vld [vmem:[%s7] sm:$0x1]
  %v293 = vlaneseq
  %v294 = vshrl.u32 %v293, 7
  %v295 = vsub.s32 0, %v294
  %v296 = vrot.slane %v291, %v295
  %v302 = vunpack.c.l.b16 %v287
  %v303 = vunpack.c.l.b16 %v288
  %v304 = vunpack.c.l.b16 %v289
  %v305 = vunpack.c.l.b16 %v290
  %v306 = vpack.c.b16 %v303, %v302
  %v307 = vpack.c.b16 %v305, %v304
  %v311 = vsel %vm192, %v286, 0
  %313 = vmatprep.subr.bf16.mxu0 0
  %314 = vmatpush1.bf16.msra.mxu0 %v306
  %315 = vmatprep.subr.bf16.mxu0 0
  %316 = vmatpush1.bf16.msra.mxu0 %v307
  %317 = vmatprep.subr.bf16.mxu0 0
  %318 = vmatpush1.bf16.msra.mxu0 0
  %319 = vmatprep.subr.bf16.mxu0 0
  %320 = vmatpush1.bf16.msra.mxu0 0
  %321 = vmatprep.subr.bf16.mxu0 0
  %322 = vmatpush1.bf16.msra.mxu0 0
  %323 = vmatprep.subr.bf16.mxu0 0
  %324 = vmatpush1.bf16.msra.mxu0 0
  %325 = vmatprep.subr.bf16.mxu0 0
  %326 = vmatpush1.bf16.msra.mxu0 0
  %327 = vmatprep.subr.bf16.mxu0 0
  %328 = vmatpush1.bf16.msra.mxu0 0
  %329 = vmatprep.subr.bf16.mxu0 0
  %330 = vmatpush1.bf16.msra.mxu0 0
  %331 = vmatprep.subr.bf16.mxu0 0
  %332 = vmatpush1.bf16.msra.mxu0 0
  %333 = vmatprep.subr.bf16.mxu0 0
  %334 = vmatpush1.bf16.msra.mxu0 0
  %335 = vmatprep.subr.bf16.mxu0 0
  %336 = vmatpush1.bf16.msra.mxu0 0
  %337 = vmatprep.subr.bf16.mxu0 0
  %338 = vmatpush1.bf16.msra.mxu0 0
  %339 = vmatprep.subr.bf16.mxu0 0
  %340 = vmatpush1.bf16.msra.mxu0 0
  %341 = vmatprep.subr.bf16.mxu0 0
  %342 = vmatpush1.bf16.msra.mxu0 0
  %343 = vmatprep.subr.bf16.mxu0 0
  %344 = vmatpush1.bf16.msra.mxu0 0
  %345 = vmatprep.mubr.bf16.mxu0 0
  %346 = vmatmul.mubr.bf16.gmra.mrb[0].mxu0 %v311
  %v347 = vpop.f32.mrb[0].mxu0
  %v348 = vadd.f32 %v296, %v347
  %v349 = vpop.f32.mrb[0].mxu0
  %v350 = vpop.f32.mrb[0].mxu0
  %v351 = vadd.f32 %v296, %v350
  %v352 = vpop.f32.mrb[0].mxu0
  %353 = vdwg.mxu0
  %v354 = vadd.f32 %v280, %v348
  %v355 = vadd.f32 %v283, %v351
  %v356 = vld [vmem:[%s8] sm:$0x1]
  %v357 = vld [vmem:[%s9] sm:$0x1]
  %v358 = vsel %vm192, %v354, 0.0
  %359 = vadd.xlane.f32.xlu0 %v358
  %v360 = vpop.xlane.xlu0 %359
  %v361 = vsel %vm192, %v355, 0.0
  %362 = vadd.xlane.f32.xlu0 %v361
  %v363 = vpop.xlane.xlu0 %362
  %v364 = vrcp.pop 32.0
  %v365 = vmul.f32 %v360, %v364
  %v366 = vmul.f32 %v363, %v364
  %v367 = vsub.f32 %v354, %v365
  %v368 = vsub.f32 %v355, %v366
  %v369 = vmul.f32 %v367, %v367
  %v370 = vmul.f32 %v368, %v368
  %v371 = vsel %vm192, %v369, 0.0
  %372 = vadd.xlane.f32.xlu0 %v371
  %v373 = vpop.xlane.xlu0 %372
  %v374 = vsel %vm192, %v370, 0.0
  %375 = vadd.xlane.f32.xlu0 %v374
  %v376 = vpop.xlane.xlu0 %375
  %v377 = vmul.f32 %v373, %v364
  %v378 = vmul.f32 %v376, %v364
  %v379 = vadd.f32 %v377, 1e-05
  %v380 = vadd.f32 %v378, 1e-05
  %v381 = vrsqrt.pop %v379
  %v382 = vrsqrt.pop %v380
  %v383 = vmul.f32 %v367, %v381
  %v384 = vmul.f32 %v368, %v382
  %v386 = vlaneseq
  %v387 = vshrl.u32 %v386, 7
  %v388 = vsub.s32 0, %v387
  %v389 = vrot.slane %v356, %v388
  %v391 = vmul.f32 %v383, %v389
  %v392 = vmul.f32 %v384, %v389
  %v394 = vlaneseq
  %v395 = vshrl.u32 %v394, 7
  %v396 = vsub.s32 0, %v395
  %v397 = vrot.slane %v357, %v396
  %v399 = vadd.f32 %v391, %v397
  %v400 = vadd.f32 %v392, %v397
  %v401 = vpack.c.bf16 %v400, %v399
  %v402 = vld [vmem:[%s10] sm:$0xff]
  %v403 = vld [vmem:[%s10 + $0x8] sm:$0xff]
  %v404 = vld [vmem:[%s10 + $0x10] sm:$0xff]
  %v405 = vld [vmem:[%s10 + $0x18] sm:$0xff]
  %v406 = vld [vmem:[%s10 + $0x20] sm:$0xff]
  %v407 = vld [vmem:[%s10 + $0x28] sm:$0xff]
  %v408 = vld [vmem:[%s10 + $0x30] sm:$0xff]
  %v409 = vld [vmem:[%s10 + $0x38] sm:$0xff]
  %v410 = vld [vmem:[%s10 + $0x40] sm:$0xff]
  %v411 = vld [vmem:[%s10 + $0x48] sm:$0xff]
  %v412 = vld [vmem:[%s10 + $0x50] sm:$0xff]
  %v413 = vld [vmem:[%s10 + $0x58] sm:$0xff]
  %v414 = vld [vmem:[%s10 + $0x60] sm:$0xff]
  %v415 = vld [vmem:[%s10 + $0x68] sm:$0xff]
  %v416 = vld [vmem:[%s10 + $0x70] sm:$0xff]
  %v417 = vld [vmem:[%s10 + $0x78] sm:$0xff]
  %v418 = vld [vmem:[%s10 + $0x80] sm:$0xff]
  %v419 = vld [vmem:[%s10 + $0x88] sm:$0xff]
  %v420 = vld [vmem:[%s10 + $0x90] sm:$0xff]
  %v421 = vld [vmem:[%s10 + $0x98] sm:$0xff]
  %v422 = vld [vmem:[%s10 + $0xa0] sm:$0xff]
  %v423 = vld [vmem:[%s10 + $0xa8] sm:$0xff]
  %v424 = vld [vmem:[%s10 + $0xb0] sm:$0xff]
  %v425 = vld [vmem:[%s10 + $0xb8] sm:$0xff]
  %v426 = vld [vmem:[%s10 + $0xc0] sm:$0xff]
  %v427 = vld [vmem:[%s10 + $0xc8] sm:$0xff]
  %v428 = vld [vmem:[%s10 + $0xd0] sm:$0xff]
  %v429 = vld [vmem:[%s10 + $0xd8] sm:$0xff]
  %v430 = vld [vmem:[%s10 + $0xe0] sm:$0xff]
  %v431 = vld [vmem:[%s10 + $0xe8] sm:$0xff]
  %v432 = vld [vmem:[%s10 + $0xf0] sm:$0xff]
  %v433 = vld [vmem:[%s10 + $0xf8] sm:$0xff]
  %v434 = vld [vmem:[%s11] sm:$0xff]
  %v435 = vld [vmem:[%s11 + $0x8] sm:$0xff]
  %v438 = vlaneseq
  %v439 = vshrl.u32 %v438, 7
  %v440 = vsub.s32 0, %v439
  %v441 = vrot.slane %v434, %v440
  %v442 = vlaneseq
  %v443 = vshrl.u32 %v442, 7
  %v444 = vsub.s32 1, %v443
  %v445 = vrot.slane %v434, %v444
  %v446 = vlaneseq
  %v447 = vshrl.u32 %v446, 7
  %v448 = vsub.s32 2, %v447
  %v449 = vrot.slane %v434, %v448
  %v450 = vlaneseq
  %v451 = vshrl.u32 %v450, 7
  %v452 = vsub.s32 3, %v451
  %v453 = vrot.slane %v434, %v452
  %v454 = vlaneseq
  %v455 = vshrl.u32 %v454, 7
  %v456 = vsub.s32 4, %v455
  %v457 = vrot.slane %v434, %v456
  %v458 = vlaneseq
  %v459 = vshrl.u32 %v458, 7
  %v460 = vsub.s32 5, %v459
  %v461 = vrot.slane %v434, %v460
  %v462 = vlaneseq
  %v463 = vshrl.u32 %v462, 7
  %v464 = vsub.s32 6, %v463
  %v465 = vrot.slane %v434, %v464
  %v466 = vlaneseq
  %v467 = vshrl.u32 %v466, 7
  %v468 = vsub.s32 7, %v467
  %v469 = vrot.slane %v434, %v468
  %v470 = vlaneseq
  %v471 = vshrl.u32 %v470, 7
  %v472 = vsub.s32 0, %v471
  %v473 = vrot.slane %v435, %v472
  %v474 = vlaneseq
  %v475 = vshrl.u32 %v474, 7
  %v476 = vsub.s32 1, %v475
  %v477 = vrot.slane %v435, %v476
  %v478 = vlaneseq
  %v479 = vshrl.u32 %v478, 7
  %v480 = vsub.s32 2, %v479
  %v481 = vrot.slane %v435, %v480
  %v482 = vlaneseq
  %v483 = vshrl.u32 %v482, 7
  %v484 = vsub.s32 3, %v483
  %v485 = vrot.slane %v435, %v484
  %v486 = vlaneseq
  %v487 = vshrl.u32 %v486, 7
  %v488 = vsub.s32 4, %v487
  %v489 = vrot.slane %v435, %v488
  %v490 = vlaneseq
  %v491 = vshrl.u32 %v490, 7
  %v492 = vsub.s32 5, %v491
  %v493 = vrot.slane %v435, %v492
  %v494 = vlaneseq
  %v495 = vshrl.u32 %v494, 7
  %v496 = vsub.s32 6, %v495
  %v497 = vrot.slane %v435, %v496
  %v498 = vlaneseq
  %v499 = vshrl.u32 %v498, 7
  %v500 = vsub.s32 7, %v499
  %v501 = vrot.slane %v435, %v500
  %v550 = vunpack.c.l.b16 %v402
  %v551 = vunpack.c.h.b16 %v402
  %v552 = vunpack.c.l.b16 %v403
  %v553 = vunpack.c.h.b16 %v403
  %v554 = vunpack.c.l.b16 %v404
  %v555 = vunpack.c.h.b16 %v404
  %v556 = vunpack.c.l.b16 %v405
  %v557 = vunpack.c.h.b16 %v405
  %v558 = vunpack.c.l.b16 %v406
  %v559 = vunpack.c.h.b16 %v406
  %v560 = vunpack.c.l.b16 %v407
  %v561 = vunpack.c.h.b16 %v407
  %v562 = vunpack.c.l.b16 %v408
  %v563 = vunpack.c.h.b16 %v408
  %v564 = vunpack.c.l.b16 %v409
  %v565 = vunpack.c.h.b16 %v409
  %v566 = vunpack.c.l.b16 %v410
  %v567 = vunpack.c.h.b16 %v410
  %v568 = vunpack.c.l.b16 %v411
  %v569 = vunpack.c.h.b16 %v411
  %v570 = vunpack.c.l.b16 %v412
  %v571 = vunpack.c.h.b16 %v412
  %v572 = vunpack.c.l.b16 %v413
  %v573 = vunpack.c.h.b16 %v413
  %v574 = vunpack.c.l.b16 %v414
  %v575 = vunpack.c.h.b16 %v414
  %v576 = vunpack.c.l.b16 %v415
  %v577 = vunpack.c.h.b16 %v415
  %v578 = vunpack.c.l.b16 %v416
  %v579 = vunpack.c.h.b16 %v416
  %v580 = vunpack.c.l.b16 %v417
  %v581 = vunpack.c.h.b16 %v417
  %v582 = vunpack.c.l.b16 %v418
  %v583 = vunpack.c.h.b16 %v418
  %v584 = vunpack.c.l.b16 %v419
  %v585 = vunpack.c.h.b16 %v419
  %v586 = vunpack.c.l.b16 %v420
  %v587 = vunpack.c.h.b16 %v420
  %v588 = vunpack.c.l.b16 %v421
  %v589 = vunpack.c.h.b16 %v421
  %v590 = vunpack.c.l.b16 %v422
  %v591 = vunpack.c.h.b16 %v422
  %v592 = vunpack.c.l.b16 %v423
  %v593 = vunpack.c.h.b16 %v423
  %v594 = vunpack.c.l.b16 %v424
  %v595 = vunpack.c.h.b16 %v424
  %v596 = vunpack.c.l.b16 %v425
  %v597 = vunpack.c.h.b16 %v425
  %v598 = vunpack.c.l.b16 %v426
  %v599 = vunpack.c.h.b16 %v426
  %v600 = vunpack.c.l.b16 %v427
  %v601 = vunpack.c.h.b16 %v427
  %v602 = vunpack.c.l.b16 %v428
  %v603 = vunpack.c.h.b16 %v428
  %v604 = vunpack.c.l.b16 %v429
  %v605 = vunpack.c.h.b16 %v429
  %v606 = vunpack.c.l.b16 %v430
  %v607 = vunpack.c.h.b16 %v430
  %v608 = vunpack.c.l.b16 %v431
  %v609 = vunpack.c.h.b16 %v431
  %v610 = vunpack.c.l.b16 %v432
  %v611 = vunpack.c.h.b16 %v432
  %v612 = vunpack.c.l.b16 %v433
  %v613 = vunpack.c.h.b16 %v433
  %v614 = vpack.c.b16 %v566, %v550
  %v615 = vpack.c.b16 %v567, %v551
  %v616 = vpack.c.b16 %v568, %v552
  %v617 = vpack.c.b16 %v569, %v553
  %v618 = vpack.c.b16 %v570, %v554
  %v619 = vpack.c.b16 %v571, %v555
  %v620 = vpack.c.b16 %v572, %v556
  %v621 = vpack.c.b16 %v573, %v557
  %v622 = vpack.c.b16 %v574, %v558
  %v623 = vpack.c.b16 %v575, %v559
  %v624 = vpack.c.b16 %v576, %v560
  %v625 = vpack.c.b16 %v577, %v561
  %v626 = vpack.c.b16 %v578, %v562
  %v627 = vpack.c.b16 %v579, %v563
  %v628 = vpack.c.b16 %v580, %v564
  %v629 = vpack.c.b16 %v581, %v565
  %v630 = vpack.c.b16 %v598, %v582
  %v631 = vpack.c.b16 %v599, %v583
  %v632 = vpack.c.b16 %v600, %v584
  %v633 = vpack.c.b16 %v601, %v585
  %v634 = vpack.c.b16 %v602, %v586
  %v635 = vpack.c.b16 %v603, %v587
  %v636 = vpack.c.b16 %v604, %v588
  %v637 = vpack.c.b16 %v605, %v589
  %v638 = vpack.c.b16 %v606, %v590
  %v639 = vpack.c.b16 %v607, %v591
  %v640 = vpack.c.b16 %v608, %v592
  %v641 = vpack.c.b16 %v609, %v593
  %v642 = vpack.c.b16 %v610, %v594
  %v643 = vpack.c.b16 %v611, %v595
  %v644 = vpack.c.b16 %v612, %v596
  %v645 = vpack.c.b16 %v613, %v597
  %v679 = vsel %vm192, %v401, 0
  %681 = vmatprep.subr.bf16.mxu0 %v615
  %682 = vmatpush1.bf16.msra.mxu0 %v614
  %683 = vmatprep.subr.bf16.mxu0 %v631
  %684 = vmatpush1.bf16.msra.mxu0 %v630
  %685 = vmatprep.subr.bf16.mxu0 0
  %686 = vmatpush1.bf16.msra.mxu0 0
  %687 = vmatprep.subr.bf16.mxu0 0
  %688 = vmatpush1.bf16.msra.mxu0 0
  %689 = vmatprep.subr.bf16.mxu0 0
  %690 = vmatpush1.bf16.msra.mxu0 0
  %691 = vmatprep.subr.bf16.mxu0 0
  %692 = vmatpush1.bf16.msra.mxu0 0
  %693 = vmatprep.subr.bf16.mxu0 0
  %694 = vmatpush1.bf16.msra.mxu0 0
  %695 = vmatprep.subr.bf16.mxu0 0
  %696 = vmatpush1.bf16.msra.mxu0 0
  %697 = vmatprep.subr.bf16.mxu0 0
  %698 = vmatpush1.bf16.msra.mxu0 0
  %699 = vmatprep.subr.bf16.mxu0 0
  %700 = vmatpush1.bf16.msra.mxu0 0
  %701 = vmatprep.subr.bf16.mxu0 0
  %702 = vmatpush1.bf16.msra.mxu0 0
  %703 = vmatprep.subr.bf16.mxu0 0
  %704 = vmatpush1.bf16.msra.mxu0 0
  %705 = vmatprep.subr.bf16.mxu0 0
  %706 = vmatpush1.bf16.msra.mxu0 0
  %707 = vmatprep.subr.bf16.mxu0 0
  %708 = vmatpush1.bf16.msra.mxu0 0
  %709 = vmatprep.subr.bf16.mxu0 0
  %710 = vmatpush1.bf16.msra.mxu0 0
  %711 = vmatprep.subr.bf16.mxu0 0
  %712 = vmatpush1.bf16.msra.mxu0 0
  %713 = vmatprep.mubr.bf16.mxu0 0
  %714 = vmatmul.mubr.bf16.gmra.mrb[0].mxu0 %v679
  %v715 = vpop.f32.mrb[0].mxu0
  %v716 = vadd.f32 %v441, %v715
  %v717 = vpop.f32.mrb[0].mxu0
  %v718 = vadd.f32 %v445, %v717
  %v719 = vpop.f32.mrb[0].mxu0
  %v720 = vadd.f32 %v441, %v719
  %v721 = vpop.f32.mrb[0].mxu0
  %v722 = vadd.f32 %v445, %v721
  %723 = vdwg.mxu0
  %724 = vmatprep.subr.bf16.mxu0 %v617
  %725 = vmatpush1.bf16.msra.mxu0 %v616
  %726 = vmatprep.subr.bf16.mxu0 %v633
  %727 = vmatpush1.bf16.msra.mxu0 %v632
  %728 = vmatprep.subr.bf16.mxu0 0
  %729 = vmatpush1.bf16.msra.mxu0 0
  %730 = vmatprep.subr.bf16.mxu0 0
  %731 = vmatpush1.bf16.msra.mxu0 0
  %732 = vmatprep.subr.bf16.mxu0 0
  %733 = vmatpush1.bf16.msra.mxu0 0
  %734 = vmatprep.subr.bf16.mxu0 0
  %735 = vmatpush1.bf16.msra.mxu0 0
  %736 = vmatprep.subr.bf16.mxu0 0
  %737 = vmatpush1.bf16.msra.mxu0 0
  %738 = vmatprep.subr.bf16.mxu0 0
  %739 = vmatpush1.bf16.msra.mxu0 0
  %740 = vmatprep.subr.bf16.mxu0 0
  %741 = vmatpush1.bf16.msra.mxu0 0
  %742 = vmatprep.subr.bf16.mxu0 0
  %743 = vmatpush1.bf16.msra.mxu0 0
  %744 = vmatprep.subr.bf16.mxu0 0
  %745 = vmatpush1.bf16.msra.mxu0 0
  %746 = vmatprep.subr.bf16.mxu0 0
  %747 = vmatpush1.bf16.msra.mxu0 0
  %748 = vmatprep.subr.bf16.mxu0 0
  %749 = vmatpush1.bf16.msra.mxu0 0
  %750 = vmatprep.subr.bf16.mxu0 0
  %751 = vmatpush1.bf16.msra.mxu0 0
  %752 = vmatprep.subr.bf16.mxu0 0
  %753 = vmatpush1.bf16.msra.mxu0 0
  %754 = vmatprep.subr.bf16.mxu0 0
  %755 = vmatpush1.bf16.msra.mxu0 0
  %756 = vmatprep.mubr.bf16.mxu0 0
  %757 = vmatmul.mubr.bf16.gmra.mrb[0].mxu0 %v679
  %v758 = vpop.f32.mrb[0].mxu0
  %v759 = vadd.f32 %v449, %v758
  %v760 = vpop.f32.mrb[0].mxu0
  %v761 = vadd.f32 %v453, %v760
  %v762 = vpop.f32.mrb[0].mxu0
  %v763 = vadd.f32 %v449, %v762
  %v764 = vpop.f32.mrb[0].mxu0
  %v765 = vadd.f32 %v453, %v764
  %766 = vdwg.mxu0
  %767 = vmatprep.subr.bf16.mxu0 %v619
  %768 = vmatpush1.bf16.msra.mxu0 %v618
  %769 = vmatprep.subr.bf16.mxu0 %v635
  %770 = vmatpush1.bf16.msra.mxu0 %v634
  %771 = vmatprep.subr.bf16.mxu0 0
  %772 = vmatpush1.bf16.msra.mxu0 0
  %773 = vmatprep.subr.bf16.mxu0 0
  %774 = vmatpush1.bf16.msra.mxu0 0
  %775 = vmatprep.subr.bf16.mxu0 0
  %776 = vmatpush1.bf16.msra.mxu0 0
  %777 = vmatprep.subr.bf16.mxu0 0
  %778 = vmatpush1.bf16.msra.mxu0 0
  %779 = vmatprep.subr.bf16.mxu0 0
  %780 = vmatpush1.bf16.msra.mxu0 0
  %781 = vmatprep.subr.bf16.mxu0 0
  %782 = vmatpush1.bf16.msra.mxu0 0
  %783 = vmatprep.subr.bf16.mxu0 0
  %784 = vmatpush1.bf16.msra.mxu0 0
  %785 = vmatprep.subr.bf16.mxu0 0
  %786 = vmatpush1.bf16.msra.mxu0 0
  %787 = vmatprep.subr.bf16.mxu0 0
  %788 = vmatpush1.bf16.msra.mxu0 0
  %789 = vmatprep.subr.bf16.mxu0 0
  %790 = vmatpush1.bf16.msra.mxu0 0
  %791 = vmatprep.subr.bf16.mxu0 0
  %792 = vmatpush1.bf16.msra.mxu0 0
  %793 = vmatprep.subr.bf16.mxu0 0
  %794 = vmatpush1.bf16.msra.mxu0 0
  %795 = vmatprep.subr.bf16.mxu0 0
  %796 = vmatpush1.bf16.msra.mxu0 0
  %797 = vmatprep.subr.bf16.mxu0 0
  %798 = vmatpush1.bf16.msra.mxu0 0
  %799 = vmatprep.mubr.bf16.mxu0 0
  %800 = vmatmul.mubr.bf16.gmra.mrb[0].mxu0 %v679
  %v801 = vpop.f32.mrb[0].mxu0
  %v802 = vadd.f32 %v457, %v801
  %v803 = vpop.f32.mrb[0].mxu0
  %v804 = vadd.f32 %v461, %v803
  %v805 = vpop.f32.mrb[0].mxu0
  %v806 = vadd.f32 %v457, %v805
  %v807 = vpop.f32.mrb[0].mxu0
  %v808 = vadd.f32 %v461, %v807
  %809 = vdwg.mxu0
  %810 = vmatprep.subr.bf16.mxu0 %v621
  %811 = vmatpush1.bf16.msra.mxu0 %v620
  %812 = vmatprep.subr.bf16.mxu0 %v637
  %813 = vmatpush1.bf16.msra.mxu0 %v636
  %814 = vmatprep.subr.bf16.mxu0 0
  %815 = vmatpush1.bf16.msra.mxu0 0
  %816 = vmatprep.subr.bf16.mxu0 0
  %817 = vmatpush1.bf16.msra.mxu0 0
  %818 = vmatprep.subr.bf16.mxu0 0
  %819 = vmatpush1.bf16.msra.mxu0 0
  %820 = vmatprep.subr.bf16.mxu0 0
  %821 = vmatpush1.bf16.msra.mxu0 0
  %822 = vmatprep.subr.bf16.mxu0 0
  %823 = vmatpush1.bf16.msra.mxu0 0
  %824 = vmatprep.subr.bf16.mxu0 0
  %825 = vmatpush1.bf16.msra.mxu0 0
  %826 = vmatprep.subr.bf16.mxu0 0
  %827 = vmatpush1.bf16.msra.mxu0 0
  %828 = vmatprep.subr.bf16.mxu0 0
  %829 = vmatpush1.bf16.msra.mxu0 0
  %830 = vmatprep.subr.bf16.mxu0 0
  %831 = vmatpush1.bf16.msra.mxu0 0
  %832 = vmatprep.subr.bf16.mxu0 0
  %833 = vmatpush1.bf16.msra.mxu0 0
  %834 = vmatprep.subr.bf16.mxu0 0
  %835 = vmatpush1.bf16.msra.mxu0 0
  %836 = vmatprep.subr.bf16.mxu0 0
  %837 = vmatpush1.bf16.msra.mxu0 0
  %838 = vmatprep.subr.bf16.mxu0 0
  %839 = vmatpush1.bf16.msra.mxu0 0
  %840 = vmatprep.subr.bf16.mxu0 0
  %841 = vmatpush1.bf16.msra.mxu0 0
  %842 = vmatprep.mubr.bf16.mxu0 0
  %843 = vmatmul.mubr.bf16.gmra.mrb[0].mxu0 %v679
  %v844 = vpop.f32.mrb[0].mxu0
  %v845 = vadd.f32 %v465, %v844
  %v846 = vpop.f32.mrb[0].mxu0
  %v847 = vadd.f32 %v469, %v846
  %v848 = vpop.f32.mrb[0].mxu0
  %v849 = vadd.f32 %v465, %v848
  %v850 = vpop.f32.mrb[0].mxu0
  %v851 = vadd.f32 %v469, %v850
  %852 = vdwg.mxu0
  %853 = vmatprep.subr.bf16.mxu0 %v623
  %854 = vmatpush1.bf16.msra.mxu0 %v622
  %855 = vmatprep.subr.bf16.mxu0 %v639
  %856 = vmatpush1.bf16.msra.mxu0 %v638
  %857 = vmatprep.subr.bf16.mxu0 0
  %858 = vmatpush1.bf16.msra.mxu0 0
  %859 = vmatprep.subr.bf16.mxu0 0
  %860 = vmatpush1.bf16.msra.mxu0 0
  %861 = vmatprep.subr.bf16.mxu0 0
  %862 = vmatpush1.bf16.msra.mxu0 0
  %863 = vmatprep.subr.bf16.mxu0 0
  %864 = vmatpush1.bf16.msra.mxu0 0
  %865 = vmatprep.subr.bf16.mxu0 0
  %866 = vmatpush1.bf16.msra.mxu0 0
  %867 = vmatprep.subr.bf16.mxu0 0
  %868 = vmatpush1.bf16.msra.mxu0 0
  %869 = vmatprep.subr.bf16.mxu0 0
  %870 = vmatpush1.bf16.msra.mxu0 0
  %871 = vmatprep.subr.bf16.mxu0 0
  %872 = vmatpush1.bf16.msra.mxu0 0
  %873 = vmatprep.subr.bf16.mxu0 0
  %874 = vmatpush1.bf16.msra.mxu0 0
  %875 = vmatprep.subr.bf16.mxu0 0
  %876 = vmatpush1.bf16.msra.mxu0 0
  %877 = vmatprep.subr.bf16.mxu0 0
  %878 = vmatpush1.bf16.msra.mxu0 0
  %879 = vmatprep.subr.bf16.mxu0 0
  %880 = vmatpush1.bf16.msra.mxu0 0
  %881 = vmatprep.subr.bf16.mxu0 0
  %882 = vmatpush1.bf16.msra.mxu0 0
  %883 = vmatprep.subr.bf16.mxu0 0
  %884 = vmatpush1.bf16.msra.mxu0 0
  %885 = vmatprep.mubr.bf16.mxu0 0
  %886 = vmatmul.mubr.bf16.gmra.mrb[0].mxu0 %v679
  %v887 = vpop.f32.mrb[0].mxu0
  %v888 = vadd.f32 %v473, %v887
  %v889 = vpop.f32.mrb[0].mxu0
  %v890 = vadd.f32 %v477, %v889
  %v891 = vpop.f32.mrb[0].mxu0
  %v892 = vadd.f32 %v473, %v891
  %v893 = vpop.f32.mrb[0].mxu0
  %v894 = vadd.f32 %v477, %v893
  %895 = vdwg.mxu0
  %896 = vmatprep.subr.bf16.mxu0 %v625
  %897 = vmatpush1.bf16.msra.mxu0 %v624
  %898 = vmatprep.subr.bf16.mxu0 %v641
  %899 = vmatpush1.bf16.msra.mxu0 %v640
  %900 = vmatprep.subr.bf16.mxu0 0
  %901 = vmatpush1.bf16.msra.mxu0 0
  %902 = vmatprep.subr.bf16.mxu0 0
  %903 = vmatpush1.bf16.msra.mxu0 0
  %904 = vmatprep.subr.bf16.mxu0 0
  %905 = vmatpush1.bf16.msra.mxu0 0
  %906 = vmatprep.subr.bf16.mxu0 0
  %907 = vmatpush1.bf16.msra.mxu0 0
  %908 = vmatprep.subr.bf16.mxu0 0
  %909 = vmatpush1.bf16.msra.mxu0 0
  %910 = vmatprep.subr.bf16.mxu0 0
  %911 = vmatpush1.bf16.msra.mxu0 0
  %912 = vmatprep.subr.bf16.mxu0 0
  %913 = vmatpush1.bf16.msra.mxu0 0
  %914 = vmatprep.subr.bf16.mxu0 0
  %915 = vmatpush1.bf16.msra.mxu0 0
  %916 = vmatprep.subr.bf16.mxu0 0
  %917 = vmatpush1.bf16.msra.mxu0 0
  %918 = vmatprep.subr.bf16.mxu0 0
  %919 = vmatpush1.bf16.msra.mxu0 0
  %920 = vmatprep.subr.bf16.mxu0 0
  %921 = vmatpush1.bf16.msra.mxu0 0
  %922 = vmatprep.subr.bf16.mxu0 0
  %923 = vmatpush1.bf16.msra.mxu0 0
  %924 = vmatprep.subr.bf16.mxu0 0
  %925 = vmatpush1.bf16.msra.mxu0 0
  %926 = vmatprep.subr.bf16.mxu0 0
  %927 = vmatpush1.bf16.msra.mxu0 0
  %928 = vmatprep.mubr.bf16.mxu0 0
  %929 = vmatmul.mubr.bf16.gmra.mrb[0].mxu0 %v679
  %v930 = vpop.f32.mrb[0].mxu0
  %v931 = vadd.f32 %v481, %v930
  %v932 = vpop.f32.mrb[0].mxu0
  %v933 = vadd.f32 %v485, %v932
  %v934 = vpop.f32.mrb[0].mxu0
  %v935 = vadd.f32 %v481, %v934
  %v936 = vpop.f32.mrb[0].mxu0
  %v937 = vadd.f32 %v485, %v936
  %938 = vdwg.mxu0
  %939 = vmatprep.subr.bf16.mxu0 %v627
  %940 = vmatpush1.bf16.msra.mxu0 %v626
  %941 = vmatprep.subr.bf16.mxu0 %v643
  %942 = vmatpush1.bf16.msra.mxu0 %v642
  %943 = vmatprep.subr.bf16.mxu0 0
  %944 = vmatpush1.bf16.msra.mxu0 0
  %945 = vmatprep.subr.bf16.mxu0 0
  %946 = vmatpush1.bf16.msra.mxu0 0
  %947 = vmatprep.subr.bf16.mxu0 0
  %948 = vmatpush1.bf16.msra.mxu0 0
  %949 = vmatprep.subr.bf16.mxu0 0
  %950 = vmatpush1.bf16.msra.mxu0 0
  %951 = vmatprep.subr.bf16.mxu0 0
  %952 = vmatpush1.bf16.msra.mxu0 0
  %953 = vmatprep.subr.bf16.mxu0 0
  %954 = vmatpush1.bf16.msra.mxu0 0
  %955 = vmatprep.subr.bf16.mxu0 0
  %956 = vmatpush1.bf16.msra.mxu0 0
  %957 = vmatprep.subr.bf16.mxu0 0
  %958 = vmatpush1.bf16.msra.mxu0 0
  %959 = vmatprep.subr.bf16.mxu0 0
  %960 = vmatpush1.bf16.msra.mxu0 0
  %961 = vmatprep.subr.bf16.mxu0 0
  %962 = vmatpush1.bf16.msra.mxu0 0
  %963 = vmatprep.subr.bf16.mxu0 0
  %964 = vmatpush1.bf16.msra.mxu0 0
  %965 = vmatprep.subr.bf16.mxu0 0
  %966 = vmatpush1.bf16.msra.mxu0 0
  %967 = vmatprep.subr.bf16.mxu0 0
  %968 = vmatpush1.bf16.msra.mxu0 0
  %969 = vmatprep.subr.bf16.mxu0 0
  %970 = vmatpush1.bf16.msra.mxu0 0
  %971 = vmatprep.mubr.bf16.mxu0 0
  %972 = vmatmul.mubr.bf16.gmra.mrb[0].mxu0 %v679
  %v973 = vpop.f32.mrb[0].mxu0
  %v974 = vadd.f32 %v489, %v973
  %v975 = vpop.f32.mrb[0].mxu0
  %v976 = vadd.f32 %v493, %v975
  %v977 = vpop.f32.mrb[0].mxu0
  %v978 = vadd.f32 %v489, %v977
  %v979 = vpop.f32.mrb[0].mxu0
  %v980 = vadd.f32 %v493, %v979
  %981 = vdwg.mxu0
  %982 = vmatprep.subr.bf16.mxu0 %v629
  %983 = vmatpush1.bf16.msra.mxu0 %v628
  %984 = vmatprep.subr.bf16.mxu0 %v645
  %985 = vmatpush1.bf16.msra.mxu0 %v644
  %986 = vmatprep.subr.bf16.mxu0 0
  %987 = vmatpush1.bf16.msra.mxu0 0
  %988 = vmatprep.subr.bf16.mxu0 0
  %989 = vmatpush1.bf16.msra.mxu0 0
  %990 = vmatprep.subr.bf16.mxu0 0
  %991 = vmatpush1.bf16.msra.mxu0 0
  %992 = vmatprep.subr.bf16.mxu0 0
  %993 = vmatpush1.bf16.msra.mxu0 0
  %994 = vmatprep.subr.bf16.mxu0 0
  %995 = vmatpush1.bf16.msra.mxu0 0
  %996 = vmatprep.subr.bf16.mxu0 0
  %997 = vmatpush1.bf16.msra.mxu0 0
  %998 = vmatprep.subr.bf16.mxu0 0
  %999 = vmatpush1.bf16.msra.mxu0 0
  %1000 = vmatprep.subr.bf16.mxu0 0
  %1001 = vmatpush1.bf16.msra.mxu0 0
  %1002 = vmatprep.subr.bf16.mxu0 0
  %1003 = vmatpush1.bf16.msra.mxu0 0
  %1004 = vmatprep.subr.bf16.mxu0 0
  %1005 = vmatpush1.bf16.msra.mxu0 0
  %1006 = vmatprep.subr.bf16.mxu0 0
  %1007 = vmatpush1.bf16.msra.mxu0 0
  %1008 = vmatprep.subr.bf16.mxu0 0
  %1009 = vmatpush1.bf16.msra.mxu0 0
  %1010 = vmatprep.subr.bf16.mxu0 0
  %1011 = vmatpush1.bf16.msra.mxu0 0
  %1012 = vmatprep.subr.bf16.mxu0 0
  %1013 = vmatpush1.bf16.msra.mxu0 0
  %1014 = vmatprep.mubr.bf16.mxu0 0
  %1015 = vmatmul.mubr.bf16.gmra.mrb[0].mxu0 %v679
  %v1016 = vpop.f32.mrb[0].mxu0
  %v1017 = vadd.f32 %v497, %v1016
  %v1018 = vpop.f32.mrb[0].mxu0
  %v1019 = vadd.f32 %v501, %v1018
  %v1020 = vpop.f32.mrb[0].mxu0
  %v1021 = vadd.f32 %v497, %v1020
  %v1022 = vpop.f32.mrb[0].mxu0
  %v1023 = vadd.f32 %v501, %v1022
  %1024 = vdwg.mxu0
  %v1025 = vmax.f32 %v716, 0.0
  %v1026 = vmax.f32 %v718, 0.0
  %v1027 = vmax.f32 %v759, 0.0
  %v1028 = vmax.f32 %v761, 0.0
  %v1029 = vmax.f32 %v802, 0.0
  %v1030 = vmax.f32 %v804, 0.0
  %v1031 = vmax.f32 %v845, 0.0
  %v1032 = vmax.f32 %v847, 0.0
  %v1033 = vmax.f32 %v888, 0.0
  %v1034 = vmax.f32 %v890, 0.0
  %v1035 = vmax.f32 %v931, 0.0
  %v1036 = vmax.f32 %v933, 0.0
  %v1037 = vmax.f32 %v974, 0.0
  %v1038 = vmax.f32 %v976, 0.0
  %v1039 = vmax.f32 %v1017, 0.0
  %v1040 = vmax.f32 %v1019, 0.0
  %v1041 = vmax.f32 %v720, 0.0
  %v1042 = vmax.f32 %v722, 0.0
  %v1043 = vmax.f32 %v763, 0.0
  %v1044 = vmax.f32 %v765, 0.0
  %v1045 = vmax.f32 %v806, 0.0
  %v1046 = vmax.f32 %v808, 0.0
  %v1047 = vmax.f32 %v849, 0.0
  %v1048 = vmax.f32 %v851, 0.0
  %v1049 = vmax.f32 %v892, 0.0
  %v1050 = vmax.f32 %v894, 0.0
  %v1051 = vmax.f32 %v935, 0.0
  %v1052 = vmax.f32 %v937, 0.0
  %v1053 = vmax.f32 %v978, 0.0
  %v1054 = vmax.f32 %v980, 0.0
  %v1055 = vmax.f32 %v1021, 0.0
  %v1056 = vmax.f32 %v1023, 0.0
  %v1057 = vpack.c.bf16 %v1041, %v1025
  %v1058 = vpack.c.bf16 %v1042, %v1026
  %v1059 = vpack.c.bf16 %v1043, %v1027
  %v1060 = vpack.c.bf16 %v1044, %v1028
  %v1061 = vpack.c.bf16 %v1045, %v1029
  %v1062 = vpack.c.bf16 %v1046, %v1030
  %v1063 = vpack.c.bf16 %v1047, %v1031
  %v1064 = vpack.c.bf16 %v1048, %v1032
  %v1065 = vpack.c.bf16 %v1049, %v1033
  %v1066 = vpack.c.bf16 %v1050, %v1034
  %v1067 = vpack.c.bf16 %v1051, %v1035
  %v1068 = vpack.c.bf16 %v1052, %v1036
  %v1069 = vpack.c.bf16 %v1053, %v1037
  %v1070 = vpack.c.bf16 %v1054, %v1038
  %v1071 = vpack.c.bf16 %v1055, %v1039
  %v1072 = vpack.c.bf16 %v1056, %v1040
  %v1073 = vld [vmem:[%s12] sm:$0xf]
  %v1074 = vld [vmem:[%s12 + $0x4] sm:$0xf]
  %v1075 = vld [vmem:[%s12 + $0x8] sm:$0xf]
  %v1076 = vld [vmem:[%s12 + $0xc] sm:$0xf]
  %v1077 = vld [vmem:[%s12 + $0x10] sm:$0xf]
  %v1078 = vld [vmem:[%s12 + $0x14] sm:$0xf]
  %v1079 = vld [vmem:[%s12 + $0x18] sm:$0xf]
  %v1080 = vld [vmem:[%s12 + $0x1c] sm:$0xf]
  %v1081 = vld [vmem:[%s12 + $0x20] sm:$0xf]
  %v1082 = vld [vmem:[%s12 + $0x24] sm:$0xf]
  %v1083 = vld [vmem:[%s12 + $0x28] sm:$0xf]
  %v1084 = vld [vmem:[%s12 + $0x2c] sm:$0xf]
  %v1085 = vld [vmem:[%s12 + $0x30] sm:$0xf]
  %v1086 = vld [vmem:[%s12 + $0x34] sm:$0xf]
  %v1087 = vld [vmem:[%s12 + $0x38] sm:$0xf]
  %v1088 = vld [vmem:[%s12 + $0x3c] sm:$0xf]
  %v1089 = vld [vmem:[%s12 + $0x40] sm:$0xf]
  %v1090 = vld [vmem:[%s12 + $0x44] sm:$0xf]
  %v1091 = vld [vmem:[%s12 + $0x48] sm:$0xf]
  %v1092 = vld [vmem:[%s12 + $0x4c] sm:$0xf]
  %v1093 = vld [vmem:[%s12 + $0x50] sm:$0xf]
  %v1094 = vld [vmem:[%s12 + $0x54] sm:$0xf]
  %v1095 = vld [vmem:[%s12 + $0x58] sm:$0xf]
  %v1096 = vld [vmem:[%s12 + $0x5c] sm:$0xf]
  %v1097 = vld [vmem:[%s12 + $0x60] sm:$0xf]
  %v1098 = vld [vmem:[%s12 + $0x64] sm:$0xf]
  %v1099 = vld [vmem:[%s12 + $0x68] sm:$0xf]
  %v1100 = vld [vmem:[%s12 + $0x6c] sm:$0xf]
  %v1101 = vld [vmem:[%s12 + $0x70] sm:$0xf]
  %v1102 = vld [vmem:[%s12 + $0x74] sm:$0xf]
  %v1103 = vld [vmem:[%s12 + $0x78] sm:$0xf]
  %v1104 = vld [vmem:[%s12 + $0x7c] sm:$0xf]
  %v1105 = vld [vmem:[%s12 + $0x80] sm:$0xf]
  %v1106 = vld [vmem:[%s12 + $0x84] sm:$0xf]
  %v1107 = vld [vmem:[%s12 + $0x88] sm:$0xf]
  %v1108 = vld [vmem:[%s12 + $0x8c] sm:$0xf]
  %v1109 = vld [vmem:[%s12 + $0x90] sm:$0xf]
  %v1110 = vld [vmem:[%s12 + $0x94] sm:$0xf]
  %v1111 = vld [vmem:[%s12 + $0x98] sm:$0xf]
  %v1112 = vld [vmem:[%s12 + $0x9c] sm:$0xf]
  %v1113 = vld [vmem:[%s12 + $0xa0] sm:$0xf]
  %v1114 = vld [vmem:[%s12 + $0xa4] sm:$0xf]
  %v1115 = vld [vmem:[%s12 + $0xa8] sm:$0xf]
  %v1116 = vld [vmem:[%s12 + $0xac] sm:$0xf]
  %v1117 = vld [vmem:[%s12 + $0xb0] sm:$0xf]
  %v1118 = vld [vmem:[%s12 + $0xb4] sm:$0xf]
  %v1119 = vld [vmem:[%s12 + $0xb8] sm:$0xf]
  %v1120 = vld [vmem:[%s12 + $0xbc] sm:$0xf]
  %v1121 = vld [vmem:[%s12 + $0xc0] sm:$0xf]
  %v1122 = vld [vmem:[%s12 + $0xc4] sm:$0xf]
  %v1123 = vld [vmem:[%s12 + $0xc8] sm:$0xf]
  %v1124 = vld [vmem:[%s12 + $0xcc] sm:$0xf]
  %v1125 = vld [vmem:[%s12 + $0xd0] sm:$0xf]
  %v1126 = vld [vmem:[%s12 + $0xd4] sm:$0xf]
  %v1127 = vld [vmem:[%s12 + $0xd8] sm:$0xf]
  %v1128 = vld [vmem:[%s12 + $0xdc] sm:$0xf]
  %v1129 = vld [vmem:[%s12 + $0xe0] sm:$0xf]
  %v1130 = vld [vmem:[%s12 + $0xe4] sm:$0xf]
  %v1131 = vld [vmem:[%s12 + $0xe8] sm:$0xf]
  %v1132 = vld [vmem:[%s12 + $0xec] sm:$0xf]
  %v1133 = vld [vmem:[%s12 + $0xf0] sm:$0xf]
  %v1134 = vld [vmem:[%s12 + $0xf4] sm:$0xf]
  %v1135 = vld [vmem:[%s12 + $0xf8] sm:$0xf]
  %v1136 = vld [vmem:[%s12 + $0xfc] sm:$0xf]
  %v1137 = vld [vmem:[%s12 + $0x100] sm:$0xf]
  %v1138 = vld [vmem:[%s12 + $0x104] sm:$0xf]
  %v1139 = vld [vmem:[%s12 + $0x108] sm:$0xf]
  %v1140 = vld [vmem:[%s12 + $0x10c] sm:$0xf]
  %v1141 = vld [vmem:[%s12 + $0x110] sm:$0xf]
  %v1142 = vld [vmem:[%s12 + $0x114] sm:$0xf]
  %v1143 = vld [vmem:[%s12 + $0x118] sm:$0xf]
  %v1144 = vld [vmem:[%s12 + $0x11c] sm:$0xf]
  %v1145 = vld [vmem:[%s12 + $0x120] sm:$0xf]
  %v1146 = vld [vmem:[%s12 + $0x124] sm:$0xf]
  %v1147 = vld [vmem:[%s12 + $0x128] sm:$0xf]
  %v1148 = vld [vmem:[%s12 + $0x12c] sm:$0xf]
  %v1149 = vld [vmem:[%s12 + $0x130] sm:$0xf]
  %v1150 = vld [vmem:[%s12 + $0x134] sm:$0xf]
  %v1151 = vld [vmem:[%s12 + $0x138] sm:$0xf]
  %v1152 = vld [vmem:[%s12 + $0x13c] sm:$0xf]
  %v1153 = vld [vmem:[%s12 + $0x140] sm:$0xf]
  %v1154 = vld [vmem:[%s12 + $0x144] sm:$0xf]
  %v1155 = vld [vmem:[%s12 + $0x148] sm:$0xf]
  %v1156 = vld [vmem:[%s12 + $0x14c] sm:$0xf]
  %v1157 = vld [vmem:[%s12 + $0x150] sm:$0xf]
  %v1158 = vld [vmem:[%s12 + $0x154] sm:$0xf]
  %v1159 = vld [vmem:[%s12 + $0x158] sm:$0xf]
  %v1160 = vld [vmem:[%s12 + $0x15c] sm:$0xf]
  %v1161 = vld [vmem:[%s12 + $0x160] sm:$0xf]
  %v1162 = vld [vmem:[%s12 + $0x164] sm:$0xf]
  %v1163 = vld [vmem:[%s12 + $0x168] sm:$0xf]
  %v1164 = vld [vmem:[%s12 + $0x16c] sm:$0xf]
  %v1165 = vld [vmem:[%s12 + $0x170] sm:$0xf]
  %v1166 = vld [vmem:[%s12 + $0x174] sm:$0xf]
  %v1167 = vld [vmem:[%s12 + $0x178] sm:$0xf]
  %v1168 = vld [vmem:[%s12 + $0x17c] sm:$0xf]
  %v1169 = vld [vmem:[%s12 + $0x180] sm:$0xf]
  %v1170 = vld [vmem:[%s12 + $0x184] sm:$0xf]
  %v1171 = vld [vmem:[%s12 + $0x188] sm:$0xf]
  %v1172 = vld [vmem:[%s12 + $0x18c] sm:$0xf]
  %v1173 = vld [vmem:[%s12 + $0x190] sm:$0xf]
  %v1174 = vld [vmem:[%s12 + $0x194] sm:$0xf]
  %v1175 = vld [vmem:[%s12 + $0x198] sm:$0xf]
  %v1176 = vld [vmem:[%s12 + $0x19c] sm:$0xf]
  %v1177 = vld [vmem:[%s12 + $0x1a0] sm:$0xf]
  %v1178 = vld [vmem:[%s12 + $0x1a4] sm:$0xf]
  %v1179 = vld [vmem:[%s12 + $0x1a8] sm:$0xf]
  %v1180 = vld [vmem:[%s12 + $0x1ac] sm:$0xf]
  %v1181 = vld [vmem:[%s12 + $0x1b0] sm:$0xf]
  %v1182 = vld [vmem:[%s12 + $0x1b4] sm:$0xf]
  %v1183 = vld [vmem:[%s12 + $0x1b8] sm:$0xf]
  %v1184 = vld [vmem:[%s12 + $0x1bc] sm:$0xf]
  %v1185 = vld [vmem:[%s12 + $0x1c0] sm:$0xf]
  %v1186 = vld [vmem:[%s12 + $0x1c4] sm:$0xf]
  %v1187 = vld [vmem:[%s12 + $0x1c8] sm:$0xf]
  %v1188 = vld [vmem:[%s12 + $0x1cc] sm:$0xf]
  %v1189 = vld [vmem:[%s12 + $0x1d0] sm:$0xf]
  %v1190 = vld [vmem:[%s12 + $0x1d4] sm:$0xf]
  %v1191 = vld [vmem:[%s12 + $0x1d8] sm:$0xf]
  %v1192 = vld [vmem:[%s12 + $0x1dc] sm:$0xf]
  %v1193 = vld [vmem:[%s12 + $0x1e0] sm:$0xf]
  %v1194 = vld [vmem:[%s12 + $0x1e4] sm:$0xf]
  %v1195 = vld [vmem:[%s12 + $0x1e8] sm:$0xf]
  %v1196 = vld [vmem:[%s12 + $0x1ec] sm:$0xf]
  %v1197 = vld [vmem:[%s12 + $0x1f0] sm:$0xf]
  %v1198 = vld [vmem:[%s12 + $0x1f4] sm:$0xf]
  %v1199 = vld [vmem:[%s12 + $0x1f8] sm:$0xf]
  %v1200 = vld [vmem:[%s12 + $0x1fc] sm:$0xf]
  %v1201 = vld [vmem:[%s12 + $0x200] sm:$0xf]
  %v1202 = vld [vmem:[%s12 + $0x204] sm:$0xf]
  %v1203 = vld [vmem:[%s12 + $0x208] sm:$0xf]
  %v1204 = vld [vmem:[%s12 + $0x20c] sm:$0xf]
  %v1205 = vld [vmem:[%s12 + $0x210] sm:$0xf]
  %v1206 = vld [vmem:[%s12 + $0x214] sm:$0xf]
  %v1207 = vld [vmem:[%s12 + $0x218] sm:$0xf]
  %v1208 = vld [vmem:[%s12 + $0x21c] sm:$0xf]
  %v1209 = vld [vmem:[%s12 + $0x220] sm:$0xf]
  %v1210 = vld [vmem:[%s12 + $0x224] sm:$0xf]
  %v1211 = vld [vmem:[%s12 + $0x228] sm:$0xf]
  %v1212 = vld [vmem:[%s12 + $0x22c] sm:$0xf]
  %v1213 = vld [vmem:[%s12 + $0x230] sm:$0xf]
  %v1214 = vld [vmem:[%s12 + $0x234] sm:$0xf]
  %v1215 = vld [vmem:[%s12 + $0x238] sm:$0xf]
  %v1216 = vld [vmem:[%s12 + $0x23c] sm:$0xf]
  %v1217 = vld [vmem:[%s12 + $0x240] sm:$0xf]
  %v1218 = vld [vmem:[%s12 + $0x244] sm:$0xf]
  %v1219 = vld [vmem:[%s12 + $0x248] sm:$0xf]
  %v1220 = vld [vmem:[%s12 + $0x24c] sm:$0xf]
  %v1221 = vld [vmem:[%s12 + $0x250] sm:$0xf]
  %v1222 = vld [vmem:[%s12 + $0x254] sm:$0xf]
  %v1223 = vld [vmem:[%s12 + $0x258] sm:$0xf]
  %v1224 = vld [vmem:[%s12 + $0x25c] sm:$0xf]
  %v1225 = vld [vmem:[%s12 + $0x260] sm:$0xf]
  %v1226 = vld [vmem:[%s12 + $0x264] sm:$0xf]
  %v1227 = vld [vmem:[%s12 + $0x268] sm:$0xf]
  %v1228 = vld [vmem:[%s12 + $0x26c] sm:$0xf]
  %v1229 = vld [vmem:[%s12 + $0x270] sm:$0xf]
  %v1230 = vld [vmem:[%s12 + $0x274] sm:$0xf]
  %v1231 = vld [vmem:[%s12 + $0x278] sm:$0xf]
  %v1232 = vld [vmem:[%s12 + $0x27c] sm:$0xf]
  %v1233 = vld [vmem:[%s12 + $0x280] sm:$0xf]
  %v1234 = vld [vmem:[%s12 + $0x284] sm:$0xf]
  %v1235 = vld [vmem:[%s12 + $0x288] sm:$0xf]
  %v1236 = vld [vmem:[%s12 + $0x28c] sm:$0xf]
  %v1237 = vld [vmem:[%s12 + $0x290] sm:$0xf]
  %v1238 = vld [vmem:[%s12 + $0x294] sm:$0xf]
  %v1239 = vld [vmem:[%s12 + $0x298] sm:$0xf]
  %v1240 = vld [vmem:[%s12 + $0x29c] sm:$0xf]
  %v1241 = vld [vmem:[%s12 + $0x2a0] sm:$0xf]
  %v1242 = vld [vmem:[%s12 + $0x2a4] sm:$0xf]
  %v1243 = vld [vmem:[%s12 + $0x2a8] sm:$0xf]
  %v1244 = vld [vmem:[%s12 + $0x2ac] sm:$0xf]
  %v1245 = vld [vmem:[%s12 + $0x2b0] sm:$0xf]
  %v1246 = vld [vmem:[%s12 + $0x2b4] sm:$0xf]
  %v1247 = vld [vmem:[%s12 + $0x2b8] sm:$0xf]
  %v1248 = vld [vmem:[%s12 + $0x2bc] sm:$0xf]
  %v1249 = vld [vmem:[%s12 + $0x2c0] sm:$0xf]
  %v1250 = vld [vmem:[%s12 + $0x2c4] sm:$0xf]
  %v1251 = vld [vmem:[%s12 + $0x2c8] sm:$0xf]
  %v1252 = vld [vmem:[%s12 + $0x2cc] sm:$0xf]
  %v1253 = vld [vmem:[%s12 + $0x2d0] sm:$0xf]
  %v1254 = vld [vmem:[%s12 + $0x2d4] sm:$0xf]
  %v1255 = vld [vmem:[%s12 + $0x2d8] sm:$0xf]
  %v1256 = vld [vmem:[%s12 + $0x2dc] sm:$0xf]
  %v1257 = vld [vmem:[%s12 + $0x2e0] sm:$0xf]
  %v1258 = vld [vmem:[%s12 + $0x2e4] sm:$0xf]
  %v1259 = vld [vmem:[%s12 + $0x2e8] sm:$0xf]
  %v1260 = vld [vmem:[%s12 + $0x2ec] sm:$0xf]
  %v1261 = vld [vmem:[%s12 + $0x2f0] sm:$0xf]
  %v1262 = vld [vmem:[%s12 + $0x2f4] sm:$0xf]
  %v1263 = vld [vmem:[%s12 + $0x2f8] sm:$0xf]
  %v1264 = vld [vmem:[%s12 + $0x2fc] sm:$0xf]
  %v1265 = vld [vmem:[%s12 + $0x300] sm:$0xf]
  %v1266 = vld [vmem:[%s12 + $0x304] sm:$0xf]
  %v1267 = vld [vmem:[%s12 + $0x308] sm:$0xf]
  %v1268 = vld [vmem:[%s12 + $0x30c] sm:$0xf]
  %v1269 = vld [vmem:[%s12 + $0x310] sm:$0xf]
  %v1270 = vld [vmem:[%s12 + $0x314] sm:$0xf]
  %v1271 = vld [vmem:[%s12 + $0x318] sm:$0xf]
  %v1272 = vld [vmem:[%s12 + $0x31c] sm:$0xf]
  %v1273 = vld [vmem:[%s12 + $0x320] sm:$0xf]
  %v1274 = vld [vmem:[%s12 + $0x324] sm:$0xf]
  %v1275 = vld [vmem:[%s12 + $0x328] sm:$0xf]
  %v1276 = vld [vmem:[%s12 + $0x32c] sm:$0xf]
  %v1277 = vld [vmem:[%s12 + $0x330] sm:$0xf]
  %v1278 = vld [vmem:[%s12 + $0x334] sm:$0xf]
  %v1279 = vld [vmem:[%s12 + $0x338] sm:$0xf]
  %v1280 = vld [vmem:[%s12 + $0x33c] sm:$0xf]
  %v1281 = vld [vmem:[%s12 + $0x340] sm:$0xf]
  %v1282 = vld [vmem:[%s12 + $0x344] sm:$0xf]
  %v1283 = vld [vmem:[%s12 + $0x348] sm:$0xf]
  %v1284 = vld [vmem:[%s12 + $0x34c] sm:$0xf]
  %v1285 = vld [vmem:[%s12 + $0x350] sm:$0xf]
  %v1286 = vld [vmem:[%s12 + $0x354] sm:$0xf]
  %v1287 = vld [vmem:[%s12 + $0x358] sm:$0xf]
  %v1288 = vld [vmem:[%s12 + $0x35c] sm:$0xf]
  %v1289 = vld [vmem:[%s12 + $0x360] sm:$0xf]
  %v1290 = vld [vmem:[%s12 + $0x364] sm:$0xf]
  %v1291 = vld [vmem:[%s12 + $0x368] sm:$0xf]
  %v1292 = vld [vmem:[%s12 + $0x36c] sm:$0xf]
  %v1293 = vld [vmem:[%s12 + $0x370] sm:$0xf]
  %v1294 = vld [vmem:[%s12 + $0x374] sm:$0xf]
  %v1295 = vld [vmem:[%s12 + $0x378] sm:$0xf]
  %v1296 = vld [vmem:[%s12 + $0x37c] sm:$0xf]
  %v1297 = vld [vmem:[%s12 + $0x380] sm:$0xf]
  %v1298 = vld [vmem:[%s12 + $0x384] sm:$0xf]
  %v1299 = vld [vmem:[%s12 + $0x388] sm:$0xf]
  %v1300 = vld [vmem:[%s12 + $0x38c] sm:$0xf]
  %v1301 = vld [vmem:[%s12 + $0x390] sm:$0xf]
  %v1302 = vld [vmem:[%s12 + $0x394] sm:$0xf]
  %v1303 = vld [vmem:[%s12 + $0x398] sm:$0xf]
  %v1304 = vld [vmem:[%s12 + $0x39c] sm:$0xf]
  %v1305 = vld [vmem:[%s12 + $0x3a0] sm:$0xf]
  %v1306 = vld [vmem:[%s12 + $0x3a4] sm:$0xf]
  %v1307 = vld [vmem:[%s12 + $0x3a8] sm:$0xf]
  %v1308 = vld [vmem:[%s12 + $0x3ac] sm:$0xf]
  %v1309 = vld [vmem:[%s12 + $0x3b0] sm:$0xf]
  %v1310 = vld [vmem:[%s12 + $0x3b4] sm:$0xf]
  %v1311 = vld [vmem:[%s12 + $0x3b8] sm:$0xf]
  %v1312 = vld [vmem:[%s12 + $0x3bc] sm:$0xf]
  %v1313 = vld [vmem:[%s12 + $0x3c0] sm:$0xf]
  %v1314 = vld [vmem:[%s12 + $0x3c4] sm:$0xf]
  %v1315 = vld [vmem:[%s12 + $0x3c8] sm:$0xf]
  %v1316 = vld [vmem:[%s12 + $0x3cc] sm:$0xf]
  %v1317 = vld [vmem:[%s12 + $0x3d0] sm:$0xf]
  %v1318 = vld [vmem:[%s12 + $0x3d4] sm:$0xf]
  %v1319 = vld [vmem:[%s12 + $0x3d8] sm:$0xf]
  %v1320 = vld [vmem:[%s12 + $0x3dc] sm:$0xf]
  %v1321 = vld [vmem:[%s12 + $0x3e0] sm:$0xf]
  %v1322 = vld [vmem:[%s12 + $0x3e4] sm:$0xf]
  %v1323 = vld [vmem:[%s12 + $0x3e8] sm:$0xf]
  %v1324 = vld [vmem:[%s12 + $0x3ec] sm:$0xf]
  %v1325 = vld [vmem:[%s12 + $0x3f0] sm:$0xf]
  %v1326 = vld [vmem:[%s12 + $0x3f4] sm:$0xf]
  %v1327 = vld [vmem:[%s12 + $0x3f8] sm:$0xf]
  %v1328 = vld [vmem:[%s12 + $0x3fc] sm:$0xf]
  %v1329 = vld [vmem:[%s13] sm:$0x1]
  %v1331 = vlaneseq
  %v1332 = vshrl.u32 %v1331, 7
  %v1333 = vsub.s32 0, %v1332
  %v1334 = vrot.slane %v1329, %v1333
  %v1592 = vunpack.c.l.b16 %v1073
  %v1593 = vunpack.c.l.b16 %v1074
  %v1594 = vunpack.c.l.b16 %v1075
  %v1595 = vunpack.c.l.b16 %v1076
  %v1596 = vunpack.c.l.b16 %v1077
  %v1597 = vunpack.c.l.b16 %v1078
  %v1598 = vunpack.c.l.b16 %v1079
  %v1599 = vunpack.c.l.b16 %v1080
  %v1600 = vunpack.c.l.b16 %v1081
  %v1601 = vunpack.c.l.b16 %v1082
  %v1602 = vunpack.c.l.b16 %v1083
  %v1603 = vunpack.c.l.b16 %v1084
  %v1604 = vunpack.c.l.b16 %v1085
  %v1605 = vunpack.c.l.b16 %v1086
  %v1606 = vunpack.c.l.b16 %v1087
  %v1607 = vunpack.c.l.b16 %v1088
  %v1608 = vunpack.c.l.b16 %v1089
  %v1609 = vunpack.c.l.b16 %v1090
  %v1610 = vunpack.c.l.b16 %v1091
  %v1611 = vunpack.c.l.b16 %v1092
  %v1612 = vunpack.c.l.b16 %v1093
  %v1613 = vunpack.c.l.b16 %v1094
  %v1614 = vunpack.c.l.b16 %v1095
  %v1615 = vunpack.c.l.b16 %v1096
  %v1616 = vunpack.c.l.b16 %v1097
  %v1617 = vunpack.c.l.b16 %v1098
  %v1618 = vunpack.c.l.b16 %v1099
  %v1619 = vunpack.c.l.b16 %v1100
  %v1620 = vunpack.c.l.b16 %v1101
  %v1621 = vunpack.c.l.b16 %v1102
  %v1622 = vunpack.c.l.b16 %v1103
  %v1623 = vunpack.c.l.b16 %v1104
  %v1624 = vunpack.c.l.b16 %v1105
  %v1625 = vunpack.c.l.b16 %v1106
  %v1626 = vunpack.c.l.b16 %v1107
  %v1627 = vunpack.c.l.b16 %v1108
  %v1628 = vunpack.c.l.b16 %v1109
  %v1629 = vunpack.c.l.b16 %v1110
  %v1630 = vunpack.c.l.b16 %v1111
  %v1631 = vunpack.c.l.b16 %v1112
  %v1632 = vunpack.c.l.b16 %v1113
  %v1633 = vunpack.c.l.b16 %v1114
  %v1634 = vunpack.c.l.b16 %v1115
  %v1635 = vunpack.c.l.b16 %v1116
  %v1636 = vunpack.c.l.b16 %v1117
  %v1637 = vunpack.c.l.b16 %v1118
  %v1638 = vunpack.c.l.b16 %v1119
  %v1639 = vunpack.c.l.b16 %v1120
  %v1640 = vunpack.c.l.b16 %v1121
  %v1641 = vunpack.c.l.b16 %v1122
  %v1642 = vunpack.c.l.b16 %v1123
  %v1643 = vunpack.c.l.b16 %v1124
  %v1644 = vunpack.c.l.b16 %v1125
  %v1645 = vunpack.c.l.b16 %v1126
  %v1646 = vunpack.c.l.b16 %v1127
  %v1647 = vunpack.c.l.b16 %v1128
  %v1648 = vunpack.c.l.b16 %v1129
  %v1649 = vunpack.c.l.b16 %v1130
  %v1650 = vunpack.c.l.b16 %v1131
  %v1651 = vunpack.c.l.b16 %v1132
  %v1652 = vunpack.c.l.b16 %v1133
  %v1653 = vunpack.c.l.b16 %v1134
  %v1654 = vunpack.c.l.b16 %v1135
  %v1655 = vunpack.c.l.b16 %v1136
  %v1656 = vunpack.c.l.b16 %v1137
  %v1657 = vunpack.c.l.b16 %v1138
  %v1658 = vunpack.c.l.b16 %v1139
  %v1659 = vunpack.c.l.b16 %v1140
  %v1660 = vunpack.c.l.b16 %v1141
  %v1661 = vunpack.c.l.b16 %v1142
  %v1662 = vunpack.c.l.b16 %v1143
  %v1663 = vunpack.c.l.b16 %v1144
  %v1664 = vunpack.c.l.b16 %v1145
  %v1665 = vunpack.c.l.b16 %v1146
  %v1666 = vunpack.c.l.b16 %v1147
  %v1667 = vunpack.c.l.b16 %v1148
  %v1668 = vunpack.c.l.b16 %v1149
  %v1669 = vunpack.c.l.b16 %v1150
  %v1670 = vunpack.c.l.b16 %v1151
  %v1671 = vunpack.c.l.b16 %v1152
  %v1672 = vunpack.c.l.b16 %v1153
  %v1673 = vunpack.c.l.b16 %v1154
  %v1674 = vunpack.c.l.b16 %v1155
  %v1675 = vunpack.c.l.b16 %v1156
  %v1676 = vunpack.c.l.b16 %v1157
  %v1677 = vunpack.c.l.b16 %v1158
  %v1678 = vunpack.c.l.b16 %v1159
  %v1679 = vunpack.c.l.b16 %v1160
  %v1680 = vunpack.c.l.b16 %v1161
  %v1681 = vunpack.c.l.b16 %v1162
  %v1682 = vunpack.c.l.b16 %v1163
  %v1683 = vunpack.c.l.b16 %v1164
  %v1684 = vunpack.c.l.b16 %v1165
  %v1685 = vunpack.c.l.b16 %v1166
  %v1686 = vunpack.c.l.b16 %v1167
  %v1687 = vunpack.c.l.b16 %v1168
  %v1688 = vunpack.c.l.b16 %v1169
  %v1689 = vunpack.c.l.b16 %v1170
  %v1690 = vunpack.c.l.b16 %v1171
  %v1691 = vunpack.c.l.b16 %v1172
  %v1692 = vunpack.c.l.b16 %v1173
  %v1693 = vunpack.c.l.b16 %v1174
  %v1694 = vunpack.c.l.b16 %v1175
  %v1695 = vunpack.c.l.b16 %v1176
  %v1696 = vunpack.c.l.b16 %v1177
  %v1697 = vunpack.c.l.b16 %v1178
  %v1698 = vunpack.c.l.b16 %v1179
  %v1699 = vunpack.c.l.b16 %v1180
  %v1700 = vunpack.c.l.b16 %v1181
  %v1701 = vunpack.c.l.b16 %v1182
  %v1702 = vunpack.c.l.b16 %v1183
  %v1703 = vunpack.c.l.b16 %v1184
  %v1704 = vunpack.c.l.b16 %v1185
  %v1705 = vunpack.c.l.b16 %v1186
  %v1706 = vunpack.c.l.b16 %v1187
  %v1707 = vunpack.c.l.b16 %v1188
  %v1708 = vunpack.c.l.b16 %v1189
  %v1709 = vunpack.c.l.b16 %v1190
  %v1710 = vunpack.c.l.b16 %v1191
  %v1711 = vunpack.c.l.b16 %v1192
  %v1712 = vunpack.c.l.b16 %v1193
  %v1713 = vunpack.c.l.b16 %v1194
  %v1714 = vunpack.c.l.b16 %v1195
  %v1715 = vunpack.c.l.b16 %v1196
  %v1716 = vunpack.c.l.b16 %v1197
  %v1717 = vunpack.c.l.b16 %v1198
  %v1718 = vunpack.c.l.b16 %v1199
  %v1719 = vunpack.c.l.b16 %v1200
  %v1720 = vunpack.c.l.b16 %v1201
  %v1721 = vunpack.c.l.b16 %v1202
  %v1722 = vunpack.c.l.b16 %v1203
  %v1723 = vunpack.c.l.b16 %v1204
  %v1724 = vunpack.c.l.b16 %v1205
  %v1725 = vunpack.c.l.b16 %v1206
  %v1726 = vunpack.c.l.b16 %v1207
  %v1727 = vunpack.c.l.b16 %v1208
  %v1728 = vunpack.c.l.b16 %v1209
  %v1729 = vunpack.c.l.b16 %v1210
  %v1730 = vunpack.c.l.b16 %v1211
  %v1731 = vunpack.c.l.b16 %v1212
  %v1732 = vunpack.c.l.b16 %v1213
  %v1733 = vunpack.c.l.b16 %v1214
  %v1734 = vunpack.c.l.b16 %v1215
  %v1735 = vunpack.c.l.b16 %v1216
  %v1736 = vunpack.c.l.b16 %v1217
  %v1737 = vunpack.c.l.b16 %v1218
  %v1738 = vunpack.c.l.b16 %v1219
  %v1739 = vunpack.c.l.b16 %v1220
  %v1740 = vunpack.c.l.b16 %v1221
  %v1741 = vunpack.c.l.b16 %v1222
  %v1742 = vunpack.c.l.b16 %v1223
  %v1743 = vunpack.c.l.b16 %v1224
  %v1744 = vunpack.c.l.b16 %v1225
  %v1745 = vunpack.c.l.b16 %v1226
  %v1746 = vunpack.c.l.b16 %v1227
  %v1747 = vunpack.c.l.b16 %v1228
  %v1748 = vunpack.c.l.b16 %v1229
  %v1749 = vunpack.c.l.b16 %v1230
  %v1750 = vunpack.c.l.b16 %v1231
  %v1751 = vunpack.c.l.b16 %v1232
  %v1752 = vunpack.c.l.b16 %v1233
  %v1753 = vunpack.c.l.b16 %v1234
  %v1754 = vunpack.c.l.b16 %v1235
  %v1755 = vunpack.c.l.b16 %v1236
  %v1756 = vunpack.c.l.b16 %v1237
  %v1757 = vunpack.c.l.b16 %v1238
  %v1758 = vunpack.c.l.b16 %v1239
  %v1759 = vunpack.c.l.b16 %v1240
  %v1760 = vunpack.c.l.b16 %v1241
  %v1761 = vunpack.c.l.b16 %v1242
  %v1762 = vunpack.c.l.b16 %v1243
  %v1763 = vunpack.c.l.b16 %v1244
  %v1764 = vunpack.c.l.b16 %v1245
  %v1765 = vunpack.c.l.b16 %v1246
  %v1766 = vunpack.c.l.b16 %v1247
  %v1767 = vunpack.c.l.b16 %v1248
  %v1768 = vunpack.c.l.b16 %v1249
  %v1769 = vunpack.c.l.b16 %v1250
  %v1770 = vunpack.c.l.b16 %v1251
  %v1771 = vunpack.c.l.b16 %v1252
  %v1772 = vunpack.c.l.b16 %v1253
  %v1773 = vunpack.c.l.b16 %v1254
  %v1774 = vunpack.c.l.b16 %v1255
  %v1775 = vunpack.c.l.b16 %v1256
  %v1776 = vunpack.c.l.b16 %v1257
  %v1777 = vunpack.c.l.b16 %v1258
  %v1778 = vunpack.c.l.b16 %v1259
  %v1779 = vunpack.c.l.b16 %v1260
  %v1780 = vunpack.c.l.b16 %v1261
  %v1781 = vunpack.c.l.b16 %v1262
  %v1782 = vunpack.c.l.b16 %v1263
  %v1783 = vunpack.c.l.b16 %v1264
  %v1784 = vunpack.c.l.b16 %v1265
  %v1785 = vunpack.c.l.b16 %v1266
  %v1786 = vunpack.c.l.b16 %v1267
  %v1787 = vunpack.c.l.b16 %v1268
  %v1788 = vunpack.c.l.b16 %v1269
  %v1789 = vunpack.c.l.b16 %v1270
  %v1790 = vunpack.c.l.b16 %v1271
  %v1791 = vunpack.c.l.b16 %v1272
  %v1792 = vunpack.c.l.b16 %v1273
  %v1793 = vunpack.c.l.b16 %v1274
  %v1794 = vunpack.c.l.b16 %v1275
  %v1795 = vunpack.c.l.b16 %v1276
  %v1796 = vunpack.c.l.b16 %v1277
  %v1797 = vunpack.c.l.b16 %v1278
  %v1798 = vunpack.c.l.b16 %v1279
  %v1799 = vunpack.c.l.b16 %v1280
  %v1800 = vunpack.c.l.b16 %v1281
  %v1801 = vunpack.c.l.b16 %v1282
  %v1802 = vunpack.c.l.b16 %v1283
  %v1803 = vunpack.c.l.b16 %v1284
  %v1804 = vunpack.c.l.b16 %v1285
  %v1805 = vunpack.c.l.b16 %v1286
  %v1806 = vunpack.c.l.b16 %v1287
  %v1807 = vunpack.c.l.b16 %v1288
  %v1808 = vunpack.c.l.b16 %v1289
  %v1809 = vunpack.c.l.b16 %v1290
  %v1810 = vunpack.c.l.b16 %v1291
  %v1811 = vunpack.c.l.b16 %v1292
  %v1812 = vunpack.c.l.b16 %v1293
  %v1813 = vunpack.c.l.b16 %v1294
  %v1814 = vunpack.c.l.b16 %v1295
  %v1815 = vunpack.c.l.b16 %v1296
  %v1816 = vunpack.c.l.b16 %v1297
  %v1817 = vunpack.c.l.b16 %v1298
  %v1818 = vunpack.c.l.b16 %v1299
  %v1819 = vunpack.c.l.b16 %v1300
  %v1820 = vunpack.c.l.b16 %v1301
  %v1821 = vunpack.c.l.b16 %v1302
  %v1822 = vunpack.c.l.b16 %v1303
  %v1823 = vunpack.c.l.b16 %v1304
  %v1824 = vunpack.c.l.b16 %v1305
  %v1825 = vunpack.c.l.b16 %v1306
  %v1826 = vunpack.c.l.b16 %v1307
  %v1827 = vunpack.c.l.b16 %v1308
  %v1828 = vunpack.c.l.b16 %v1309
  %v1829 = vunpack.c.l.b16 %v1310
  %v1830 = vunpack.c.l.b16 %v1311
  %v1831 = vunpack.c.l.b16 %v1312
  %v1832 = vunpack.c.l.b16 %v1313
  %v1833 = vunpack.c.l.b16 %v1314
  %v1834 = vunpack.c.l.b16 %v1315
  %v1835 = vunpack.c.l.b16 %v1316
  %v1836 = vunpack.c.l.b16 %v1317
  %v1837 = vunpack.c.l.b16 %v1318
  %v1838 = vunpack.c.l.b16 %v1319
  %v1839 = vunpack.c.l.b16 %v1320
  %v1840 = vunpack.c.l.b16 %v1321
  %v1841 = vunpack.c.l.b16 %v1322
  %v1842 = vunpack.c.l.b16 %v1323
  %v1843 = vunpack.c.l.b16 %v1324
  %v1844 = vunpack.c.l.b16 %v1325
  %v1845 = vunpack.c.l.b16 %v1326
  %v1846 = vunpack.c.l.b16 %v1327
  %v1847 = vunpack.c.l.b16 %v1328
  %v1848 = vpack.c.b16 %v1593, %v1592
  %v1849 = vpack.c.b16 %v1595, %v1594
  %v1850 = vpack.c.b16 %v1597, %v1596
  %v1851 = vpack.c.b16 %v1599, %v1598
  %v1852 = vpack.c.b16 %v1601, %v1600
  %v1853 = vpack.c.b16 %v1603, %v1602
  %v1854 = vpack.c.b16 %v1605, %v1604
  %v1855 = vpack.c.b16 %v1607, %v1606
  %v1856 = vpack.c.b16 %v1609, %v1608
  %v1857 = vpack.c.b16 %v1611, %v1610
  %v1858 = vpack.c.b16 %v1613, %v1612
  %v1859 = vpack.c.b16 %v1615, %v1614
  %v1860 = vpack.c.b16 %v1617, %v1616
  %v1861 = vpack.c.b16 %v1619, %v1618
  %v1862 = vpack.c.b16 %v1621, %v1620
  %v1863 = vpack.c.b16 %v1623, %v1622
  %v1864 = vpack.c.b16 %v1625, %v1624
  %v1865 = vpack.c.b16 %v1627, %v1626
  %v1866 = vpack.c.b16 %v1629, %v1628
  %v1867 = vpack.c.b16 %v1631, %v1630
  %v1868 = vpack.c.b16 %v1633, %v1632
  %v1869 = vpack.c.b16 %v1635, %v1634
  %v1870 = vpack.c.b16 %v1637, %v1636
  %v1871 = vpack.c.b16 %v1639, %v1638
  %v1872 = vpack.c.b16 %v1641, %v1640
  %v1873 = vpack.c.b16 %v1643, %v1642
  %v1874 = vpack.c.b16 %v1645, %v1644
  %v1875 = vpack.c.b16 %v1647, %v1646
  %v1876 = vpack.c.b16 %v1649, %v1648
  %v1877 = vpack.c.b16 %v1651, %v1650
  %v1878 = vpack.c.b16 %v1653, %v1652
  %v1879 = vpack.c.b16 %v1655, %v1654
  %v1880 = vpack.c.b16 %v1657, %v1656
  %v1881 = vpack.c.b16 %v1659, %v1658
  %v1882 = vpack.c.b16 %v1661, %v1660
  %v1883 = vpack.c.b16 %v1663, %v1662
  %v1884 = vpack.c.b16 %v1665, %v1664
  %v1885 = vpack.c.b16 %v1667, %v1666
  %v1886 = vpack.c.b16 %v1669, %v1668
  %v1887 = vpack.c.b16 %v1671, %v1670
  %v1888 = vpack.c.b16 %v1673, %v1672
  %v1889 = vpack.c.b16 %v1675, %v1674
  %v1890 = vpack.c.b16 %v1677, %v1676
  %v1891 = vpack.c.b16 %v1679, %v1678
  %v1892 = vpack.c.b16 %v1681, %v1680
  %v1893 = vpack.c.b16 %v1683, %v1682
  %v1894 = vpack.c.b16 %v1685, %v1684
  %v1895 = vpack.c.b16 %v1687, %v1686
  %v1896 = vpack.c.b16 %v1689, %v1688
  %v1897 = vpack.c.b16 %v1691, %v1690
  %v1898 = vpack.c.b16 %v1693, %v1692
  %v1899 = vpack.c.b16 %v1695, %v1694
  %v1900 = vpack.c.b16 %v1697, %v1696
  %v1901 = vpack.c.b16 %v1699, %v1698
  %v1902 = vpack.c.b16 %v1701, %v1700
  %v1903 = vpack.c.b16 %v1703, %v1702
  %v1904 = vpack.c.b16 %v1705, %v1704
  %v1905 = vpack.c.b16 %v1707, %v1706
  %v1906 = vpack.c.b16 %v1709, %v1708
  %v1907 = vpack.c.b16 %v1711, %v1710
  %v1908 = vpack.c.b16 %v1713, %v1712
  %v1909 = vpack.c.b16 %v1715, %v1714
  %v1910 = vpack.c.b16 %v1717, %v1716
  %v1911 = vpack.c.b16 %v1719, %v1718
  %v1912 = vpack.c.b16 %v1721, %v1720
  %v1913 = vpack.c.b16 %v1723, %v1722
  %v1914 = vpack.c.b16 %v1725, %v1724
  %v1915 = vpack.c.b16 %v1727, %v1726
  %v1916 = vpack.c.b16 %v1729, %v1728
  %v1917 = vpack.c.b16 %v1731, %v1730
  %v1918 = vpack.c.b16 %v1733, %v1732
  %v1919 = vpack.c.b16 %v1735, %v1734
  %v1920 = vpack.c.b16 %v1737, %v1736
  %v1921 = vpack.c.b16 %v1739, %v1738
  %v1922 = vpack.c.b16 %v1741, %v1740
  %v1923 = vpack.c.b16 %v1743, %v1742
  %v1924 = vpack.c.b16 %v1745, %v1744
  %v1925 = vpack.c.b16 %v1747, %v1746
  %v1926 = vpack.c.b16 %v1749, %v1748
  %v1927 = vpack.c.b16 %v1751, %v1750
  %v1928 = vpack.c.b16 %v1753, %v1752
  %v1929 = vpack.c.b16 %v1755, %v1754
  %v1930 = vpack.c.b16 %v1757, %v1756
  %v1931 = vpack.c.b16 %v1759, %v1758
  %v1932 = vpack.c.b16 %v1761, %v1760
  %v1933 = vpack.c.b16 %v1763, %v1762
  %v1934 = vpack.c.b16 %v1765, %v1764
  %v1935 = vpack.c.b16 %v1767, %v1766
  %v1936 = vpack.c.b16 %v1769, %v1768
  %v1937 = vpack.c.b16 %v1771, %v1770
  %v1938 = vpack.c.b16 %v1773, %v1772
  %v1939 = vpack.c.b16 %v1775, %v1774
  %v1940 = vpack.c.b16 %v1777, %v1776
  %v1941 = vpack.c.b16 %v1779, %v1778
  %v1942 = vpack.c.b16 %v1781, %v1780
  %v1943 = vpack.c.b16 %v1783, %v1782
  %v1944 = vpack.c.b16 %v1785, %v1784
  %v1945 = vpack.c.b16 %v1787, %v1786
  %v1946 = vpack.c.b16 %v1789, %v1788
  %v1947 = vpack.c.b16 %v1791, %v1790
  %v1948 = vpack.c.b16 %v1793, %v1792
  %v1949 = vpack.c.b16 %v1795, %v1794
  %v1950 = vpack.c.b16 %v1797, %v1796
  %v1951 = vpack.c.b16 %v1799, %v1798
  %v1952 = vpack.c.b16 %v1801, %v1800
  %v1953 = vpack.c.b16 %v1803, %v1802
  %v1954 = vpack.c.b16 %v1805, %v1804
  %v1955 = vpack.c.b16 %v1807, %v1806
  %v1956 = vpack.c.b16 %v1809, %v1808
  %v1957 = vpack.c.b16 %v1811, %v1810
  %v1958 = vpack.c.b16 %v1813, %v1812
  %v1959 = vpack.c.b16 %v1815, %v1814
  %v1960 = vpack.c.b16 %v1817, %v1816
  %v1961 = vpack.c.b16 %v1819, %v1818
  %v1962 = vpack.c.b16 %v1821, %v1820
  %v1963 = vpack.c.b16 %v1823, %v1822
  %v1964 = vpack.c.b16 %v1825, %v1824
  %v1965 = vpack.c.b16 %v1827, %v1826
  %v1966 = vpack.c.b16 %v1829, %v1828
  %v1967 = vpack.c.b16 %v1831, %v1830
  %v1968 = vpack.c.b16 %v1833, %v1832
  %v1969 = vpack.c.b16 %v1835, %v1834
  %v1970 = vpack.c.b16 %v1837, %v1836
  %v1971 = vpack.c.b16 %v1839, %v1838
  %v1972 = vpack.c.b16 %v1841, %v1840
  %v1973 = vpack.c.b16 %v1843, %v1842
  %v1974 = vpack.c.b16 %v1845, %v1844
  %v1975 = vpack.c.b16 %v1847, %v1846
  %2104 = vmatprep.subr.bf16.mxu0 0
  %2105 = vmatpush1.bf16.msra.mxu0 %v1848
  %2106 = vmatprep.subr.bf16.mxu0 0
  %2107 = vmatpush1.bf16.msra.mxu0 %v1849
  %2108 = vmatprep.subr.bf16.mxu0 0
  %2109 = vmatpush1.bf16.msra.mxu0 %v1850
  %2110 = vmatprep.subr.bf16.mxu0 0
  %2111 = vmatpush1.bf16.msra.mxu0 %v1851
  %2112 = vmatprep.subr.bf16.mxu0 0
  %2113 = vmatpush1.bf16.msra.mxu0 %v1852
  %2114 = vmatprep.subr.bf16.mxu0 0
  %2115 = vmatpush1.bf16.msra.mxu0 %v1853
  %2116 = vmatprep.subr.bf16.mxu0 0
  %2117 = vmatpush1.bf16.msra.mxu0 %v1854
  %2118 = vmatprep.subr.bf16.mxu0 0
  %2119 = vmatpush1.bf16.msra.mxu0 %v1855
  %2120 = vmatprep.subr.bf16.mxu0 0
  %2121 = vmatpush1.bf16.msra.mxu0 %v1856
  %2122 = vmatprep.subr.bf16.mxu0 0
  %2123 = vmatpush1.bf16.msra.mxu0 %v1857
  %2124 = vmatprep.subr.bf16.mxu0 0
  %2125 = vmatpush1.bf16.msra.mxu0 %v1858
  %2126 = vmatprep.subr.bf16.mxu0 0
  %2127 = vmatpush1.bf16.msra.mxu0 %v1859
  %2128 = vmatprep.subr.bf16.mxu0 0
  %2129 = vmatpush1.bf16.msra.mxu0 %v1860
  %2130 = vmatprep.subr.bf16.mxu0 0
  %2131 = vmatpush1.bf16.msra.mxu0 %v1861
  %2132 = vmatprep.subr.bf16.mxu0 0
  %2133 = vmatpush1.bf16.msra.mxu0 %v1862
  %2134 = vmatprep.subr.bf16.mxu0 0
  %2135 = vmatpush1.bf16.msra.mxu0 %v1863
  %2136 = vmatprep.mubr.bf16.mxu0 %v1058
  %2137 = vmatmul.mubr.bf16.gmra.mrb[0].mxu0 %v1057
  %v2138 = vpop.f32.mrb[0].mxu0
  %v2139 = vadd.f32 %v1334, %v2138
  %v2140 = vpop.f32.mrb[0].mxu0
  %v2141 = vpop.f32.mrb[0].mxu0
  %v2142 = vadd.f32 %v1334, %v2141
  %v2143 = vpop.f32.mrb[0].mxu0
  %2144 = vdwg.mxu0
  %2145 = vmatprep.subr.bf16.mxu0 0
  %2146 = vmatpush1.bf16.msra.mxu0 %v1864
  %2147 = vmatprep.subr.bf16.mxu0 0
  %2148 = vmatpush1.bf16.msra.mxu0 %v1865
  %2149 = vmatprep.subr.bf16.mxu0 0
  %2150 = vmatpush1.bf16.msra.mxu0 %v1866
  %2151 = vmatprep.subr.bf16.mxu0 0
  %2152 = vmatpush1.bf16.msra.mxu0 %v1867
  %2153 = vmatprep.subr.bf16.mxu0 0
  %2154 = vmatpush1.bf16.msra.mxu0 %v1868
  %2155 = vmatprep.subr.bf16.mxu0 0
  %2156 = vmatpush1.bf16.msra.mxu0 %v1869
  %2157 = vmatprep.subr.bf16.mxu0 0
  %2158 = vmatpush1.bf16.msra.mxu0 %v1870
  %2159 = vmatprep.subr.bf16.mxu0 0
  %2160 = vmatpush1.bf16.msra.mxu0 %v1871
  %2161 = vmatprep.subr.bf16.mxu0 0
  %2162 = vmatpush1.bf16.msra.mxu0 %v1872
  %2163 = vmatprep.subr.bf16.mxu0 0
  %2164 = vmatpush1.bf16.msra.mxu0 %v1873
  %2165 = vmatprep.subr.bf16.mxu0 0
  %2166 = vmatpush1.bf16.msra.mxu0 %v1874
  %2167 = vmatprep.subr.bf16.mxu0 0
  %2168 = vmatpush1.bf16.msra.mxu0 %v1875
  %2169 = vmatprep.subr.bf16.mxu0 0
  %2170 = vmatpush1.bf16.msra.mxu0 %v1876
  %2171 = vmatprep.subr.bf16.mxu0 0
  %2172 = vmatpush1.bf16.msra.mxu0 %v1877
  %2173 = vmatprep.subr.bf16.mxu0 0
  %2174 = vmatpush1.bf16.msra.mxu0 %v1878
  %2175 = vmatprep.subr.bf16.mxu0 0
  %2176 = vmatpush1.bf16.msra.mxu0 %v1879
  %2177 = vmatprep.mubr.bf16.mxu0 %v1060
  %2178 = vmatmul.mubr.bf16.gmra.mrb[0].mxu0 %v1059
  %v2179 = vpop.f32.mrb[0].mxu0
  %v2180 = vadd.f32 %v2139, %v2179
  %v2181 = vpop.f32.mrb[0].mxu0
  %v2182 = vpop.f32.mrb[0].mxu0
  %v2183 = vadd.f32 %v2142, %v2182
  %v2184 = vpop.f32.mrb[0].mxu0
  %2185 = vdwg.mxu0
  %2186 = vmatprep.subr.bf16.mxu0 0
  %2187 = vmatpush1.bf16.msra.mxu0 %v1880
  %2188 = vmatprep.subr.bf16.mxu0 0
  %2189 = vmatpush1.bf16.msra.mxu0 %v1881
  %2190 = vmatprep.subr.bf16.mxu0 0
  %2191 = vmatpush1.bf16.msra.mxu0 %v1882
  %2192 = vmatprep.subr.bf16.mxu0 0
  %2193 = vmatpush1.bf16.msra.mxu0 %v1883
  %2194 = vmatprep.subr.bf16.mxu0 0
  %2195 = vmatpush1.bf16.msra.mxu0 %v1884
  %2196 = vmatprep.subr.bf16.mxu0 0
  %2197 = vmatpush1.bf16.msra.mxu0 %v1885
  %2198 = vmatprep.subr.bf16.mxu0 0
  %2199 = vmatpush1.bf16.msra.mxu0 %v1886
  %2200 = vmatprep.subr.bf16.mxu0 0
  %2201 = vmatpush1.bf16.msra.mxu0 %v1887
  %2202 = vmatprep.subr.bf16.mxu0 0
  %2203 = vmatpush1.bf16.msra.mxu0 %v1888
  %2204 = vmatprep.subr.bf16.mxu0 0
  %2205 = vmatpush1.bf16.msra.mxu0 %v1889
  %2206 = vmatprep.subr.bf16.mxu0 0
  %2207 = vmatpush1.bf16.msra.mxu0 %v1890
  %2208 = vmatprep.subr.bf16.mxu0 0
  %2209 = vmatpush1.bf16.msra.mxu0 %v1891
  %2210 = vmatprep.subr.bf16.mxu0 0
  %2211 = vmatpush1.bf16.msra.mxu0 %v1892
  %2212 = vmatprep.subr.bf16.mxu0 0
  %2213 = vmatpush1.bf16.msra.mxu0 %v1893
  %2214 = vmatprep.subr.bf16.mxu0 0
  %2215 = vmatpush1.bf16.msra.mxu0 %v1894
  %2216 = vmatprep.subr.bf16.mxu0 0
  %2217 = vmatpush1.bf16.msra.mxu0 %v1895
  %2218 = vmatprep.mubr.bf16.mxu0 %v1062
  %2219 = vmatmul.mubr.bf16.gmra.mrb[0].mxu0 %v1061
  %v2220 = vpop.f32.mrb[0].mxu0
  %v2221 = vadd.f32 %v2180, %v2220
  %v2222 = vpop.f32.mrb[0].mxu0
  %v2223 = vpop.f32.mrb[0].mxu0
  %v2224 = vadd.f32 %v2183, %v2223
  %v2225 = vpop.f32.mrb[0].mxu0
  %2226 = vdwg.mxu0
  %2227 = vmatprep.subr.bf16.mxu0 0
  %2228 = vmatpush1.bf16.msra.mxu0 %v1896
  %2229 = vmatprep.subr.bf16.mxu0 0
  %2230 = vmatpush1.bf16.msra.mxu0 %v1897
  %2231 = vmatprep.subr.bf16.mxu0 0
  %2232 = vmatpush1.bf16.msra.mxu0 %v1898
  %2233 = vmatprep.subr.bf16.mxu0 0
  %2234 = vmatpush1.bf16.msra.mxu0 %v1899
  %2235 = vmatprep.subr.bf16.mxu0 0
  %2236 = vmatpush1.bf16.msra.mxu0 %v1900
  %2237 = vmatprep.subr.bf16.mxu0 0
  %2238 = vmatpush1.bf16.msra.mxu0 %v1901
  %2239 = vmatprep.subr.bf16.mxu0 0
  %2240 = vmatpush1.bf16.msra.mxu0 %v1902
  %2241 = vmatprep.subr.bf16.mxu0 0
  %2242 = vmatpush1.bf16.msra.mxu0 %v1903
  %2243 = vmatprep.subr.bf16.mxu0 0
  %2244 = vmatpush1.bf16.msra.mxu0 %v1904
  %2245 = vmatprep.subr.bf16.mxu0 0
  %2246 = vmatpush1.bf16.msra.mxu0 %v1905
  %2247 = vmatprep.subr.bf16.mxu0 0
  %2248 = vmatpush1.bf16.msra.mxu0 %v1906
  %2249 = vmatprep.subr.bf16.mxu0 0
  %2250 = vmatpush1.bf16.msra.mxu0 %v1907
  %2251 = vmatprep.subr.bf16.mxu0 0
  %2252 = vmatpush1.bf16.msra.mxu0 %v1908
  %2253 = vmatprep.subr.bf16.mxu0 0
  %2254 = vmatpush1.bf16.msra.mxu0 %v1909
  %2255 = vmatprep.subr.bf16.mxu0 0
  %2256 = vmatpush1.bf16.msra.mxu0 %v1910
  %2257 = vmatprep.subr.bf16.mxu0 0
  %2258 = vmatpush1.bf16.msra.mxu0 %v1911
  %2259 = vmatprep.mubr.bf16.mxu0 %v1064
  %2260 = vmatmul.mubr.bf16.gmra.mrb[0].mxu0 %v1063
  %v2261 = vpop.f32.mrb[0].mxu0
  %v2262 = vadd.f32 %v2221, %v2261
  %v2263 = vpop.f32.mrb[0].mxu0
  %v2264 = vpop.f32.mrb[0].mxu0
  %v2265 = vadd.f32 %v2224, %v2264
  %v2266 = vpop.f32.mrb[0].mxu0
  %2267 = vdwg.mxu0
  %2268 = vmatprep.subr.bf16.mxu0 0
  %2269 = vmatpush1.bf16.msra.mxu0 %v1912
  %2270 = vmatprep.subr.bf16.mxu0 0
  %2271 = vmatpush1.bf16.msra.mxu0 %v1913
  %2272 = vmatprep.subr.bf16.mxu0 0
  %2273 = vmatpush1.bf16.msra.mxu0 %v1914
  %2274 = vmatprep.subr.bf16.mxu0 0
  %2275 = vmatpush1.bf16.msra.mxu0 %v1915
  %2276 = vmatprep.subr.bf16.mxu0 0
  %2277 = vmatpush1.bf16.msra.mxu0 %v1916
  %2278 = vmatprep.subr.bf16.mxu0 0
  %2279 = vmatpush1.bf16.msra.mxu0 %v1917
  %2280 = vmatprep.subr.bf16.mxu0 0
  %2281 = vmatpush1.bf16.msra.mxu0 %v1918
  %2282 = vmatprep.subr.bf16.mxu0 0
  %2283 = vmatpush1.bf16.msra.mxu0 %v1919
  %2284 = vmatprep.subr.bf16.mxu0 0
  %2285 = vmatpush1.bf16.msra.mxu0 %v1920
  %2286 = vmatprep.subr.bf16.mxu0 0
  %2287 = vmatpush1.bf16.msra.mxu0 %v1921
  %2288 = vmatprep.subr.bf16.mxu0 0
  %2289 = vmatpush1.bf16.msra.mxu0 %v1922
  %2290 = vmatprep.subr.bf16.mxu0 0
  %2291 = vmatpush1.bf16.msra.mxu0 %v1923
  %2292 = vmatprep.subr.bf16.mxu0 0
  %2293 = vmatpush1.bf16.msra.mxu0 %v1924
  %2294 = vmatprep.subr.bf16.mxu0 0
  %2295 = vmatpush1.bf16.msra.mxu0 %v1925
  %2296 = vmatprep.subr.bf16.mxu0 0
  %2297 = vmatpush1.bf16.msra.mxu0 %v1926
  %2298 = vmatprep.subr.bf16.mxu0 0
  %2299 = vmatpush1.bf16.msra.mxu0 %v1927
  %2300 = vmatprep.mubr.bf16.mxu0 %v1066
  %2301 = vmatmul.mubr.bf16.gmra.mrb[0].mxu0 %v1065
  %v2302 = vpop.f32.mrb[0].mxu0
  %v2303 = vadd.f32 %v2262, %v2302
  %v2304 = vpop.f32.mrb[0].mxu0
  %v2305 = vpop.f32.mrb[0].mxu0
  %v2306 = vadd.f32 %v2265, %v2305
  %v2307 = vpop.f32.mrb[0].mxu0
  %2308 = vdwg.mxu0
  %2309 = vmatprep.subr.bf16.mxu0 0
  %2310 = vmatpush1.bf16.msra.mxu0 %v1928
  %2311 = vmatprep.subr.bf16.mxu0 0
  %2312 = vmatpush1.bf16.msra.mxu0 %v1929
  %2313 = vmatprep.subr.bf16.mxu0 0
  %2314 = vmatpush1.bf16.msra.mxu0 %v1930
  %2315 = vmatprep.subr.bf16.mxu0 0
  %2316 = vmatpush1.bf16.msra.mxu0 %v1931
  %2317 = vmatprep.subr.bf16.mxu0 0
  %2318 = vmatpush1.bf16.msra.mxu0 %v1932
  %2319 = vmatprep.subr.bf16.mxu0 0
  %2320 = vmatpush1.bf16.msra.mxu0 %v1933
  %2321 = vmatprep.subr.bf16.mxu0 0
  %2322 = vmatpush1.bf16.msra.mxu0 %v1934
  %2323 = vmatprep.subr.bf16.mxu0 0
  %2324 = vmatpush1.bf16.msra.mxu0 %v1935
  %2325 = vmatprep.subr.bf16.mxu0 0
  %2326 = vmatpush1.bf16.msra.mxu0 %v1936
  %2327 = vmatprep.subr.bf16.mxu0 0
  %2328 = vmatpush1.bf16.msra.mxu0 %v1937
  %2329 = vmatprep.subr.bf16.mxu0 0
  %2330 = vmatpush1.bf16.msra.mxu0 %v1938
  %2331 = vmatprep.subr.bf16.mxu0 0
  %2332 = vmatpush1.bf16.msra.mxu0 %v1939
  %2333 = vmatprep.subr.bf16.mxu0 0
  %2334 = vmatpush1.bf16.msra.mxu0 %v1940
  %2335 = vmatprep.subr.bf16.mxu0 0
  %2336 = vmatpush1.bf16.msra.mxu0 %v1941
  %2337 = vmatprep.subr.bf16.mxu0 0
  %2338 = vmatpush1.bf16.msra.mxu0 %v1942
  %2339 = vmatprep.subr.bf16.mxu0 0
  %2340 = vmatpush1.bf16.msra.mxu0 %v1943
  %2341 = vmatprep.mubr.bf16.mxu0 %v1068
  %2342 = vmatmul.mubr.bf16.gmra.mrb[0].mxu0 %v1067
  %v2343 = vpop.f32.mrb[0].mxu0
  %v2344 = vadd.f32 %v2303, %v2343
  %v2345 = vpop.f32.mrb[0].mxu0
  %v2346 = vpop.f32.mrb[0].mxu0
  %v2347 = vadd.f32 %v2306, %v2346
  %v2348 = vpop.f32.mrb[0].mxu0
  %2349 = vdwg.mxu0
  %2350 = vmatprep.subr.bf16.mxu0 0
  %2351 = vmatpush1.bf16.msra.mxu0 %v1944
  %2352 = vmatprep.subr.bf16.mxu0 0
  %2353 = vmatpush1.bf16.msra.mxu0 %v1945
  %2354 = vmatprep.subr.bf16.mxu0 0
  %2355 = vmatpush1.bf16.msra.mxu0 %v1946
  %2356 = vmatprep.subr.bf16.mxu0 0
  %2357 = vmatpush1.bf16.msra.mxu0 %v1947
  %2358 = vmatprep.subr.bf16.mxu0 0
  %2359 = vmatpush1.bf16.msra.mxu0 %v1948
  %2360 = vmatprep.subr.bf16.mxu0 0
  %2361 = vmatpush1.bf16.msra.mxu0 %v1949
  %2362 = vmatprep.subr.bf16.mxu0 0
  %2363 = vmatpush1.bf16.msra.mxu0 %v1950
  %2364 = vmatprep.subr.bf16.mxu0 0
  %2365 = vmatpush1.bf16.msra.mxu0 %v1951
  %2366 = vmatprep.subr.bf16.mxu0 0
  %2367 = vmatpush1.bf16.msra.mxu0 %v1952
  %2368 = vmatprep.subr.bf16.mxu0 0
  %2369 = vmatpush1.bf16.msra.mxu0 %v1953
  %2370 = vmatprep.subr.bf16.mxu0 0
  %2371 = vmatpush1.bf16.msra.mxu0 %v1954
  %2372 = vmatprep.subr.bf16.mxu0 0
  %2373 = vmatpush1.bf16.msra.mxu0 %v1955
  %2374 = vmatprep.subr.bf16.mxu0 0
  %2375 = vmatpush1.bf16.msra.mxu0 %v1956
  %2376 = vmatprep.subr.bf16.mxu0 0
  %2377 = vmatpush1.bf16.msra.mxu0 %v1957
  %2378 = vmatprep.subr.bf16.mxu0 0
  %2379 = vmatpush1.bf16.msra.mxu0 %v1958
  %2380 = vmatprep.subr.bf16.mxu0 0
  %2381 = vmatpush1.bf16.msra.mxu0 %v1959
  %2382 = vmatprep.mubr.bf16.mxu0 %v1070
  %2383 = vmatmul.mubr.bf16.gmra.mrb[0].mxu0 %v1069
  %v2384 = vpop.f32.mrb[0].mxu0
  %v2385 = vadd.f32 %v2344, %v2384
  %v2386 = vpop.f32.mrb[0].mxu0
  %v2387 = vpop.f32.mrb[0].mxu0
  %v2388 = vadd.f32 %v2347, %v2387
  %v2389 = vpop.f32.mrb[0].mxu0
  %2390 = vdwg.mxu0
  %2391 = vmatprep.subr.bf16.mxu0 0
  %2392 = vmatpush1.bf16.msra.mxu0 %v1960
  %2393 = vmatprep.subr.bf16.mxu0 0
  %2394 = vmatpush1.bf16.msra.mxu0 %v1961
  %2395 = vmatprep.subr.bf16.mxu0 0
  %2396 = vmatpush1.bf16.msra.mxu0 %v1962
  %2397 = vmatprep.subr.bf16.mxu0 0
  %2398 = vmatpush1.bf16.msra.mxu0 %v1963
  %2399 = vmatprep.subr.bf16.mxu0 0
  %2400 = vmatpush1.bf16.msra.mxu0 %v1964
  %2401 = vmatprep.subr.bf16.mxu0 0
  %2402 = vmatpush1.bf16.msra.mxu0 %v1965
  %2403 = vmatprep.subr.bf16.mxu0 0
  %2404 = vmatpush1.bf16.msra.mxu0 %v1966
  %2405 = vmatprep.subr.bf16.mxu0 0
  %2406 = vmatpush1.bf16.msra.mxu0 %v1967
  %2407 = vmatprep.subr.bf16.mxu0 0
  %2408 = vmatpush1.bf16.msra.mxu0 %v1968
  %2409 = vmatprep.subr.bf16.mxu0 0
  %2410 = vmatpush1.bf16.msra.mxu0 %v1969
  %2411 = vmatprep.subr.bf16.mxu0 0
  %2412 = vmatpush1.bf16.msra.mxu0 %v1970
  %2413 = vmatprep.subr.bf16.mxu0 0
  %2414 = vmatpush1.bf16.msra.mxu0 %v1971
  %2415 = vmatprep.subr.bf16.mxu0 0
  %2416 = vmatpush1.bf16.msra.mxu0 %v1972
  %2417 = vmatprep.subr.bf16.mxu0 0
  %2418 = vmatpush1.bf16.msra.mxu0 %v1973
  %2419 = vmatprep.subr.bf16.mxu0 0
  %2420 = vmatpush1.bf16.msra.mxu0 %v1974
  %2421 = vmatprep.subr.bf16.mxu0 0
  %2422 = vmatpush1.bf16.msra.mxu0 %v1975
  %2423 = vmatprep.mubr.bf16.mxu0 %v1072
  %2424 = vmatmul.mubr.bf16.gmra.mrb[0].mxu0 %v1071
  %v2425 = vpop.f32.mrb[0].mxu0
  %v2426 = vadd.f32 %v2385, %v2425
  %v2427 = vpop.f32.mrb[0].mxu0
  %v2428 = vpop.f32.mrb[0].mxu0
  %v2429 = vadd.f32 %v2388, %v2428
  %v2430 = vpop.f32.mrb[0].mxu0
  %2431 = vdwg.mxu0
  %v2432 = vadd.f32 %v399, %v2426
  %v2433 = vadd.f32 %v400, %v2429
  %v2434 = vld [vmem:[%s14] sm:$0x1]
  %v2435 = vld [vmem:[%s15] sm:$0x1]
  %v2436 = vsel %vm192, %v2432, 0.0
  %2437 = vadd.xlane.f32.xlu0 %v2436
  %v2438 = vpop.xlane.xlu0 %2437
  %v2439 = vsel %vm192, %v2433, 0.0
  %2440 = vadd.xlane.f32.xlu0 %v2439
  %v2441 = vpop.xlane.xlu0 %2440
  %v2442 = vmul.f32 %v2438, %v364
  %v2443 = vmul.f32 %v2441, %v364
  %v2444 = vsub.f32 %v2432, %v2442
  %v2445 = vsub.f32 %v2433, %v2443
  %v2446 = vmul.f32 %v2444, %v2444
  %v2447 = vmul.f32 %v2445, %v2445
  %v2448 = vsel %vm192, %v2446, 0.0
  %2449 = vadd.xlane.f32.xlu0 %v2448
  %v2450 = vpop.xlane.xlu0 %2449
  %v2451 = vsel %vm192, %v2447, 0.0
  %2452 = vadd.xlane.f32.xlu0 %v2451
  %v2453 = vpop.xlane.xlu0 %2452
  %v2454 = vmul.f32 %v2450, %v364
  %v2455 = vmul.f32 %v2453, %v364
  %v2456 = vadd.f32 %v2454, 1e-05
  %v2457 = vadd.f32 %v2455, 1e-05
  %v2458 = vrsqrt.pop %v2456
  %v2459 = vrsqrt.pop %v2457
  %v2460 = vmul.f32 %v2444, %v2458
  %v2461 = vmul.f32 %v2445, %v2459
  %v2463 = vlaneseq
  %v2464 = vshrl.u32 %v2463, 7
  %v2465 = vsub.s32 0, %v2464
  %v2466 = vrot.slane %v2434, %v2465
  %v2468 = vmul.f32 %v2460, %v2466
  %v2469 = vmul.f32 %v2461, %v2466
  %v2471 = vlaneseq
  %v2472 = vshrl.u32 %v2471, 7
  %v2473 = vsub.s32 0, %v2472
  %v2474 = vrot.slane %v2435, %v2473
  %v2476 = vadd.f32 %v2468, %v2474
  %v2477 = vadd.f32 %v2469, %v2474
  %v2478 = vpack.c.bf16 %v2477, %v2476
  %s2479 = scalar_lea.vmem %s6, 16
  %v2480 = vld [vmem:[%s2479] sm:$0xf]
  %v2481 = vld [vmem:[%s2479 + $0x4] sm:$0xf]
  %v2482 = vld [vmem:[%s2479 + $0x8] sm:$0xf]
  %v2483 = vld [vmem:[%s2479 + $0xc] sm:$0xf]
  %s2484 = scalar_lea.vmem %s7, 1
  %v2485 = vld [vmem:[%s2484] sm:$0x1]
  %v2487 = vlaneseq
  %v2488 = vshrl.u32 %v2487, 7
  %v2489 = vsub.s32 0, %v2488
  %v2490 = vrot.slane %v2485, %v2489
  %v2496 = vunpack.c.l.b16 %v2480
  %v2497 = vunpack.c.l.b16 %v2481
  %v2498 = vunpack.c.l.b16 %v2482
  %v2499 = vunpack.c.l.b16 %v2483
  %v2500 = vpack.c.b16 %v2497, %v2496
  %v2501 = vpack.c.b16 %v2499, %v2498
  %v2505 = vsel %vm192, %v2478, 0
  %2507 = vmatprep.subr.bf16.mxu0 0
  %2508 = vmatpush1.bf16.msra.mxu0 %v2500
  %2509 = vmatprep.subr.bf16.mxu0 0
  %2510 = vmatpush1.bf16.msra.mxu0 %v2501
  %2511 = vmatprep.subr.bf16.mxu0 0
  %2512 = vmatpush1.bf16.msra.mxu0 0
  %2513 = vmatprep.subr.bf16.mxu0 0
  %2514 = vmatpush1.bf16.msra.mxu0 0
  %2515 = vmatprep.subr.bf16.mxu0 0
  %2516 = vmatpush1.bf16.msra.mxu0 0
  %2517 = vmatprep.subr.bf16.mxu0 0
  %2518 = vmatpush1.bf16.msra.mxu0 0
  %2519 = vmatprep.subr.bf16.mxu0 0
  %2520 = vmatpush1.bf16.msra.mxu0 0
  %2521 = vmatprep.subr.bf16.mxu0 0
  %2522 = vmatpush1.bf16.msra.mxu0 0
  %2523 = vmatprep.subr.bf16.mxu0 0
  %2524 = vmatpush1.bf16.msra.mxu0 0
  %2525 = vmatprep.subr.bf16.mxu0 0
  %2526 = vmatpush1.bf16.msra.mxu0 0
  %2527 = vmatprep.subr.bf16.mxu0 0
  %2528 = vmatpush1.bf16.msra.mxu0 0
  %2529 = vmatprep.subr.bf16.mxu0 0
  %2530 = vmatpush1.bf16.msra.mxu0 0
  %2531 = vmatprep.subr.bf16.mxu0 0
  %2532 = vmatpush1.bf16.msra.mxu0 0
  %2533 = vmatprep.subr.bf16.mxu0 0
  %2534 = vmatpush1.bf16.msra.mxu0 0
  %2535 = vmatprep.subr.bf16.mxu0 0
  %2536 = vmatpush1.bf16.msra.mxu0 0
  %2537 = vmatprep.subr.bf16.mxu0 0
  %2538 = vmatpush1.bf16.msra.mxu0 0
  %2539 = vmatprep.mubr.bf16.mxu0 0
  %2540 = vmatmul.mubr.bf16.gmra.mrb[0].mxu0 %v2505
  %v2541 = vpop.f32.mrb[0].mxu0
  %v2542 = vadd.f32 %v2490, %v2541
  %v2543 = vpop.f32.mrb[0].mxu0
  %v2544 = vpop.f32.mrb[0].mxu0
  %v2545 = vadd.f32 %v2490, %v2544
  %v2546 = vpop.f32.mrb[0].mxu0
  %2547 = vdwg.mxu0
  %v2548 = vadd.f32 %v2476, %v2542
  %v2549 = vadd.f32 %v2477, %v2545
  %s2550 = scalar_lea.vmem %s8, 1
  %v2551 = vld [vmem:[%s2550] sm:$0x1]
  %s2552 = scalar_lea.vmem %s9, 1
  %v2553 = vld [vmem:[%s2552] sm:$0x1]
  %v2554 = vsel %vm192, %v2548, 0.0
  %2555 = vadd.xlane.f32.xlu0 %v2554
  %v2556 = vpop.xlane.xlu0 %2555
  %v2557 = vsel %vm192, %v2549, 0.0
  %2558 = vadd.xlane.f32.xlu0 %v2557
  %v2559 = vpop.xlane.xlu0 %2558
  %v2560 = vmul.f32 %v2556, %v364
  %v2561 = vmul.f32 %v2559, %v364
  %v2562 = vsub.f32 %v2548, %v2560
  %v2563 = vsub.f32 %v2549, %v2561
  %v2564 = vmul.f32 %v2562, %v2562
  %v2565 = vmul.f32 %v2563, %v2563
  %v2566 = vsel %vm192, %v2564, 0.0
  %2567 = vadd.xlane.f32.xlu0 %v2566
  %v2568 = vpop.xlane.xlu0 %2567
  %v2569 = vsel %vm192, %v2565, 0.0
  %2570 = vadd.xlane.f32.xlu0 %v2569
  %v2571 = vpop.xlane.xlu0 %2570
  %v2572 = vmul.f32 %v2568, %v364
  %v2573 = vmul.f32 %v2571, %v364
  %v2574 = vadd.f32 %v2572, 1e-05
  %v2575 = vadd.f32 %v2573, 1e-05
  %v2576 = vrsqrt.pop %v2574
  %v2577 = vrsqrt.pop %v2575
  %v2578 = vmul.f32 %v2562, %v2576
  %v2579 = vmul.f32 %v2563, %v2577
  %v2581 = vlaneseq
  %v2582 = vshrl.u32 %v2581, 7
  %v2583 = vsub.s32 0, %v2582
  %v2584 = vrot.slane %v2551, %v2583
  %v2586 = vmul.f32 %v2578, %v2584
  %v2587 = vmul.f32 %v2579, %v2584
  %v2589 = vlaneseq
  %v2590 = vshrl.u32 %v2589, 7
  %v2591 = vsub.s32 0, %v2590
  %v2592 = vrot.slane %v2553, %v2591
  %v2594 = vadd.f32 %v2586, %v2592
  %v2595 = vadd.f32 %v2587, %v2592
  %v2596 = vpack.c.bf16 %v2595, %v2594
  %s2597 = scalar_lea.vmem %s10, 256
  %v2598 = vld [vmem:[%s2597] sm:$0xff]
  %v2599 = vld [vmem:[%s2597 + $0x8] sm:$0xff]
  %v2600 = vld [vmem:[%s2597 + $0x10] sm:$0xff]
  %v2601 = vld [vmem:[%s2597 + $0x18] sm:$0xff]
  %v2602 = vld [vmem:[%s2597 + $0x20] sm:$0xff]
  %v2603 = vld [vmem:[%s2597 + $0x28] sm:$0xff]
  %v2604 = vld [vmem:[%s2597 + $0x30] sm:$0xff]
  %v2605 = vld [vmem:[%s2597 + $0x38] sm:$0xff]
  %v2606 = vld [vmem:[%s2597 + $0x40] sm:$0xff]
  %v2607 = vld [vmem:[%s2597 + $0x48] sm:$0xff]
  %v2608 = vld [vmem:[%s2597 + $0x50] sm:$0xff]
  %v2609 = vld [vmem:[%s2597 + $0x58] sm:$0xff]
  %v2610 = vld [vmem:[%s2597 + $0x60] sm:$0xff]
  %v2611 = vld [vmem:[%s2597 + $0x68] sm:$0xff]
  %v2612 = vld [vmem:[%s2597 + $0x70] sm:$0xff]
  %v2613 = vld [vmem:[%s2597 + $0x78] sm:$0xff]
  %v2614 = vld [vmem:[%s2597 + $0x80] sm:$0xff]
  %v2615 = vld [vmem:[%s2597 + $0x88] sm:$0xff]
  %v2616 = vld [vmem:[%s2597 + $0x90] sm:$0xff]
  %v2617 = vld [vmem:[%s2597 + $0x98] sm:$0xff]
  %v2618 = vld [vmem:[%s2597 + $0xa0] sm:$0xff]
  %v2619 = vld [vmem:[%s2597 + $0xa8] sm:$0xff]
  %v2620 = vld [vmem:[%s2597 + $0xb0] sm:$0xff]
  %v2621 = vld [vmem:[%s2597 + $0xb8] sm:$0xff]
  %v2622 = vld [vmem:[%s2597 + $0xc0] sm:$0xff]
  %v2623 = vld [vmem:[%s2597 + $0xc8] sm:$0xff]
  %v2624 = vld [vmem:[%s2597 + $0xd0] sm:$0xff]
  %v2625 = vld [vmem:[%s2597 + $0xd8] sm:$0xff]
  %v2626 = vld [vmem:[%s2597 + $0xe0] sm:$0xff]
  %v2627 = vld [vmem:[%s2597 + $0xe8] sm:$0xff]
  %v2628 = vld [vmem:[%s2597 + $0xf0] sm:$0xff]
  %v2629 = vld [vmem:[%s2597 + $0xf8] sm:$0xff]
  %s2630 = scalar_lea.vmem %s11, 16
  %v2631 = vld [vmem:[%s2630] sm:$0xff]
  %v2632 = vld [vmem:[%s2630 + $0x8] sm:$0xff]
  %v2635 = vlaneseq
  %v2636 = vshrl.u32 %v2635, 7
  %v2637 = vsub.s32 0, %v2636
  %v2638 = vrot.slane %v2631, %v2637
  %v2639 = vlaneseq
  %v2640 = vshrl.u32 %v2639, 7
  %v2641 = vsub.s32 1, %v2640
  %v2642 = vrot.slane %v2631, %v2641
  %v2643 = vlaneseq
  %v2644 = vshrl.u32 %v2643, 7
  %v2645 = vsub.s32 2, %v2644
  %v2646 = vrot.slane %v2631, %v2645
  %v2647 = vlaneseq
  %v2648 = vshrl.u32 %v2647, 7
  %v2649 = vsub.s32 3, %v2648
  %v2650 = vrot.slane %v2631, %v2649
  %v2651 = vlaneseq
  %v2652 = vshrl.u32 %v2651, 7
  %v2653 = vsub.s32 4, %v2652
  %v2654 = vrot.slane %v2631, %v2653
  %v2655 = vlaneseq
  %v2656 = vshrl.u32 %v2655, 7
  %v2657 = vsub.s32 5, %v2656
  %v2658 = vrot.slane %v2631, %v2657
  %v2659 = vlaneseq
  %v2660 = vshrl.u32 %v2659, 7
  %v2661 = vsub.s32 6, %v2660
  %v2662 = vrot.slane %v2631, %v2661
  %v2663 = vlaneseq
  %v2664 = vshrl.u32 %v2663, 7
  %v2665 = vsub.s32 7, %v2664
  %v2666 = vrot.slane %v2631, %v2665
  %v2667 = vlaneseq
  %v2668 = vshrl.u32 %v2667, 7
  %v2669 = vsub.s32 0, %v2668
  %v2670 = vrot.slane %v2632, %v2669
  %v2671 = vlaneseq
  %v2672 = vshrl.u32 %v2671, 7
  %v2673 = vsub.s32 1, %v2672
  %v2674 = vrot.slane %v2632, %v2673
  %v2675 = vlaneseq
  %v2676 = vshrl.u32 %v2675, 7
  %v2677 = vsub.s32 2, %v2676
  %v2678 = vrot.slane %v2632, %v2677
  %v2679 = vlaneseq
  %v2680 = vshrl.u32 %v2679, 7
  %v2681 = vsub.s32 3, %v2680
  %v2682 = vrot.slane %v2632, %v2681
  %v2683 = vlaneseq
  %v2684 = vshrl.u32 %v2683, 7
  %v2685 = vsub.s32 4, %v2684
  %v2686 = vrot.slane %v2632, %v2685
  %v2687 = vlaneseq
  %v2688 = vshrl.u32 %v2687, 7
  %v2689 = vsub.s32 5, %v2688
  %v2690 = vrot.slane %v2632, %v2689
  %v2691 = vlaneseq
  %v2692 = vshrl.u32 %v2691, 7
  %v2693 = vsub.s32 6, %v2692
  %v2694 = vrot.slane %v2632, %v2693
  %v2695 = vlaneseq
  %v2696 = vshrl.u32 %v2695, 7
  %v2697 = vsub.s32 7, %v2696
  %v2698 = vrot.slane %v2632, %v2697
  %v2747 = vunpack.c.l.b16 %v2598
  %v2748 = vunpack.c.h.b16 %v2598
  %v2749 = vunpack.c.l.b16 %v2599
  %v2750 = vunpack.c.h.b16 %v2599
  %v2751 = vunpack.c.l.b16 %v2600
  %v2752 = vunpack.c.h.b16 %v2600
  %v2753 = vunpack.c.l.b16 %v2601
  %v2754 = vunpack.c.h.b16 %v2601
  %v2755 = vunpack.c.l.b16 %v2602
  %v2756 = vunpack.c.h.b16 %v2602
  %v2757 = vunpack.c.l.b16 %v2603
  %v2758 = vunpack.c.h.b16 %v2603
  %v2759 = vunpack.c.l.b16 %v2604
  %v2760 = vunpack.c.h.b16 %v2604
  %v2761 = vunpack.c.l.b16 %v2605
  %v2762 = vunpack.c.h.b16 %v2605
  %v2763 = vunpack.c.l.b16 %v2606
  %v2764 = vunpack.c.h.b16 %v2606
  %v2765 = vunpack.c.l.b16 %v2607
  %v2766 = vunpack.c.h.b16 %v2607
  %v2767 = vunpack.c.l.b16 %v2608
  %v2768 = vunpack.c.h.b16 %v2608
  %v2769 = vunpack.c.l.b16 %v2609
  %v2770 = vunpack.c.h.b16 %v2609
  %v2771 = vunpack.c.l.b16 %v2610
  %v2772 = vunpack.c.h.b16 %v2610
  %v2773 = vunpack.c.l.b16 %v2611
  %v2774 = vunpack.c.h.b16 %v2611
  %v2775 = vunpack.c.l.b16 %v2612
  %v2776 = vunpack.c.h.b16 %v2612
  %v2777 = vunpack.c.l.b16 %v2613
  %v2778 = vunpack.c.h.b16 %v2613
  %v2779 = vunpack.c.l.b16 %v2614
  %v2780 = vunpack.c.h.b16 %v2614
  %v2781 = vunpack.c.l.b16 %v2615
  %v2782 = vunpack.c.h.b16 %v2615
  %v2783 = vunpack.c.l.b16 %v2616
  %v2784 = vunpack.c.h.b16 %v2616
  %v2785 = vunpack.c.l.b16 %v2617
  %v2786 = vunpack.c.h.b16 %v2617
  %v2787 = vunpack.c.l.b16 %v2618
  %v2788 = vunpack.c.h.b16 %v2618
  %v2789 = vunpack.c.l.b16 %v2619
  %v2790 = vunpack.c.h.b16 %v2619
  %v2791 = vunpack.c.l.b16 %v2620
  %v2792 = vunpack.c.h.b16 %v2620
  %v2793 = vunpack.c.l.b16 %v2621
  %v2794 = vunpack.c.h.b16 %v2621
  %v2795 = vunpack.c.l.b16 %v2622
  %v2796 = vunpack.c.h.b16 %v2622
  %v2797 = vunpack.c.l.b16 %v2623
  %v2798 = vunpack.c.h.b16 %v2623
  %v2799 = vunpack.c.l.b16 %v2624
  %v2800 = vunpack.c.h.b16 %v2624
  %v2801 = vunpack.c.l.b16 %v2625
  %v2802 = vunpack.c.h.b16 %v2625
  %v2803 = vunpack.c.l.b16 %v2626
  %v2804 = vunpack.c.h.b16 %v2626
  %v2805 = vunpack.c.l.b16 %v2627
  %v2806 = vunpack.c.h.b16 %v2627
  %v2807 = vunpack.c.l.b16 %v2628
  %v2808 = vunpack.c.h.b16 %v2628
  %v2809 = vunpack.c.l.b16 %v2629
  %v2810 = vunpack.c.h.b16 %v2629
  %v2811 = vpack.c.b16 %v2763, %v2747
  %v2812 = vpack.c.b16 %v2764, %v2748
  %v2813 = vpack.c.b16 %v2765, %v2749
  %v2814 = vpack.c.b16 %v2766, %v2750
  %v2815 = vpack.c.b16 %v2767, %v2751
  %v2816 = vpack.c.b16 %v2768, %v2752
  %v2817 = vpack.c.b16 %v2769, %v2753
  %v2818 = vpack.c.b16 %v2770, %v2754
  %v2819 = vpack.c.b16 %v2771, %v2755
  %v2820 = vpack.c.b16 %v2772, %v2756
  %v2821 = vpack.c.b16 %v2773, %v2757
  %v2822 = vpack.c.b16 %v2774, %v2758
  %v2823 = vpack.c.b16 %v2775, %v2759
  %v2824 = vpack.c.b16 %v2776, %v2760
  %v2825 = vpack.c.b16 %v2777, %v2761
  %v2826 = vpack.c.b16 %v2778, %v2762
  %v2827 = vpack.c.b16 %v2795, %v2779
  %v2828 = vpack.c.b16 %v2796, %v2780
  %v2829 = vpack.c.b16 %v2797, %v2781
  %v2830 = vpack.c.b16 %v2798, %v2782
  %v2831 = vpack.c.b16 %v2799, %v2783
  %v2832 = vpack.c.b16 %v2800, %v2784
  %v2833 = vpack.c.b16 %v2801, %v2785
  %v2834 = vpack.c.b16 %v2802, %v2786
  %v2835 = vpack.c.b16 %v2803, %v2787
  %v2836 = vpack.c.b16 %v2804, %v2788
  %v2837 = vpack.c.b16 %v2805, %v2789
  %v2838 = vpack.c.b16 %v2806, %v2790
  %v2839 = vpack.c.b16 %v2807, %v2791
  %v2840 = vpack.c.b16 %v2808, %v2792
  %v2841 = vpack.c.b16 %v2809, %v2793
  %v2842 = vpack.c.b16 %v2810, %v2794
  %v2876 = vsel %vm192, %v2596, 0
  %2878 = vmatprep.subr.bf16.mxu0 %v2812
  %2879 = vmatpush1.bf16.msra.mxu0 %v2811
  %2880 = vmatprep.subr.bf16.mxu0 %v2828
  %2881 = vmatpush1.bf16.msra.mxu0 %v2827
  %2882 = vmatprep.subr.bf16.mxu0 0
  %2883 = vmatpush1.bf16.msra.mxu0 0
  %2884 = vmatprep.subr.bf16.mxu0 0
  %2885 = vmatpush1.bf16.msra.mxu0 0
  %2886 = vmatprep.subr.bf16.mxu0 0
  %2887 = vmatpush1.bf16.msra.mxu0 0
  %2888 = vmatprep.subr.bf16.mxu0 0
  %2889 = vmatpush1.bf16.msra.mxu0 0
  %2890 = vmatprep.subr.bf16.mxu0 0
  %2891 = vmatpush1.bf16.msra.mxu0 0
  %2892 = vmatprep.subr.bf16.mxu0 0
  %2893 = vmatpush1.bf16.msra.mxu0 0
  %2894 = vmatprep.subr.bf16.mxu0 0
  %2895 = vmatpush1.bf16.msra.mxu0 0
  %2896 = vmatprep.subr.bf16.mxu0 0
  %2897 = vmatpush1.bf16.msra.mxu0 0
  %2898 = vmatprep.subr.bf16.mxu0 0
  %2899 = vmatpush1.bf16.msra.mxu0 0
  %2900 = vmatprep.subr.bf16.mxu0 0
  %2901 = vmatpush1.bf16.msra.mxu0 0
  %2902 = vmatprep.subr.bf16.mxu0 0
  %2903 = vmatpush1.bf16.msra.mxu0 0
  %2904 = vmatprep.subr.bf16.mxu0 0
  %2905 = vmatpush1.bf16.msra.mxu0 0
  %2906 = vmatprep.subr.bf16.mxu0 0
  %2907 = vmatpush1.bf16.msra.mxu0 0
  %2908 = vmatprep.subr.bf16.mxu0 0
  %2909 = vmatpush1.bf16.msra.mxu0 0
  %2910 = vmatprep.mubr.bf16.mxu0 0
  %2911 = vmatmul.mubr.bf16.gmra.mrb[0].mxu0 %v2876
  %v2912 = vpop.f32.mrb[0].mxu0
  %v2913 = vadd.f32 %v2638, %v2912
  %v2914 = vpop.f32.mrb[0].mxu0
  %v2915 = vadd.f32 %v2642, %v2914
  %v2916 = vpop.f32.mrb[0].mxu0
  %v2917 = vadd.f32 %v2638, %v2916
  %v2918 = vpop.f32.mrb[0].mxu0
  %v2919 = vadd.f32 %v2642, %v2918
  %2920 = vdwg.mxu0
  %2921 = vmatprep.subr.bf16.mxu0 %v2814
  %2922 = vmatpush1.bf16.msra.mxu0 %v2813
  %2923 = vmatprep.subr.bf16.mxu0 %v2830
  %2924 = vmatpush1.bf16.msra.mxu0 %v2829
  %2925 = vmatprep.subr.bf16.mxu0 0
  %2926 = vmatpush1.bf16.msra.mxu0 0
  %2927 = vmatprep.subr.bf16.mxu0 0
  %2928 = vmatpush1.bf16.msra.mxu0 0
  %2929 = vmatprep.subr.bf16.mxu0 0
  %2930 = vmatpush1.bf16.msra.mxu0 0
  %2931 = vmatprep.subr.bf16.mxu0 0
  %2932 = vmatpush1.bf16.msra.mxu0 0
  %2933 = vmatprep.subr.bf16.mxu0 0
  %2934 = vmatpush1.bf16.msra.mxu0 0
  %2935 = vmatprep.subr.bf16.mxu0 0
  %2936 = vmatpush1.bf16.msra.mxu0 0
  %2937 = vmatprep.subr.bf16.mxu0 0
  %2938 = vmatpush1.bf16.msra.mxu0 0
  %2939 = vmatprep.subr.bf16.mxu0 0
  %2940 = vmatpush1.bf16.msra.mxu0 0
  %2941 = vmatprep.subr.bf16.mxu0 0
  %2942 = vmatpush1.bf16.msra.mxu0 0
  %2943 = vmatprep.subr.bf16.mxu0 0
  %2944 = vmatpush1.bf16.msra.mxu0 0
  %2945 = vmatprep.subr.bf16.mxu0 0
  %2946 = vmatpush1.bf16.msra.mxu0 0
  %2947 = vmatprep.subr.bf16.mxu0 0
  %2948 = vmatpush1.bf16.msra.mxu0 0
  %2949 = vmatprep.subr.bf16.mxu0 0
  %2950 = vmatpush1.bf16.msra.mxu0 0
  %2951 = vmatprep.subr.bf16.mxu0 0
  %2952 = vmatpush1.bf16.msra.mxu0 0
  %2953 = vmatprep.mubr.bf16.mxu0 0
  %2954 = vmatmul.mubr.bf16.gmra.mrb[0].mxu0 %v2876
  %v2955 = vpop.f32.mrb[0].mxu0
  %v2956 = vadd.f32 %v2646, %v2955
  %v2957 = vpop.f32.mrb[0].mxu0
  %v2958 = vadd.f32 %v2650, %v2957
  %v2959 = vpop.f32.mrb[0].mxu0
  %v2960 = vadd.f32 %v2646, %v2959
  %v2961 = vpop.f32.mrb[0].mxu0
  %v2962 = vadd.f32 %v2650, %v2961
  %2963 = vdwg.mxu0
  %2964 = vmatprep.subr.bf16.mxu0 %v2816
  %2965 = vmatpush1.bf16.msra.mxu0 %v2815
  %2966 = vmatprep.subr.bf16.mxu0 %v2832
  %2967 = vmatpush1.bf16.msra.mxu0 %v2831
  %2968 = vmatprep.subr.bf16.mxu0 0
  %2969 = vmatpush1.bf16.msra.mxu0 0
  %2970 = vmatprep.subr.bf16.mxu0 0
  %2971 = vmatpush1.bf16.msra.mxu0 0
  %2972 = vmatprep.subr.bf16.mxu0 0
  %2973 = vmatpush1.bf16.msra.mxu0 0
  %2974 = vmatprep.subr.bf16.mxu0 0
  %2975 = vmatpush1.bf16.msra.mxu0 0
  %2976 = vmatprep.subr.bf16.mxu0 0
  %2977 = vmatpush1.bf16.msra.mxu0 0
  %2978 = vmatprep.subr.bf16.mxu0 0
  %2979 = vmatpush1.bf16.msra.mxu0 0
  %2980 = vmatprep.subr.bf16.mxu0 0
  %2981 = vmatpush1.bf16.msra.mxu0 0
  %2982 = vmatprep.subr.bf16.mxu0 0
  %2983 = vmatpush1.bf16.msra.mxu0 0
  %2984 = vmatprep.subr.bf16.mxu0 0
  %2985 = vmatpush1.bf16.msra.mxu0 0
  %2986 = vmatprep.subr.bf16.mxu0 0
  %2987 = vmatpush1.bf16.msra.mxu0 0
  %2988 = vmatprep.subr.bf16.mxu0 0
  %2989 = vmatpush1.bf16.msra.mxu0 0
  %2990 = vmatprep.subr.bf16.mxu0 0
  %2991 = vmatpush1.bf16.msra.mxu0 0
  %2992 = vmatprep.subr.bf16.mxu0 0
  %2993 = vmatpush1.bf16.msra.mxu0 0
  %2994 = vmatprep.subr.bf16.mxu0 0
  %2995 = vmatpush1.bf16.msra.mxu0 0
  %2996 = vmatprep.mubr.bf16.mxu0 0
  %2997 = vmatmul.mubr.bf16.gmra.mrb[0].mxu0 %v2876
  %v2998 = vpop.f32.mrb[0].mxu0
  %v2999 = vadd.f32 %v2654, %v2998
  %v3000 = vpop.f32.mrb[0].mxu0
  %v3001 = vadd.f32 %v2658, %v3000
  %v3002 = vpop.f32.mrb[0].mxu0
  %v3003 = vadd.f32 %v2654, %v3002
  %v3004 = vpop.f32.mrb[0].mxu0
  %v3005 = vadd.f32 %v2658, %v3004
  %3006 = vdwg.mxu0
  %3007 = vmatprep.subr.bf16.mxu0 %v2818
  %3008 = vmatpush1.bf16.msra.mxu0 %v2817
  %3009 = vmatprep.subr.bf16.mxu0 %v2834
  %3010 = vmatpush1.bf16.msra.mxu0 %v2833
  %3011 = vmatprep.subr.bf16.mxu0 0
  %3012 = vmatpush1.bf16.msra.mxu0 0
  %3013 = vmatprep.subr.bf16.mxu0 0
  %3014 = vmatpush1.bf16.msra.mxu0 0
  %3015 = vmatprep.subr.bf16.mxu0 0
  %3016 = vmatpush1.bf16.msra.mxu0 0
  %3017 = vmatprep.subr.bf16.mxu0 0
  %3018 = vmatpush1.bf16.msra.mxu0 0
  %3019 = vmatprep.subr.bf16.mxu0 0
  %3020 = vmatpush1.bf16.msra.mxu0 0
  %3021 = vmatprep.subr.bf16.mxu0 0
  %3022 = vmatpush1.bf16.msra.mxu0 0
  %3023 = vmatprep.subr.bf16.mxu0 0
  %3024 = vmatpush1.bf16.msra.mxu0 0
  %3025 = vmatprep.subr.bf16.mxu0 0
  %3026 = vmatpush1.bf16.msra.mxu0 0
  %3027 = vmatprep.subr.bf16.mxu0 0
  %3028 = vmatpush1.bf16.msra.mxu0 0
  %3029 = vmatprep.subr.bf16.mxu0 0
  %3030 = vmatpush1.bf16.msra.mxu0 0
  %3031 = vmatprep.subr.bf16.mxu0 0
  %3032 = vmatpush1.bf16.msra.mxu0 0
  %3033 = vmatprep.subr.bf16.mxu0 0
  %3034 = vmatpush1.bf16.msra.mxu0 0
  %3035 = vmatprep.subr.bf16.mxu0 0
  %3036 = vmatpush1.bf16.msra.mxu0 0
  %3037 = vmatprep.subr.bf16.mxu0 0
  %3038 = vmatpush1.bf16.msra.mxu0 0
  %3039 = vmatprep.mubr.bf16.mxu0 0
  %3040 = vmatmul.mubr.bf16.gmra.mrb[0].mxu0 %v2876
  %v3041 = vpop.f32.mrb[0].mxu0
  %v3042 = vadd.f32 %v2662, %v3041
  %v3043 = vpop.f32.mrb[0].mxu0
  %v3044 = vadd.f32 %v2666, %v3043
  %v3045 = vpop.f32.mrb[0].mxu0
  %v3046 = vadd.f32 %v2662, %v3045
  %v3047 = vpop.f32.mrb[0].mxu0
  %v3048 = vadd.f32 %v2666, %v3047
  %3049 = vdwg.mxu0
  %3050 = vmatprep.subr.bf16.mxu0 %v2820
  %3051 = vmatpush1.bf16.msra.mxu0 %v2819
  %3052 = vmatprep.subr.bf16.mxu0 %v2836
  %3053 = vmatpush1.bf16.msra.mxu0 %v2835
  %3054 = vmatprep.subr.bf16.mxu0 0
  %3055 = vmatpush1.bf16.msra.mxu0 0
  %3056 = vmatprep.subr.bf16.mxu0 0
  %3057 = vmatpush1.bf16.msra.mxu0 0
  %3058 = vmatprep.subr.bf16.mxu0 0
  %3059 = vmatpush1.bf16.msra.mxu0 0
  %3060 = vmatprep.subr.bf16.mxu0 0
  %3061 = vmatpush1.bf16.msra.mxu0 0
  %3062 = vmatprep.subr.bf16.mxu0 0
  %3063 = vmatpush1.bf16.msra.mxu0 0
  %3064 = vmatprep.subr.bf16.mxu0 0
  %3065 = vmatpush1.bf16.msra.mxu0 0
  %3066 = vmatprep.subr.bf16.mxu0 0
  %3067 = vmatpush1.bf16.msra.mxu0 0
  %3068 = vmatprep.subr.bf16.mxu0 0
  %3069 = vmatpush1.bf16.msra.mxu0 0
  %3070 = vmatprep.subr.bf16.mxu0 0
  %3071 = vmatpush1.bf16.msra.mxu0 0
  %3072 = vmatprep.subr.bf16.mxu0 0
  %3073 = vmatpush1.bf16.msra.mxu0 0
  %3074 = vmatprep.subr.bf16.mxu0 0
  %3075 = vmatpush1.bf16.msra.mxu0 0
  %3076 = vmatprep.subr.bf16.mxu0 0
  %3077 = vmatpush1.bf16.msra.mxu0 0
  %3078 = vmatprep.subr.bf16.mxu0 0
  %3079 = vmatpush1.bf16.msra.mxu0 0
  %3080 = vmatprep.subr.bf16.mxu0 0
  %3081 = vmatpush1.bf16.msra.mxu0 0
  %3082 = vmatprep.mubr.bf16.mxu0 0
  %3083 = vmatmul.mubr.bf16.gmra.mrb[0].mxu0 %v2876
  %v3084 = vpop.f32.mrb[0].mxu0
  %v3085 = vadd.f32 %v2670, %v3084
  %v3086 = vpop.f32.mrb[0].mxu0
  %v3087 = vadd.f32 %v2674, %v3086
  %v3088 = vpop.f32.mrb[0].mxu0
  %v3089 = vadd.f32 %v2670, %v3088
  %v3090 = vpop.f32.mrb[0].mxu0
  %v3091 = vadd.f32 %v2674, %v3090
  %3092 = vdwg.mxu0
  %3093 = vmatprep.subr.bf16.mxu0 %v2822
  %3094 = vmatpush1.bf16.msra.mxu0 %v2821
  %3095 = vmatprep.subr.bf16.mxu0 %v2838
  %3096 = vmatpush1.bf16.msra.mxu0 %v2837
  %3097 = vmatprep.subr.bf16.mxu0 0
  %3098 = vmatpush1.bf16.msra.mxu0 0
  %3099 = vmatprep.subr.bf16.mxu0 0
  %3100 = vmatpush1.bf16.msra.mxu0 0
  %3101 = vmatprep.subr.bf16.mxu0 0
  %3102 = vmatpush1.bf16.msra.mxu0 0
  %3103 = vmatprep.subr.bf16.mxu0 0
  %3104 = vmatpush1.bf16.msra.mxu0 0
  %3105 = vmatprep.subr.bf16.mxu0 0
  %3106 = vmatpush1.bf16.msra.mxu0 0
  %3107 = vmatprep.subr.bf16.mxu0 0
  %3108 = vmatpush1.bf16.msra.mxu0 0
  %3109 = vmatprep.subr.bf16.mxu0 0
  %3110 = vmatpush1.bf16.msra.mxu0 0
  %3111 = vmatprep.subr.bf16.mxu0 0
  %3112 = vmatpush1.bf16.msra.mxu0 0
  %3113 = vmatprep.subr.bf16.mxu0 0
  %3114 = vmatpush1.bf16.msra.mxu0 0
  %3115 = vmatprep.subr.bf16.mxu0 0
  %3116 = vmatpush1.bf16.msra.mxu0 0
  %3117 = vmatprep.subr.bf16.mxu0 0
  %3118 = vmatpush1.bf16.msra.mxu0 0
  %3119 = vmatprep.subr.bf16.mxu0 0
  %3120 = vmatpush1.bf16.msra.mxu0 0
  %3121 = vmatprep.subr.bf16.mxu0 0
  %3122 = vmatpush1.bf16.msra.mxu0 0
  %3123 = vmatprep.subr.bf16.mxu0 0
  %3124 = vmatpush1.bf16.msra.mxu0 0
  %3125 = vmatprep.mubr.bf16.mxu0 0
  %3126 = vmatmul.mubr.bf16.gmra.mrb[0].mxu0 %v2876
  %v3127 = vpop.f32.mrb[0].mxu0
  %v3128 = vadd.f32 %v2678, %v3127
  %v3129 = vpop.f32.mrb[0].mxu0
  %v3130 = vadd.f32 %v2682, %v3129
  %v3131 = vpop.f32.mrb[0].mxu0
  %v3132 = vadd.f32 %v2678, %v3131
  %v3133 = vpop.f32.mrb[0].mxu0
  %v3134 = vadd.f32 %v2682, %v3133
  %3135 = vdwg.mxu0
  %3136 = vmatprep.subr.bf16.mxu0 %v2824
  %3137 = vmatpush1.bf16.msra.mxu0 %v2823
  %3138 = vmatprep.subr.bf16.mxu0 %v2840
  %3139 = vmatpush1.bf16.msra.mxu0 %v2839
  %3140 = vmatprep.subr.bf16.mxu0 0
  %3141 = vmatpush1.bf16.msra.mxu0 0
  %3142 = vmatprep.subr.bf16.mxu0 0
  %3143 = vmatpush1.bf16.msra.mxu0 0
  %3144 = vmatprep.subr.bf16.mxu0 0
  %3145 = vmatpush1.bf16.msra.mxu0 0
  %3146 = vmatprep.subr.bf16.mxu0 0
  %3147 = vmatpush1.bf16.msra.mxu0 0
  %3148 = vmatprep.subr.bf16.mxu0 0
  %3149 = vmatpush1.bf16.msra.mxu0 0
  %3150 = vmatprep.subr.bf16.mxu0 0
  %3151 = vmatpush1.bf16.msra.mxu0 0
  %3152 = vmatprep.subr.bf16.mxu0 0
  %3153 = vmatpush1.bf16.msra.mxu0 0
  %3154 = vmatprep.subr.bf16.mxu0 0
  %3155 = vmatpush1.bf16.msra.mxu0 0
  %3156 = vmatprep.subr.bf16.mxu0 0
  %3157 = vmatpush1.bf16.msra.mxu0 0
  %3158 = vmatprep.subr.bf16.mxu0 0
  %3159 = vmatpush1.bf16.msra.mxu0 0
  %3160 = vmatprep.subr.bf16.mxu0 0
  %3161 = vmatpush1.bf16.msra.mxu0 0
  %3162 = vmatprep.subr.bf16.mxu0 0
  %3163 = vmatpush1.bf16.msra.mxu0 0
  %3164 = vmatprep.subr.bf16.mxu0 0
  %3165 = vmatpush1.bf16.msra.mxu0 0
  %3166 = vmatprep.subr.bf16.mxu0 0
  %3167 = vmatpush1.bf16.msra.mxu0 0
  %3168 = vmatprep.mubr.bf16.mxu0 0
  %3169 = vmatmul.mubr.bf16.gmra.mrb[0].mxu0 %v2876
  %v3170 = vpop.f32.mrb[0].mxu0
  %v3171 = vadd.f32 %v2686, %v3170
  %v3172 = vpop.f32.mrb[0].mxu0
  %v3173 = vadd.f32 %v2690, %v3172
  %v3174 = vpop.f32.mrb[0].mxu0
  %v3175 = vadd.f32 %v2686, %v3174
  %v3176 = vpop.f32.mrb[0].mxu0
  %v3177 = vadd.f32 %v2690, %v3176
  %3178 = vdwg.mxu0
  %3179 = vmatprep.subr.bf16.mxu0 %v2826
  %3180 = vmatpush1.bf16.msra.mxu0 %v2825
  %3181 = vmatprep.subr.bf16.mxu0 %v2842
  %3182 = vmatpush1.bf16.msra.mxu0 %v2841
  %3183 = vmatprep.subr.bf16.mxu0 0
  %3184 = vmatpush1.bf16.msra.mxu0 0
  %3185 = vmatprep.subr.bf16.mxu0 0
  %3186 = vmatpush1.bf16.msra.mxu0 0
  %3187 = vmatprep.subr.bf16.mxu0 0
  %3188 = vmatpush1.bf16.msra.mxu0 0
  %3189 = vmatprep.subr.bf16.mxu0 0
  %3190 = vmatpush1.bf16.msra.mxu0 0
  %3191 = vmatprep.subr.bf16.mxu0 0
  %3192 = vmatpush1.bf16.msra.mxu0 0
  %3193 = vmatprep.subr.bf16.mxu0 0
  %3194 = vmatpush1.bf16.msra.mxu0 0
  %3195 = vmatprep.subr.bf16.mxu0 0
  %3196 = vmatpush1.bf16.msra.mxu0 0
  %3197 = vmatprep.subr.bf16.mxu0 0
  %3198 = vmatpush1.bf16.msra.mxu0 0
  %3199 = vmatprep.subr.bf16.mxu0 0
  %3200 = vmatpush1.bf16.msra.mxu0 0
  %3201 = vmatprep.subr.bf16.mxu0 0
  %3202 = vmatpush1.bf16.msra.mxu0 0
  %3203 = vmatprep.subr.bf16.mxu0 0
  %3204 = vmatpush1.bf16.msra.mxu0 0
  %3205 = vmatprep.subr.bf16.mxu0 0
  %3206 = vmatpush1.bf16.msra.mxu0 0
  %3207 = vmatprep.subr.bf16.mxu0 0
  %3208 = vmatpush1.bf16.msra.mxu0 0
  %3209 = vmatprep.subr.bf16.mxu0 0
  %3210 = vmatpush1.bf16.msra.mxu0 0
  %3211 = vmatprep.mubr.bf16.mxu0 0
  %3212 = vmatmul.mubr.bf16.gmra.mrb[0].mxu0 %v2876
  %v3213 = vpop.f32.mrb[0].mxu0
  %v3214 = vadd.f32 %v2694, %v3213
  %v3215 = vpop.f32.mrb[0].mxu0
  %v3216 = vadd.f32 %v2698, %v3215
  %v3217 = vpop.f32.mrb[0].mxu0
  %v3218 = vadd.f32 %v2694, %v3217
  %v3219 = vpop.f32.mrb[0].mxu0
  %v3220 = vadd.f32 %v2698, %v3219
  %3221 = vdwg.mxu0
  %v3222 = vmax.f32 %v2913, 0.0
  %v3223 = vmax.f32 %v2915, 0.0
  %v3224 = vmax.f32 %v2956, 0.0
  %v3225 = vmax.f32 %v2958, 0.0
  %v3226 = vmax.f32 %v2999, 0.0
  %v3227 = vmax.f32 %v3001, 0.0
  %v3228 = vmax.f32 %v3042, 0.0
  %v3229 = vmax.f32 %v3044, 0.0
  %v3230 = vmax.f32 %v3085, 0.0
  %v3231 = vmax.f32 %v3087, 0.0
  %v3232 = vmax.f32 %v3128, 0.0
  %v3233 = vmax.f32 %v3130, 0.0
  %v3234 = vmax.f32 %v3171, 0.0
  %v3235 = vmax.f32 %v3173, 0.0
  %v3236 = vmax.f32 %v3214, 0.0
  %v3237 = vmax.f32 %v3216, 0.0
  %v3238 = vmax.f32 %v2917, 0.0
  %v3239 = vmax.f32 %v2919, 0.0
  %v3240 = vmax.f32 %v2960, 0.0
  %v3241 = vmax.f32 %v2962, 0.0
  %v3242 = vmax.f32 %v3003, 0.0
  %v3243 = vmax.f32 %v3005, 0.0
  %v3244 = vmax.f32 %v3046, 0.0
  %v3245 = vmax.f32 %v3048, 0.0
  %v3246 = vmax.f32 %v3089, 0.0
  %v3247 = vmax.f32 %v3091, 0.0
  %v3248 = vmax.f32 %v3132, 0.0
  %v3249 = vmax.f32 %v3134, 0.0
  %v3250 = vmax.f32 %v3175, 0.0
  %v3251 = vmax.f32 %v3177, 0.0
  %v3252 = vmax.f32 %v3218, 0.0
  %v3253 = vmax.f32 %v3220, 0.0
  %v3254 = vpack.c.bf16 %v3238, %v3222
  %v3255 = vpack.c.bf16 %v3239, %v3223
  %v3256 = vpack.c.bf16 %v3240, %v3224
  %v3257 = vpack.c.bf16 %v3241, %v3225
  %v3258 = vpack.c.bf16 %v3242, %v3226
  %v3259 = vpack.c.bf16 %v3243, %v3227
  %v3260 = vpack.c.bf16 %v3244, %v3228
  %v3261 = vpack.c.bf16 %v3245, %v3229
  %v3262 = vpack.c.bf16 %v3246, %v3230
  %v3263 = vpack.c.bf16 %v3247, %v3231
  %v3264 = vpack.c.bf16 %v3248, %v3232
  %v3265 = vpack.c.bf16 %v3249, %v3233
  %v3266 = vpack.c.bf16 %v3250, %v3234
  %v3267 = vpack.c.bf16 %v3251, %v3235
  %v3268 = vpack.c.bf16 %v3252, %v3236
  %v3269 = vpack.c.bf16 %v3253, %v3237
  %s3270 = scalar_lea.vmem %s12, 1024
  %v3271 = vld [vmem:[%s3270] sm:$0xf]
  %v3272 = vld [vmem:[%s3270 + $0x4] sm:$0xf]
  %v3273 = vld [vmem:[%s3270 + $0x8] sm:$0xf]
  %v3274 = vld [vmem:[%s3270 + $0xc] sm:$0xf]
  %v3275 = vld [vmem:[%s3270 + $0x10] sm:$0xf]
  %v3276 = vld [vmem:[%s3270 + $0x14] sm:$0xf]
  %v3277 = vld [vmem:[%s3270 + $0x18] sm:$0xf]
  %v3278 = vld [vmem:[%s3270 + $0x1c] sm:$0xf]
  %v3279 = vld [vmem:[%s3270 + $0x20] sm:$0xf]
  %v3280 = vld [vmem:[%s3270 + $0x24] sm:$0xf]
  %v3281 = vld [vmem:[%s3270 + $0x28] sm:$0xf]
  %v3282 = vld [vmem:[%s3270 + $0x2c] sm:$0xf]
  %v3283 = vld [vmem:[%s3270 + $0x30] sm:$0xf]
  %v3284 = vld [vmem:[%s3270 + $0x34] sm:$0xf]
  %v3285 = vld [vmem:[%s3270 + $0x38] sm:$0xf]
  %v3286 = vld [vmem:[%s3270 + $0x3c] sm:$0xf]
  %v3287 = vld [vmem:[%s3270 + $0x40] sm:$0xf]
  %v3288 = vld [vmem:[%s3270 + $0x44] sm:$0xf]
  %v3289 = vld [vmem:[%s3270 + $0x48] sm:$0xf]
  %v3290 = vld [vmem:[%s3270 + $0x4c] sm:$0xf]
  %v3291 = vld [vmem:[%s3270 + $0x50] sm:$0xf]
  %v3292 = vld [vmem:[%s3270 + $0x54] sm:$0xf]
  %v3293 = vld [vmem:[%s3270 + $0x58] sm:$0xf]
  %v3294 = vld [vmem:[%s3270 + $0x5c] sm:$0xf]
  %v3295 = vld [vmem:[%s3270 + $0x60] sm:$0xf]
  %v3296 = vld [vmem:[%s3270 + $0x64] sm:$0xf]
  %v3297 = vld [vmem:[%s3270 + $0x68] sm:$0xf]
  %v3298 = vld [vmem:[%s3270 + $0x6c] sm:$0xf]
  %v3299 = vld [vmem:[%s3270 + $0x70] sm:$0xf]
  %v3300 = vld [vmem:[%s3270 + $0x74] sm:$0xf]
  %v3301 = vld [vmem:[%s3270 + $0x78] sm:$0xf]
  %v3302 = vld [vmem:[%s3270 + $0x7c] sm:$0xf]
  %v3303 = vld [vmem:[%s3270 + $0x80] sm:$0xf]
  %v3304 = vld [vmem:[%s3270 + $0x84] sm:$0xf]
  %v3305 = vld [vmem:[%s3270 + $0x88] sm:$0xf]
  %v3306 = vld [vmem:[%s3270 + $0x8c] sm:$0xf]
  %v3307 = vld [vmem:[%s3270 + $0x90] sm:$0xf]
  %v3308 = vld [vmem:[%s3270 + $0x94] sm:$0xf]
  %v3309 = vld [vmem:[%s3270 + $0x98] sm:$0xf]
  %v3310 = vld [vmem:[%s3270 + $0x9c] sm:$0xf]
  %v3311 = vld [vmem:[%s3270 + $0xa0] sm:$0xf]
  %v3312 = vld [vmem:[%s3270 + $0xa4] sm:$0xf]
  %v3313 = vld [vmem:[%s3270 + $0xa8] sm:$0xf]
  %v3314 = vld [vmem:[%s3270 + $0xac] sm:$0xf]
  %v3315 = vld [vmem:[%s3270 + $0xb0] sm:$0xf]
  %v3316 = vld [vmem:[%s3270 + $0xb4] sm:$0xf]
  %v3317 = vld [vmem:[%s3270 + $0xb8] sm:$0xf]
  %v3318 = vld [vmem:[%s3270 + $0xbc] sm:$0xf]
  %v3319 = vld [vmem:[%s3270 + $0xc0] sm:$0xf]
  %v3320 = vld [vmem:[%s3270 + $0xc4] sm:$0xf]
  %v3321 = vld [vmem:[%s3270 + $0xc8] sm:$0xf]
  %v3322 = vld [vmem:[%s3270 + $0xcc] sm:$0xf]
  %v3323 = vld [vmem:[%s3270 + $0xd0] sm:$0xf]
  %v3324 = vld [vmem:[%s3270 + $0xd4] sm:$0xf]
  %v3325 = vld [vmem:[%s3270 + $0xd8] sm:$0xf]
  %v3326 = vld [vmem:[%s3270 + $0xdc] sm:$0xf]
  %v3327 = vld [vmem:[%s3270 + $0xe0] sm:$0xf]
  %v3328 = vld [vmem:[%s3270 + $0xe4] sm:$0xf]
  %v3329 = vld [vmem:[%s3270 + $0xe8] sm:$0xf]
  %v3330 = vld [vmem:[%s3270 + $0xec] sm:$0xf]
  %v3331 = vld [vmem:[%s3270 + $0xf0] sm:$0xf]
  %v3332 = vld [vmem:[%s3270 + $0xf4] sm:$0xf]
  %v3333 = vld [vmem:[%s3270 + $0xf8] sm:$0xf]
  %v3334 = vld [vmem:[%s3270 + $0xfc] sm:$0xf]
  %v3335 = vld [vmem:[%s3270 + $0x100] sm:$0xf]
  %v3336 = vld [vmem:[%s3270 + $0x104] sm:$0xf]
  %v3337 = vld [vmem:[%s3270 + $0x108] sm:$0xf]
  %v3338 = vld [vmem:[%s3270 + $0x10c] sm:$0xf]
  %v3339 = vld [vmem:[%s3270 + $0x110] sm:$0xf]
  %v3340 = vld [vmem:[%s3270 + $0x114] sm:$0xf]
  %v3341 = vld [vmem:[%s3270 + $0x118] sm:$0xf]
  %v3342 = vld [vmem:[%s3270 + $0x11c] sm:$0xf]
  %v3343 = vld [vmem:[%s3270 + $0x120] sm:$0xf]
  %v3344 = vld [vmem:[%s3270 + $0x124] sm:$0xf]
  %v3345 = vld [vmem:[%s3270 + $0x128] sm:$0xf]
  %v3346 = vld [vmem:[%s3270 + $0x12c] sm:$0xf]
  %v3347 = vld [vmem:[%s3270 + $0x130] sm:$0xf]
  %v3348 = vld [vmem:[%s3270 + $0x134] sm:$0xf]
  %v3349 = vld [vmem:[%s3270 + $0x138] sm:$0xf]
  %v3350 = vld [vmem:[%s3270 + $0x13c] sm:$0xf]
  %v3351 = vld [vmem:[%s3270 + $0x140] sm:$0xf]
  %v3352 = vld [vmem:[%s3270 + $0x144] sm:$0xf]
  %v3353 = vld [vmem:[%s3270 + $0x148] sm:$0xf]
  %v3354 = vld [vmem:[%s3270 + $0x14c] sm:$0xf]
  %v3355 = vld [vmem:[%s3270 + $0x150] sm:$0xf]
  %v3356 = vld [vmem:[%s3270 + $0x154] sm:$0xf]
  %v3357 = vld [vmem:[%s3270 + $0x158] sm:$0xf]
  %v3358 = vld [vmem:[%s3270 + $0x15c] sm:$0xf]
  %v3359 = vld [vmem:[%s3270 + $0x160] sm:$0xf]
  %v3360 = vld [vmem:[%s3270 + $0x164] sm:$0xf]
  %v3361 = vld [vmem:[%s3270 + $0x168] sm:$0xf]
  %v3362 = vld [vmem:[%s3270 + $0x16c] sm:$0xf]
  %v3363 = vld [vmem:[%s3270 + $0x170] sm:$0xf]
  %v3364 = vld [vmem:[%s3270 + $0x174] sm:$0xf]
  %v3365 = vld [vmem:[%s3270 + $0x178] sm:$0xf]
  %v3366 = vld [vmem:[%s3270 + $0x17c] sm:$0xf]
  %v3367 = vld [vmem:[%s3270 + $0x180] sm:$0xf]
  %v3368 = vld [vmem:[%s3270 + $0x184] sm:$0xf]
  %v3369 = vld [vmem:[%s3270 + $0x188] sm:$0xf]
  %v3370 = vld [vmem:[%s3270 + $0x18c] sm:$0xf]
  %v3371 = vld [vmem:[%s3270 + $0x190] sm:$0xf]
  %v3372 = vld [vmem:[%s3270 + $0x194] sm:$0xf]
  %v3373 = vld [vmem:[%s3270 + $0x198] sm:$0xf]
  %v3374 = vld [vmem:[%s3270 + $0x19c] sm:$0xf]
  %v3375 = vld [vmem:[%s3270 + $0x1a0] sm:$0xf]
  %v3376 = vld [vmem:[%s3270 + $0x1a4] sm:$0xf]
  %v3377 = vld [vmem:[%s3270 + $0x1a8] sm:$0xf]
  %v3378 = vld [vmem:[%s3270 + $0x1ac] sm:$0xf]
  %v3379 = vld [vmem:[%s3270 + $0x1b0] sm:$0xf]
  %v3380 = vld [vmem:[%s3270 + $0x1b4] sm:$0xf]
  %v3381 = vld [vmem:[%s3270 + $0x1b8] sm:$0xf]
  %v3382 = vld [vmem:[%s3270 + $0x1bc] sm:$0xf]
  %v3383 = vld [vmem:[%s3270 + $0x1c0] sm:$0xf]
  %v3384 = vld [vmem:[%s3270 + $0x1c4] sm:$0xf]
  %v3385 = vld [vmem:[%s3270 + $0x1c8] sm:$0xf]
  %v3386 = vld [vmem:[%s3270 + $0x1cc] sm:$0xf]
  %v3387 = vld [vmem:[%s3270 + $0x1d0] sm:$0xf]
  %v3388 = vld [vmem:[%s3270 + $0x1d4] sm:$0xf]
  %v3389 = vld [vmem:[%s3270 + $0x1d8] sm:$0xf]
  %v3390 = vld [vmem:[%s3270 + $0x1dc] sm:$0xf]
  %v3391 = vld [vmem:[%s3270 + $0x1e0] sm:$0xf]
  %v3392 = vld [vmem:[%s3270 + $0x1e4] sm:$0xf]
  %v3393 = vld [vmem:[%s3270 + $0x1e8] sm:$0xf]
  %v3394 = vld [vmem:[%s3270 + $0x1ec] sm:$0xf]
  %v3395 = vld [vmem:[%s3270 + $0x1f0] sm:$0xf]
  %v3396 = vld [vmem:[%s3270 + $0x1f4] sm:$0xf]
  %v3397 = vld [vmem:[%s3270 + $0x1f8] sm:$0xf]
  %v3398 = vld [vmem:[%s3270 + $0x1fc] sm:$0xf]
  %v3399 = vld [vmem:[%s3270 + $0x200] sm:$0xf]
  %v3400 = vld [vmem:[%s3270 + $0x204] sm:$0xf]
  %v3401 = vld [vmem:[%s3270 + $0x208] sm:$0xf]
  %v3402 = vld [vmem:[%s3270 + $0x20c] sm:$0xf]
  %v3403 = vld [vmem:[%s3270 + $0x210] sm:$0xf]
  %v3404 = vld [vmem:[%s3270 + $0x214] sm:$0xf]
  %v3405 = vld [vmem:[%s3270 + $0x218] sm:$0xf]
  %v3406 = vld [vmem:[%s3270 + $0x21c] sm:$0xf]
  %v3407 = vld [vmem:[%s3270 + $0x220] sm:$0xf]
  %v3408 = vld [vmem:[%s3270 + $0x224] sm:$0xf]
  %v3409 = vld [vmem:[%s3270 + $0x228] sm:$0xf]
  %v3410 = vld [vmem:[%s3270 + $0x22c] sm:$0xf]
  %v3411 = vld [vmem:[%s3270 + $0x230] sm:$0xf]
  %v3412 = vld [vmem:[%s3270 + $0x234] sm:$0xf]
  %v3413 = vld [vmem:[%s3270 + $0x238] sm:$0xf]
  %v3414 = vld [vmem:[%s3270 + $0x23c] sm:$0xf]
  %v3415 = vld [vmem:[%s3270 + $0x240] sm:$0xf]
  %v3416 = vld [vmem:[%s3270 + $0x244] sm:$0xf]
  %v3417 = vld [vmem:[%s3270 + $0x248] sm:$0xf]
  %v3418 = vld [vmem:[%s3270 + $0x24c] sm:$0xf]
  %v3419 = vld [vmem:[%s3270 + $0x250] sm:$0xf]
  %v3420 = vld [vmem:[%s3270 + $0x254] sm:$0xf]
  %v3421 = vld [vmem:[%s3270 + $0x258] sm:$0xf]
  %v3422 = vld [vmem:[%s3270 + $0x25c] sm:$0xf]
  %v3423 = vld [vmem:[%s3270 + $0x260] sm:$0xf]
  %v3424 = vld [vmem:[%s3270 + $0x264] sm:$0xf]
  %v3425 = vld [vmem:[%s3270 + $0x268] sm:$0xf]
  %v3426 = vld [vmem:[%s3270 + $0x26c] sm:$0xf]
  %v3427 = vld [vmem:[%s3270 + $0x270] sm:$0xf]
  %v3428 = vld [vmem:[%s3270 + $0x274] sm:$0xf]
  %v3429 = vld [vmem:[%s3270 + $0x278] sm:$0xf]
  %v3430 = vld [vmem:[%s3270 + $0x27c] sm:$0xf]
  %v3431 = vld [vmem:[%s3270 + $0x280] sm:$0xf]
  %v3432 = vld [vmem:[%s3270 + $0x284] sm:$0xf]
  %v3433 = vld [vmem:[%s3270 + $0x288] sm:$0xf]
  %v3434 = vld [vmem:[%s3270 + $0x28c] sm:$0xf]
  %v3435 = vld [vmem:[%s3270 + $0x290] sm:$0xf]
  %v3436 = vld [vmem:[%s3270 + $0x294] sm:$0xf]
  %v3437 = vld [vmem:[%s3270 + $0x298] sm:$0xf]
  %v3438 = vld [vmem:[%s3270 + $0x29c] sm:$0xf]
  %v3439 = vld [vmem:[%s3270 + $0x2a0] sm:$0xf]
  %v3440 = vld [vmem:[%s3270 + $0x2a4] sm:$0xf]
  %v3441 = vld [vmem:[%s3270 + $0x2a8] sm:$0xf]
  %v3442 = vld [vmem:[%s3270 + $0x2ac] sm:$0xf]
  %v3443 = vld [vmem:[%s3270 + $0x2b0] sm:$0xf]
  %v3444 = vld [vmem:[%s3270 + $0x2b4] sm:$0xf]
  %v3445 = vld [vmem:[%s3270 + $0x2b8] sm:$0xf]
  %v3446 = vld [vmem:[%s3270 + $0x2bc] sm:$0xf]
  %v3447 = vld [vmem:[%s3270 + $0x2c0] sm:$0xf]
  %v3448 = vld [vmem:[%s3270 + $0x2c4] sm:$0xf]
  %v3449 = vld [vmem:[%s3270 + $0x2c8] sm:$0xf]
  %v3450 = vld [vmem:[%s3270 + $0x2cc] sm:$0xf]
  %v3451 = vld [vmem:[%s3270 + $0x2d0] sm:$0xf]
  %v3452 = vld [vmem:[%s3270 + $0x2d4] sm:$0xf]
  %v3453 = vld [vmem:[%s3270 + $0x2d8] sm:$0xf]
  %v3454 = vld [vmem:[%s3270 + $0x2dc] sm:$0xf]
  %v3455 = vld [vmem:[%s3270 + $0x2e0] sm:$0xf]
  %v3456 = vld [vmem:[%s3270 + $0x2e4] sm:$0xf]
  %v3457 = vld [vmem:[%s3270 + $0x2e8] sm:$0xf]
  %v3458 = vld [vmem:[%s3270 + $0x2ec] sm:$0xf]
  %v3459 = vld [vmem:[%s3270 + $0x2f0] sm:$0xf]
  %v3460 = vld [vmem:[%s3270 + $0x2f4] sm:$0xf]
  %v3461 = vld [vmem:[%s3270 + $0x2f8] sm:$0xf]
  %v3462 = vld [vmem:[%s3270 + $0x2fc] sm:$0xf]
  %v3463 = vld [vmem:[%s3270 + $0x300] sm:$0xf]
  %v3464 = vld [vmem:[%s3270 + $0x304] sm:$0xf]
  %v3465 = vld [vmem:[%s3270 + $0x308] sm:$0xf]
  %v3466 = vld [vmem:[%s3270 + $0x30c] sm:$0xf]
  %v3467 = vld [vmem:[%s3270 + $0x310] sm:$0xf]
  %v3468 = vld [vmem:[%s3270 + $0x314] sm:$0xf]
  %v3469 = vld [vmem:[%s3270 + $0x318] sm:$0xf]
  %v3470 = vld [vmem:[%s3270 + $0x31c] sm:$0xf]
  %v3471 = vld [vmem:[%s3270 + $0x320] sm:$0xf]
  %v3472 = vld [vmem:[%s3270 + $0x324] sm:$0xf]
  %v3473 = vld [vmem:[%s3270 + $0x328] sm:$0xf]
  %v3474 = vld [vmem:[%s3270 + $0x32c] sm:$0xf]
  %v3475 = vld [vmem:[%s3270 + $0x330] sm:$0xf]
  %v3476 = vld [vmem:[%s3270 + $0x334] sm:$0xf]
  %v3477 = vld [vmem:[%s3270 + $0x338] sm:$0xf]
  %v3478 = vld [vmem:[%s3270 + $0x33c] sm:$0xf]
  %v3479 = vld [vmem:[%s3270 + $0x340] sm:$0xf]
  %v3480 = vld [vmem:[%s3270 + $0x344] sm:$0xf]
  %v3481 = vld [vmem:[%s3270 + $0x348] sm:$0xf]
  %v3482 = vld [vmem:[%s3270 + $0x34c] sm:$0xf]
  %v3483 = vld [vmem:[%s3270 + $0x350] sm:$0xf]
  %v3484 = vld [vmem:[%s3270 + $0x354] sm:$0xf]
  %v3485 = vld [vmem:[%s3270 + $0x358] sm:$0xf]
  %v3486 = vld [vmem:[%s3270 + $0x35c] sm:$0xf]
  %v3487 = vld [vmem:[%s3270 + $0x360] sm:$0xf]
  %v3488 = vld [vmem:[%s3270 + $0x364] sm:$0xf]
  %v3489 = vld [vmem:[%s3270 + $0x368] sm:$0xf]
  %v3490 = vld [vmem:[%s3270 + $0x36c] sm:$0xf]
  %v3491 = vld [vmem:[%s3270 + $0x370] sm:$0xf]
  %v3492 = vld [vmem:[%s3270 + $0x374] sm:$0xf]
  %v3493 = vld [vmem:[%s3270 + $0x378] sm:$0xf]
  %v3494 = vld [vmem:[%s3270 + $0x37c] sm:$0xf]
  %v3495 = vld [vmem:[%s3270 + $0x380] sm:$0xf]
  %v3496 = vld [vmem:[%s3270 + $0x384] sm:$0xf]
  %v3497 = vld [vmem:[%s3270 + $0x388] sm:$0xf]
  %v3498 = vld [vmem:[%s3270 + $0x38c] sm:$0xf]
  %v3499 = vld [vmem:[%s3270 + $0x390] sm:$0xf]
  %v3500 = vld [vmem:[%s3270 + $0x394] sm:$0xf]
  %v3501 = vld [vmem:[%s3270 + $0x398] sm:$0xf]
  %v3502 = vld [vmem:[%s3270 + $0x39c] sm:$0xf]
  %v3503 = vld [vmem:[%s3270 + $0x3a0] sm:$0xf]
  %v3504 = vld [vmem:[%s3270 + $0x3a4] sm:$0xf]
  %v3505 = vld [vmem:[%s3270 + $0x3a8] sm:$0xf]
  %v3506 = vld [vmem:[%s3270 + $0x3ac] sm:$0xf]
  %v3507 = vld [vmem:[%s3270 + $0x3b0] sm:$0xf]
  %v3508 = vld [vmem:[%s3270 + $0x3b4] sm:$0xf]
  %v3509 = vld [vmem:[%s3270 + $0x3b8] sm:$0xf]
  %v3510 = vld [vmem:[%s3270 + $0x3bc] sm:$0xf]
  %v3511 = vld [vmem:[%s3270 + $0x3c0] sm:$0xf]
  %v3512 = vld [vmem:[%s3270 + $0x3c4] sm:$0xf]
  %v3513 = vld [vmem:[%s3270 + $0x3c8] sm:$0xf]
  %v3514 = vld [vmem:[%s3270 + $0x3cc] sm:$0xf]
  %v3515 = vld [vmem:[%s3270 + $0x3d0] sm:$0xf]
  %v3516 = vld [vmem:[%s3270 + $0x3d4] sm:$0xf]
  %v3517 = vld [vmem:[%s3270 + $0x3d8] sm:$0xf]
  %v3518 = vld [vmem:[%s3270 + $0x3dc] sm:$0xf]
  %v3519 = vld [vmem:[%s3270 + $0x3e0] sm:$0xf]
  %v3520 = vld [vmem:[%s3270 + $0x3e4] sm:$0xf]
  %v3521 = vld [vmem:[%s3270 + $0x3e8] sm:$0xf]
  %v3522 = vld [vmem:[%s3270 + $0x3ec] sm:$0xf]
  %v3523 = vld [vmem:[%s3270 + $0x3f0] sm:$0xf]
  %v3524 = vld [vmem:[%s3270 + $0x3f4] sm:$0xf]
  %v3525 = vld [vmem:[%s3270 + $0x3f8] sm:$0xf]
  %v3526 = vld [vmem:[%s3270 + $0x3fc] sm:$0xf]
  %s3527 = scalar_lea.vmem %s13, 1
  %v3528 = vld [vmem:[%s3527] sm:$0x1]
  %v3530 = vlaneseq
  %v3531 = vshrl.u32 %v3530, 7
  %v3532 = vsub.s32 0, %v3531
  %v3533 = vrot.slane %v3528, %v3532
  %v3791 = vunpack.c.l.b16 %v3271
  %v3792 = vunpack.c.l.b16 %v3272
  %v3793 = vunpack.c.l.b16 %v3273
  %v3794 = vunpack.c.l.b16 %v3274
  %v3795 = vunpack.c.l.b16 %v3275
  %v3796 = vunpack.c.l.b16 %v3276
  %v3797 = vunpack.c.l.b16 %v3277
  %v3798 = vunpack.c.l.b16 %v3278
  %v3799 = vunpack.c.l.b16 %v3279
  %v3800 = vunpack.c.l.b16 %v3280
  %v3801 = vunpack.c.l.b16 %v3281
  %v3802 = vunpack.c.l.b16 %v3282
  %v3803 = vunpack.c.l.b16 %v3283
  %v3804 = vunpack.c.l.b16 %v3284
  %v3805 = vunpack.c.l.b16 %v3285
  %v3806 = vunpack.c.l.b16 %v3286
  %v3807 = vunpack.c.l.b16 %v3287
  %v3808 = vunpack.c.l.b16 %v3288
  %v3809 = vunpack.c.l.b16 %v3289
  %v3810 = vunpack.c.l.b16 %v3290
  %v3811 = vunpack.c.l.b16 %v3291
  %v3812 = vunpack.c.l.b16 %v3292
  %v3813 = vunpack.c.l.b16 %v3293
  %v3814 = vunpack.c.l.b16 %v3294
  %v3815 = vunpack.c.l.b16 %v3295
  %v3816 = vunpack.c.l.b16 %v3296
  %v3817 = vunpack.c.l.b16 %v3297
  %v3818 = vunpack.c.l.b16 %v3298
  %v3819 = vunpack.c.l.b16 %v3299
  %v3820 = vunpack.c.l.b16 %v3300
  %v3821 = vunpack.c.l.b16 %v3301
  %v3822 = vunpack.c.l.b16 %v3302
  %v3823 = vunpack.c.l.b16 %v3303
  %v3824 = vunpack.c.l.b16 %v3304
  %v3825 = vunpack.c.l.b16 %v3305
  %v3826 = vunpack.c.l.b16 %v3306
  %v3827 = vunpack.c.l.b16 %v3307
  %v3828 = vunpack.c.l.b16 %v3308
  %v3829 = vunpack.c.l.b16 %v3309
  %v3830 = vunpack.c.l.b16 %v3310
  %v3831 = vunpack.c.l.b16 %v3311
  %v3832 = vunpack.c.l.b16 %v3312
  %v3833 = vunpack.c.l.b16 %v3313
  %v3834 = vunpack.c.l.b16 %v3314
  %v3835 = vunpack.c.l.b16 %v3315
  %v3836 = vunpack.c.l.b16 %v3316
  %v3837 = vunpack.c.l.b16 %v3317
  %v3838 = vunpack.c.l.b16 %v3318
  %v3839 = vunpack.c.l.b16 %v3319
  %v3840 = vunpack.c.l.b16 %v3320
  %v3841 = vunpack.c.l.b16 %v3321
  %v3842 = vunpack.c.l.b16 %v3322
  %v3843 = vunpack.c.l.b16 %v3323
  %v3844 = vunpack.c.l.b16 %v3324
  %v3845 = vunpack.c.l.b16 %v3325
  %v3846 = vunpack.c.l.b16 %v3326
  %v3847 = vunpack.c.l.b16 %v3327
  %v3848 = vunpack.c.l.b16 %v3328
  %v3849 = vunpack.c.l.b16 %v3329
  %v3850 = vunpack.c.l.b16 %v3330
  %v3851 = vunpack.c.l.b16 %v3331
  %v3852 = vunpack.c.l.b16 %v3332
  %v3853 = vunpack.c.l.b16 %v3333
  %v3854 = vunpack.c.l.b16 %v3334
  %v3855 = vunpack.c.l.b16 %v3335
  %v3856 = vunpack.c.l.b16 %v3336
  %v3857 = vunpack.c.l.b16 %v3337
  %v3858 = vunpack.c.l.b16 %v3338
  %v3859 = vunpack.c.l.b16 %v3339
  %v3860 = vunpack.c.l.b16 %v3340
  %v3861 = vunpack.c.l.b16 %v3341
  %v3862 = vunpack.c.l.b16 %v3342
  %v3863 = vunpack.c.l.b16 %v3343
  %v3864 = vunpack.c.l.b16 %v3344
  %v3865 = vunpack.c.l.b16 %v3345
  %v3866 = vunpack.c.l.b16 %v3346
  %v3867 = vunpack.c.l.b16 %v3347
  %v3868 = vunpack.c.l.b16 %v3348
  %v3869 = vunpack.c.l.b16 %v3349
  %v3870 = vunpack.c.l.b16 %v3350
  %v3871 = vunpack.c.l.b16 %v3351
  %v3872 = vunpack.c.l.b16 %v3352
  %v3873 = vunpack.c.l.b16 %v3353
  %v3874 = vunpack.c.l.b16 %v3354
  %v3875 = vunpack.c.l.b16 %v3355
  %v3876 = vunpack.c.l.b16 %v3356
  %v3877 = vunpack.c.l.b16 %v3357
  %v3878 = vunpack.c.l.b16 %v3358
  %v3879 = vunpack.c.l.b16 %v3359
  %v3880 = vunpack.c.l.b16 %v3360
  %v3881 = vunpack.c.l.b16 %v3361
  %v3882 = vunpack.c.l.b16 %v3362
  %v3883 = vunpack.c.l.b16 %v3363
  %v3884 = vunpack.c.l.b16 %v3364
  %v3885 = vunpack.c.l.b16 %v3365
  %v3886 = vunpack.c.l.b16 %v3366
  %v3887 = vunpack.c.l.b16 %v3367
  %v3888 = vunpack.c.l.b16 %v3368
  %v3889 = vunpack.c.l.b16 %v3369
  %v3890 = vunpack.c.l.b16 %v3370
  %v3891 = vunpack.c.l.b16 %v3371
  %v3892 = vunpack.c.l.b16 %v3372
  %v3893 = vunpack.c.l.b16 %v3373
  %v3894 = vunpack.c.l.b16 %v3374
  %v3895 = vunpack.c.l.b16 %v3375
  %v3896 = vunpack.c.l.b16 %v3376
  %v3897 = vunpack.c.l.b16 %v3377
  %v3898 = vunpack.c.l.b16 %v3378
  %v3899 = vunpack.c.l.b16 %v3379
  %v3900 = vunpack.c.l.b16 %v3380
  %v3901 = vunpack.c.l.b16 %v3381
  %v3902 = vunpack.c.l.b16 %v3382
  %v3903 = vunpack.c.l.b16 %v3383
  %v3904 = vunpack.c.l.b16 %v3384
  %v3905 = vunpack.c.l.b16 %v3385
  %v3906 = vunpack.c.l.b16 %v3386
  %v3907 = vunpack.c.l.b16 %v3387
  %v3908 = vunpack.c.l.b16 %v3388
  %v3909 = vunpack.c.l.b16 %v3389
  %v3910 = vunpack.c.l.b16 %v3390
  %v3911 = vunpack.c.l.b16 %v3391
  %v3912 = vunpack.c.l.b16 %v3392
  %v3913 = vunpack.c.l.b16 %v3393
  %v3914 = vunpack.c.l.b16 %v3394
  %v3915 = vunpack.c.l.b16 %v3395
  %v3916 = vunpack.c.l.b16 %v3396
  %v3917 = vunpack.c.l.b16 %v3397
  %v3918 = vunpack.c.l.b16 %v3398
  %v3919 = vunpack.c.l.b16 %v3399
  %v3920 = vunpack.c.l.b16 %v3400
  %v3921 = vunpack.c.l.b16 %v3401
  %v3922 = vunpack.c.l.b16 %v3402
  %v3923 = vunpack.c.l.b16 %v3403
  %v3924 = vunpack.c.l.b16 %v3404
  %v3925 = vunpack.c.l.b16 %v3405
  %v3926 = vunpack.c.l.b16 %v3406
  %v3927 = vunpack.c.l.b16 %v3407
  %v3928 = vunpack.c.l.b16 %v3408
  %v3929 = vunpack.c.l.b16 %v3409
  %v3930 = vunpack.c.l.b16 %v3410
  %v3931 = vunpack.c.l.b16 %v3411
  %v3932 = vunpack.c.l.b16 %v3412
  %v3933 = vunpack.c.l.b16 %v3413
  %v3934 = vunpack.c.l.b16 %v3414
  %v3935 = vunpack.c.l.b16 %v3415
  %v3936 = vunpack.c.l.b16 %v3416
  %v3937 = vunpack.c.l.b16 %v3417
  %v3938 = vunpack.c.l.b16 %v3418
  %v3939 = vunpack.c.l.b16 %v3419
  %v3940 = vunpack.c.l.b16 %v3420
  %v3941 = vunpack.c.l.b16 %v3421
  %v3942 = vunpack.c.l.b16 %v3422
  %v3943 = vunpack.c.l.b16 %v3423
  %v3944 = vunpack.c.l.b16 %v3424
  %v3945 = vunpack.c.l.b16 %v3425
  %v3946 = vunpack.c.l.b16 %v3426
  %v3947 = vunpack.c.l.b16 %v3427
  %v3948 = vunpack.c.l.b16 %v3428
  %v3949 = vunpack.c.l.b16 %v3429
  %v3950 = vunpack.c.l.b16 %v3430
  %v3951 = vunpack.c.l.b16 %v3431
  %v3952 = vunpack.c.l.b16 %v3432
  %v3953 = vunpack.c.l.b16 %v3433
  %v3954 = vunpack.c.l.b16 %v3434
  %v3955 = vunpack.c.l.b16 %v3435
  %v3956 = vunpack.c.l.b16 %v3436
  %v3957 = vunpack.c.l.b16 %v3437
  %v3958 = vunpack.c.l.b16 %v3438
  %v3959 = vunpack.c.l.b16 %v3439
  %v3960 = vunpack.c.l.b16 %v3440
  %v3961 = vunpack.c.l.b16 %v3441
  %v3962 = vunpack.c.l.b16 %v3442
  %v3963 = vunpack.c.l.b16 %v3443
  %v3964 = vunpack.c.l.b16 %v3444
  %v3965 = vunpack.c.l.b16 %v3445
  %v3966 = vunpack.c.l.b16 %v3446
  %v3967 = vunpack.c.l.b16 %v3447
  %v3968 = vunpack.c.l.b16 %v3448
  %v3969 = vunpack.c.l.b16 %v3449
  %v3970 = vunpack.c.l.b16 %v3450
  %v3971 = vunpack.c.l.b16 %v3451
  %v3972 = vunpack.c.l.b16 %v3452
  %v3973 = vunpack.c.l.b16 %v3453
  %v3974 = vunpack.c.l.b16 %v3454
  %v3975 = vunpack.c.l.b16 %v3455
  %v3976 = vunpack.c.l.b16 %v3456
  %v3977 = vunpack.c.l.b16 %v3457
  %v3978 = vunpack.c.l.b16 %v3458
  %v3979 = vunpack.c.l.b16 %v3459
  %v3980 = vunpack.c.l.b16 %v3460
  %v3981 = vunpack.c.l.b16 %v3461
  %v3982 = vunpack.c.l.b16 %v3462
  %v3983 = vunpack.c.l.b16 %v3463
  %v3984 = vunpack.c.l.b16 %v3464
  %v3985 = vunpack.c.l.b16 %v3465
  %v3986 = vunpack.c.l.b16 %v3466
  %v3987 = vunpack.c.l.b16 %v3467
  %v3988 = vunpack.c.l.b16 %v3468
  %v3989 = vunpack.c.l.b16 %v3469
  %v3990 = vunpack.c.l.b16 %v3470
  %v3991 = vunpack.c.l.b16 %v3471
  %v3992 = vunpack.c.l.b16 %v3472
  %v3993 = vunpack.c.l.b16 %v3473
  %v3994 = vunpack.c.l.b16 %v3474
  %v3995 = vunpack.c.l.b16 %v3475
  %v3996 = vunpack.c.l.b16 %v3476
  %v3997 = vunpack.c.l.b16 %v3477
  %v3998 = vunpack.c.l.b16 %v3478
  %v3999 = vunpack.c.l.b16 %v3479
  %v4000 = vunpack.c.l.b16 %v3480
  %v4001 = vunpack.c.l.b16 %v3481
  %v4002 = vunpack.c.l.b16 %v3482
  %v4003 = vunpack.c.l.b16 %v3483
  %v4004 = vunpack.c.l.b16 %v3484
  %v4005 = vunpack.c.l.b16 %v3485
  %v4006 = vunpack.c.l.b16 %v3486
  %v4007 = vunpack.c.l.b16 %v3487
  %v4008 = vunpack.c.l.b16 %v3488
  %v4009 = vunpack.c.l.b16 %v3489
  %v4010 = vunpack.c.l.b16 %v3490
  %v4011 = vunpack.c.l.b16 %v3491
  %v4012 = vunpack.c.l.b16 %v3492
  %v4013 = vunpack.c.l.b16 %v3493
  %v4014 = vunpack.c.l.b16 %v3494
  %v4015 = vunpack.c.l.b16 %v3495
  %v4016 = vunpack.c.l.b16 %v3496
  %v4017 = vunpack.c.l.b16 %v3497
  %v4018 = vunpack.c.l.b16 %v3498
  %v4019 = vunpack.c.l.b16 %v3499
  %v4020 = vunpack.c.l.b16 %v3500
  %v4021 = vunpack.c.l.b16 %v3501
  %v4022 = vunpack.c.l.b16 %v3502
  %v4023 = vunpack.c.l.b16 %v3503
  %v4024 = vunpack.c.l.b16 %v3504
  %v4025 = vunpack.c.l.b16 %v3505
  %v4026 = vunpack.c.l.b16 %v3506
  %v4027 = vunpack.c.l.b16 %v3507
  %v4028 = vunpack.c.l.b16 %v3508
  %v4029 = vunpack.c.l.b16 %v3509
  %v4030 = vunpack.c.l.b16 %v3510
  %v4031 = vunpack.c.l.b16 %v3511
  %v4032 = vunpack.c.l.b16 %v3512
  %v4033 = vunpack.c.l.b16 %v3513
  %v4034 = vunpack.c.l.b16 %v3514
  %v4035 = vunpack.c.l.b16 %v3515
  %v4036 = vunpack.c.l.b16 %v3516
  %v4037 = vunpack.c.l.b16 %v3517
  %v4038 = vunpack.c.l.b16 %v3518
  %v4039 = vunpack.c.l.b16 %v3519
  %v4040 = vunpack.c.l.b16 %v3520
  %v4041 = vunpack.c.l.b16 %v3521
  %v4042 = vunpack.c.l.b16 %v3522
  %v4043 = vunpack.c.l.b16 %v3523
  %v4044 = vunpack.c.l.b16 %v3524
  %v4045 = vunpack.c.l.b16 %v3525
  %v4046 = vunpack.c.l.b16 %v3526
  %v4047 = vpack.c.b16 %v3792, %v3791
  %v4048 = vpack.c.b16 %v3794, %v3793
  %v4049 = vpack.c.b16 %v3796, %v3795
  %v4050 = vpack.c.b16 %v3798, %v3797
  %v4051 = vpack.c.b16 %v3800, %v3799
  %v4052 = vpack.c.b16 %v3802, %v3801
  %v4053 = vpack.c.b16 %v3804, %v3803
  %v4054 = vpack.c.b16 %v3806, %v3805
  %v4055 = vpack.c.b16 %v3808, %v3807
  %v4056 = vpack.c.b16 %v3810, %v3809
  %v4057 = vpack.c.b16 %v3812, %v3811
  %v4058 = vpack.c.b16 %v3814, %v3813
  %v4059 = vpack.c.b16 %v3816, %v3815
  %v4060 = vpack.c.b16 %v3818, %v3817
  %v4061 = vpack.c.b16 %v3820, %v3819
  %v4062 = vpack.c.b16 %v3822, %v3821
  %v4063 = vpack.c.b16 %v3824, %v3823
  %v4064 = vpack.c.b16 %v3826, %v3825
  %v4065 = vpack.c.b16 %v3828, %v3827
  %v4066 = vpack.c.b16 %v3830, %v3829
  %v4067 = vpack.c.b16 %v3832, %v3831
  %v4068 = vpack.c.b16 %v3834, %v3833
  %v4069 = vpack.c.b16 %v3836, %v3835
  %v4070 = vpack.c.b16 %v3838, %v3837
  %v4071 = vpack.c.b16 %v3840, %v3839
  %v4072 = vpack.c.b16 %v3842, %v3841
  %v4073 = vpack.c.b16 %v3844, %v3843
  %v4074 = vpack.c.b16 %v3846, %v3845
  %v4075 = vpack.c.b16 %v3848, %v3847
  %v4076 = vpack.c.b16 %v3850, %v3849
  %v4077 = vpack.c.b16 %v3852, %v3851
  %v4078 = vpack.c.b16 %v3854, %v3853
  %v4079 = vpack.c.b16 %v3856, %v3855
  %v4080 = vpack.c.b16 %v3858, %v3857
  %v4081 = vpack.c.b16 %v3860, %v3859
  %v4082 = vpack.c.b16 %v3862, %v3861
  %v4083 = vpack.c.b16 %v3864, %v3863
  %v4084 = vpack.c.b16 %v3866, %v3865
  %v4085 = vpack.c.b16 %v3868, %v3867
  %v4086 = vpack.c.b16 %v3870, %v3869
  %v4087 = vpack.c.b16 %v3872, %v3871
  %v4088 = vpack.c.b16 %v3874, %v3873
  %v4089 = vpack.c.b16 %v3876, %v3875
  %v4090 = vpack.c.b16 %v3878, %v3877
  %v4091 = vpack.c.b16 %v3880, %v3879
  %v4092 = vpack.c.b16 %v3882, %v3881
  %v4093 = vpack.c.b16 %v3884, %v3883
  %v4094 = vpack.c.b16 %v3886, %v3885
  %v4095 = vpack.c.b16 %v3888, %v3887
  %v4096 = vpack.c.b16 %v3890, %v3889
  %v4097 = vpack.c.b16 %v3892, %v3891
  %v4098 = vpack.c.b16 %v3894, %v3893
  %v4099 = vpack.c.b16 %v3896, %v3895
  %v4100 = vpack.c.b16 %v3898, %v3897
  %v4101 = vpack.c.b16 %v3900, %v3899
  %v4102 = vpack.c.b16 %v3902, %v3901
  %v4103 = vpack.c.b16 %v3904, %v3903
  %v4104 = vpack.c.b16 %v3906, %v3905
  %v4105 = vpack.c.b16 %v3908, %v3907
  %v4106 = vpack.c.b16 %v3910, %v3909
  %v4107 = vpack.c.b16 %v3912, %v3911
  %v4108 = vpack.c.b16 %v3914, %v3913
  %v4109 = vpack.c.b16 %v3916, %v3915
  %v4110 = vpack.c.b16 %v3918, %v3917
  %v4111 = vpack.c.b16 %v3920, %v3919
  %v4112 = vpack.c.b16 %v3922, %v3921
  %v4113 = vpack.c.b16 %v3924, %v3923
  %v4114 = vpack.c.b16 %v3926, %v3925
  %v4115 = vpack.c.b16 %v3928, %v3927
  %v4116 = vpack.c.b16 %v3930, %v3929
  %v4117 = vpack.c.b16 %v3932, %v3931
  %v4118 = vpack.c.b16 %v3934, %v3933
  %v4119 = vpack.c.b16 %v3936, %v3935
  %v4120 = vpack.c.b16 %v3938, %v3937
  %v4121 = vpack.c.b16 %v3940, %v3939
  %v4122 = vpack.c.b16 %v3942, %v3941
  %v4123 = vpack.c.b16 %v3944, %v3943
  %v4124 = vpack.c.b16 %v3946, %v3945
  %v4125 = vpack.c.b16 %v3948, %v3947
  %v4126 = vpack.c.b16 %v3950, %v3949
  %v4127 = vpack.c.b16 %v3952, %v3951
  %v4128 = vpack.c.b16 %v3954, %v3953
  %v4129 = vpack.c.b16 %v3956, %v3955
  %v4130 = vpack.c.b16 %v3958, %v3957
  %v4131 = vpack.c.b16 %v3960, %v3959
  %v4132 = vpack.c.b16 %v3962, %v3961
  %v4133 = vpack.c.b16 %v3964, %v3963
  %v4134 = vpack.c.b16 %v3966, %v3965
  %v4135 = vpack.c.b16 %v3968, %v3967
  %v4136 = vpack.c.b16 %v3970, %v3969
  %v4137 = vpack.c.b16 %v3972, %v3971
  %v4138 = vpack.c.b16 %v3974, %v3973
  %v4139 = vpack.c.b16 %v3976, %v3975
  %v4140 = vpack.c.b16 %v3978, %v3977
  %v4141 = vpack.c.b16 %v3980, %v3979
  %v4142 = vpack.c.b16 %v3982, %v3981
  %v4143 = vpack.c.b16 %v3984, %v3983
  %v4144 = vpack.c.b16 %v3986, %v3985
  %v4145 = vpack.c.b16 %v3988, %v3987
  %v4146 = vpack.c.b16 %v3990, %v3989
  %v4147 = vpack.c.b16 %v3992, %v3991
  %v4148 = vpack.c.b16 %v3994, %v3993
  %v4149 = vpack.c.b16 %v3996, %v3995
  %v4150 = vpack.c.b16 %v3998, %v3997
  %v4151 = vpack.c.b16 %v4000, %v3999
  %v4152 = vpack.c.b16 %v4002, %v4001
  %v4153 = vpack.c.b16 %v4004, %v4003
  %v4154 = vpack.c.b16 %v4006, %v4005
  %v4155 = vpack.c.b16 %v4008, %v4007
  %v4156 = vpack.c.b16 %v4010, %v4009
  %v4157 = vpack.c.b16 %v4012, %v4011
  %v4158 = vpack.c.b16 %v4014, %v4013
  %v4159 = vpack.c.b16 %v4016, %v4015
  %v4160 = vpack.c.b16 %v4018, %v4017
  %v4161 = vpack.c.b16 %v4020, %v4019
  %v4162 = vpack.c.b16 %v4022, %v4021
  %v4163 = vpack.c.b16 %v4024, %v4023
  %v4164 = vpack.c.b16 %v4026, %v4025
  %v4165 = vpack.c.b16 %v4028, %v4027
  %v4166 = vpack.c.b16 %v4030, %v4029
  %v4167 = vpack.c.b16 %v4032, %v4031
  %v4168 = vpack.c.b16 %v4034, %v4033
  %v4169 = vpack.c.b16 %v4036, %v4035
  %v4170 = vpack.c.b16 %v4038, %v4037
  %v4171 = vpack.c.b16 %v4040, %v4039
  %v4172 = vpack.c.b16 %v4042, %v4041
  %v4173 = vpack.c.b16 %v4044, %v4043
  %v4174 = vpack.c.b16 %v4046, %v4045
  %4303 = vmatprep.subr.bf16.mxu0 0
  %4304 = vmatpush1.bf16.msra.mxu0 %v4047
  %4305 = vmatprep.subr.bf16.mxu0 0
  %4306 = vmatpush1.bf16.msra.mxu0 %v4048
  %4307 = vmatprep.subr.bf16.mxu0 0
  %4308 = vmatpush1.bf16.msra.mxu0 %v4049
  %4309 = vmatprep.subr.bf16.mxu0 0
  %4310 = vmatpush1.bf16.msra.mxu0 %v4050
  %4311 = vmatprep.subr.bf16.mxu0 0
  %4312 = vmatpush1.bf16.msra.mxu0 %v4051
  %4313 = vmatprep.subr.bf16.mxu0 0
  %4314 = vmatpush1.bf16.msra.mxu0 %v4052
  %4315 = vmatprep.subr.bf16.mxu0 0
  %4316 = vmatpush1.bf16.msra.mxu0 %v4053
  %4317 = vmatprep.subr.bf16.mxu0 0
  %4318 = vmatpush1.bf16.msra.mxu0 %v4054
  %4319 = vmatprep.subr.bf16.mxu0 0
  %4320 = vmatpush1.bf16.msra.mxu0 %v4055
  %4321 = vmatprep.subr.bf16.mxu0 0
  %4322 = vmatpush1.bf16.msra.mxu0 %v4056
  %4323 = vmatprep.subr.bf16.mxu0 0
  %4324 = vmatpush1.bf16.msra.mxu0 %v4057
  %4325 = vmatprep.subr.bf16.mxu0 0
  %4326 = vmatpush1.bf16.msra.mxu0 %v4058
  %4327 = vmatprep.subr.bf16.mxu0 0
  %4328 = vmatpush1.bf16.msra.mxu0 %v4059
  %4329 = vmatprep.subr.bf16.mxu0 0
  %4330 = vmatpush1.bf16.msra.mxu0 %v4060
  %4331 = vmatprep.subr.bf16.mxu0 0
  %4332 = vmatpush1.bf16.msra.mxu0 %v4061
  %4333 = vmatprep.subr.bf16.mxu0 0
  %4334 = vmatpush1.bf16.msra.mxu0 %v4062
  %4335 = vmatprep.mubr.bf16.mxu0 %v3255
  %4336 = vmatmul.mubr.bf16.gmra.mrb[0].mxu0 %v3254
  %v4337 = vpop.f32.mrb[0].mxu0
  %v4338 = vadd.f32 %v3533, %v4337
  %v4339 = vpop.f32.mrb[0].mxu0
  %v4340 = vpop.f32.mrb[0].mxu0
  %v4341 = vadd.f32 %v3533, %v4340
  %v4342 = vpop.f32.mrb[0].mxu0
  %4343 = vdwg.mxu0
  %4344 = vmatprep.subr.bf16.mxu0 0
  %4345 = vmatpush1.bf16.msra.mxu0 %v4063
  %4346 = vmatprep.subr.bf16.mxu0 0
  %4347 = vmatpush1.bf16.msra.mxu0 %v4064
  %4348 = vmatprep.subr.bf16.mxu0 0
  %4349 = vmatpush1.bf16.msra.mxu0 %v4065
  %4350 = vmatprep.subr.bf16.mxu0 0
  %4351 = vmatpush1.bf16.msra.mxu0 %v4066
  %4352 = vmatprep.subr.bf16.mxu0 0
  %4353 = vmatpush1.bf16.msra.mxu0 %v4067
  %4354 = vmatprep.subr.bf16.mxu0 0
  %4355 = vmatpush1.bf16.msra.mxu0 %v4068
  %4356 = vmatprep.subr.bf16.mxu0 0
  %4357 = vmatpush1.bf16.msra.mxu0 %v4069
  %4358 = vmatprep.subr.bf16.mxu0 0
  %4359 = vmatpush1.bf16.msra.mxu0 %v4070
  %4360 = vmatprep.subr.bf16.mxu0 0
  %4361 = vmatpush1.bf16.msra.mxu0 %v4071
  %4362 = vmatprep.subr.bf16.mxu0 0
  %4363 = vmatpush1.bf16.msra.mxu0 %v4072
  %4364 = vmatprep.subr.bf16.mxu0 0
  %4365 = vmatpush1.bf16.msra.mxu0 %v4073
  %4366 = vmatprep.subr.bf16.mxu0 0
  %4367 = vmatpush1.bf16.msra.mxu0 %v4074
  %4368 = vmatprep.subr.bf16.mxu0 0
  %4369 = vmatpush1.bf16.msra.mxu0 %v4075
  %4370 = vmatprep.subr.bf16.mxu0 0
  %4371 = vmatpush1.bf16.msra.mxu0 %v4076
  %4372 = vmatprep.subr.bf16.mxu0 0
  %4373 = vmatpush1.bf16.msra.mxu0 %v4077
  %4374 = vmatprep.subr.bf16.mxu0 0
  %4375 = vmatpush1.bf16.msra.mxu0 %v4078
  %4376 = vmatprep.mubr.bf16.mxu0 %v3257
  %4377 = vmatmul.mubr.bf16.gmra.mrb[0].mxu0 %v3256
  %v4378 = vpop.f32.mrb[0].mxu0
  %v4379 = vadd.f32 %v4338, %v4378
  %v4380 = vpop.f32.mrb[0].mxu0
  %v4381 = vpop.f32.mrb[0].mxu0
  %v4382 = vadd.f32 %v4341, %v4381
  %v4383 = vpop.f32.mrb[0].mxu0
  %4384 = vdwg.mxu0
  %4385 = vmatprep.subr.bf16.mxu0 0
  %4386 = vmatpush1.bf16.msra.mxu0 %v4079
  %4387 = vmatprep.subr.bf16.mxu0 0
  %4388 = vmatpush1.bf16.msra.mxu0 %v4080
  %4389 = vmatprep.subr.bf16.mxu0 0
  %4390 = vmatpush1.bf16.msra.mxu0 %v4081
  %4391 = vmatprep.subr.bf16.mxu0 0
  %4392 = vmatpush1.bf16.msra.mxu0 %v4082
  %4393 = vmatprep.subr.bf16.mxu0 0
  %4394 = vmatpush1.bf16.msra.mxu0 %v4083
  %4395 = vmatprep.subr.bf16.mxu0 0
  %4396 = vmatpush1.bf16.msra.mxu0 %v4084
  %4397 = vmatprep.subr.bf16.mxu0 0
  %4398 = vmatpush1.bf16.msra.mxu0 %v4085
  %4399 = vmatprep.subr.bf16.mxu0 0
  %4400 = vmatpush1.bf16.msra.mxu0 %v4086
  %4401 = vmatprep.subr.bf16.mxu0 0
  %4402 = vmatpush1.bf16.msra.mxu0 %v4087
  %4403 = vmatprep.subr.bf16.mxu0 0
  %4404 = vmatpush1.bf16.msra.mxu0 %v4088
  %4405 = vmatprep.subr.bf16.mxu0 0
  %4406 = vmatpush1.bf16.msra.mxu0 %v4089
  %4407 = vmatprep.subr.bf16.mxu0 0
  %4408 = vmatpush1.bf16.msra.mxu0 %v4090
  %4409 = vmatprep.subr.bf16.mxu0 0
  %4410 = vmatpush1.bf16.msra.mxu0 %v4091
  %4411 = vmatprep.subr.bf16.mxu0 0
  %4412 = vmatpush1.bf16.msra.mxu0 %v4092
  %4413 = vmatprep.subr.bf16.mxu0 0
  %4414 = vmatpush1.bf16.msra.mxu0 %v4093
  %4415 = vmatprep.subr.bf16.mxu0 0
  %4416 = vmatpush1.bf16.msra.mxu0 %v4094
  %4417 = vmatprep.mubr.bf16.mxu0 %v3259
  %4418 = vmatmul.mubr.bf16.gmra.mrb[0].mxu0 %v3258
  %v4419 = vpop.f32.mrb[0].mxu0
  %v4420 = vadd.f32 %v4379, %v4419
  %v4421 = vpop.f32.mrb[0].mxu0
  %v4422 = vpop.f32.mrb[0].mxu0
  %v4423 = vadd.f32 %v4382, %v4422
  %v4424 = vpop.f32.mrb[0].mxu0
  %4425 = vdwg.mxu0
  %4426 = vmatprep.subr.bf16.mxu0 0
  %4427 = vmatpush1.bf16.msra.mxu0 %v4095
  %4428 = vmatprep.subr.bf16.mxu0 0
  %4429 = vmatpush1.bf16.msra.mxu0 %v4096
  %4430 = vmatprep.subr.bf16.mxu0 0
  %4431 = vmatpush1.bf16.msra.mxu0 %v4097
  %4432 = vmatprep.subr.bf16.mxu0 0
  %4433 = vmatpush1.bf16.msra.mxu0 %v4098
  %4434 = vmatprep.subr.bf16.mxu0 0
  %4435 = vmatpush1.bf16.msra.mxu0 %v4099
  %4436 = vmatprep.subr.bf16.mxu0 0
  %4437 = vmatpush1.bf16.msra.mxu0 %v4100
  %4438 = vmatprep.subr.bf16.mxu0 0
  %4439 = vmatpush1.bf16.msra.mxu0 %v4101
  %4440 = vmatprep.subr.bf16.mxu0 0
  %4441 = vmatpush1.bf16.msra.mxu0 %v4102
  %4442 = vmatprep.subr.bf16.mxu0 0
  %4443 = vmatpush1.bf16.msra.mxu0 %v4103
  %4444 = vmatprep.subr.bf16.mxu0 0
  %4445 = vmatpush1.bf16.msra.mxu0 %v4104
  %4446 = vmatprep.subr.bf16.mxu0 0
  %4447 = vmatpush1.bf16.msra.mxu0 %v4105
  %4448 = vmatprep.subr.bf16.mxu0 0
  %4449 = vmatpush1.bf16.msra.mxu0 %v4106
  %4450 = vmatprep.subr.bf16.mxu0 0
  %4451 = vmatpush1.bf16.msra.mxu0 %v4107
  %4452 = vmatprep.subr.bf16.mxu0 0
  %4453 = vmatpush1.bf16.msra.mxu0 %v4108
  %4454 = vmatprep.subr.bf16.mxu0 0
  %4455 = vmatpush1.bf16.msra.mxu0 %v4109
  %4456 = vmatprep.subr.bf16.mxu0 0
  %4457 = vmatpush1.bf16.msra.mxu0 %v4110
  %4458 = vmatprep.mubr.bf16.mxu0 %v3261
  %4459 = vmatmul.mubr.bf16.gmra.mrb[0].mxu0 %v3260
  %v4460 = vpop.f32.mrb[0].mxu0
  %v4461 = vadd.f32 %v4420, %v4460
  %v4462 = vpop.f32.mrb[0].mxu0
  %v4463 = vpop.f32.mrb[0].mxu0
  %v4464 = vadd.f32 %v4423, %v4463
  %v4465 = vpop.f32.mrb[0].mxu0
  %4466 = vdwg.mxu0
  %4467 = vmatprep.subr.bf16.mxu0 0
  %4468 = vmatpush1.bf16.msra.mxu0 %v4111
  %4469 = vmatprep.subr.bf16.mxu0 0
  %4470 = vmatpush1.bf16.msra.mxu0 %v4112
  %4471 = vmatprep.subr.bf16.mxu0 0
  %4472 = vmatpush1.bf16.msra.mxu0 %v4113
  %4473 = vmatprep.subr.bf16.mxu0 0
  %4474 = vmatpush1.bf16.msra.mxu0 %v4114
  %4475 = vmatprep.subr.bf16.mxu0 0
  %4476 = vmatpush1.bf16.msra.mxu0 %v4115
  %4477 = vmatprep.subr.bf16.mxu0 0
  %4478 = vmatpush1.bf16.msra.mxu0 %v4116
  %4479 = vmatprep.subr.bf16.mxu0 0
  %4480 = vmatpush1.bf16.msra.mxu0 %v4117
  %4481 = vmatprep.subr.bf16.mxu0 0
  %4482 = vmatpush1.bf16.msra.mxu0 %v4118
  %4483 = vmatprep.subr.bf16.mxu0 0
  %4484 = vmatpush1.bf16.msra.mxu0 %v4119
  %4485 = vmatprep.subr.bf16.mxu0 0
  %4486 = vmatpush1.bf16.msra.mxu0 %v4120
  %4487 = vmatprep.subr.bf16.mxu0 0
  %4488 = vmatpush1.bf16.msra.mxu0 %v4121
  %4489 = vmatprep.subr.bf16.mxu0 0
  %4490 = vmatpush1.bf16.msra.mxu0 %v4122
  %4491 = vmatprep.subr.bf16.mxu0 0
  %4492 = vmatpush1.bf16.msra.mxu0 %v4123
  %4493 = vmatprep.subr.bf16.mxu0 0
  %4494 = vmatpush1.bf16.msra.mxu0 %v4124
  %4495 = vmatprep.subr.bf16.mxu0 0
  %4496 = vmatpush1.bf16.msra.mxu0 %v4125
  %4497 = vmatprep.subr.bf16.mxu0 0
  %4498 = vmatpush1.bf16.msra.mxu0 %v4126
  %4499 = vmatprep.mubr.bf16.mxu0 %v3263
  %4500 = vmatmul.mubr.bf16.gmra.mrb[0].mxu0 %v3262
  %v4501 = vpop.f32.mrb[0].mxu0
  %v4502 = vadd.f32 %v4461, %v4501
  %v4503 = vpop.f32.mrb[0].mxu0
  %v4504 = vpop.f32.mrb[0].mxu0
  %v4505 = vadd.f32 %v4464, %v4504
  %v4506 = vpop.f32.mrb[0].mxu0
  %4507 = vdwg.mxu0
  %4508 = vmatprep.subr.bf16.mxu0 0
  %4509 = vmatpush1.bf16.msra.mxu0 %v4127
  %4510 = vmatprep.subr.bf16.mxu0 0
  %4511 = vmatpush1.bf16.msra.mxu0 %v4128
  %4512 = vmatprep.subr.bf16.mxu0 0
  %4513 = vmatpush1.bf16.msra.mxu0 %v4129
  %4514 = vmatprep.subr.bf16.mxu0 0
  %4515 = vmatpush1.bf16.msra.mxu0 %v4130
  %4516 = vmatprep.subr.bf16.mxu0 0
  %4517 = vmatpush1.bf16.msra.mxu0 %v4131
  %4518 = vmatprep.subr.bf16.mxu0 0
  %4519 = vmatpush1.bf16.msra.mxu0 %v4132
  %4520 = vmatprep.subr.bf16.mxu0 0
  %4521 = vmatpush1.bf16.msra.mxu0 %v4133
  %4522 = vmatprep.subr.bf16.mxu0 0
  %4523 = vmatpush1.bf16.msra.mxu0 %v4134
  %4524 = vmatprep.subr.bf16.mxu0 0
  %4525 = vmatpush1.bf16.msra.mxu0 %v4135
  %4526 = vmatprep.subr.bf16.mxu0 0
  %4527 = vmatpush1.bf16.msra.mxu0 %v4136
  %4528 = vmatprep.subr.bf16.mxu0 0
  %4529 = vmatpush1.bf16.msra.mxu0 %v4137
  %4530 = vmatprep.subr.bf16.mxu0 0
  %4531 = vmatpush1.bf16.msra.mxu0 %v4138
  %4532 = vmatprep.subr.bf16.mxu0 0
  %4533 = vmatpush1.bf16.msra.mxu0 %v4139
  %4534 = vmatprep.subr.bf16.mxu0 0
  %4535 = vmatpush1.bf16.msra.mxu0 %v4140
  %4536 = vmatprep.subr.bf16.mxu0 0
  %4537 = vmatpush1.bf16.msra.mxu0 %v4141
  %4538 = vmatprep.subr.bf16.mxu0 0
  %4539 = vmatpush1.bf16.msra.mxu0 %v4142
  %4540 = vmatprep.mubr.bf16.mxu0 %v3265
  %4541 = vmatmul.mubr.bf16.gmra.mrb[0].mxu0 %v3264
  %v4542 = vpop.f32.mrb[0].mxu0
  %v4543 = vadd.f32 %v4502, %v4542
  %v4544 = vpop.f32.mrb[0].mxu0
  %v4545 = vpop.f32.mrb[0].mxu0
  %v4546 = vadd.f32 %v4505, %v4545
  %v4547 = vpop.f32.mrb[0].mxu0
  %4548 = vdwg.mxu0
  %4549 = vmatprep.subr.bf16.mxu0 0
  %4550 = vmatpush1.bf16.msra.mxu0 %v4143
  %4551 = vmatprep.subr.bf16.mxu0 0
  %4552 = vmatpush1.bf16.msra.mxu0 %v4144
  %4553 = vmatprep.subr.bf16.mxu0 0
  %4554 = vmatpush1.bf16.msra.mxu0 %v4145
  %4555 = vmatprep.subr.bf16.mxu0 0
  %4556 = vmatpush1.bf16.msra.mxu0 %v4146
  %4557 = vmatprep.subr.bf16.mxu0 0
  %4558 = vmatpush1.bf16.msra.mxu0 %v4147
  %4559 = vmatprep.subr.bf16.mxu0 0
  %4560 = vmatpush1.bf16.msra.mxu0 %v4148
  %4561 = vmatprep.subr.bf16.mxu0 0
  %4562 = vmatpush1.bf16.msra.mxu0 %v4149
  %4563 = vmatprep.subr.bf16.mxu0 0
  %4564 = vmatpush1.bf16.msra.mxu0 %v4150
  %4565 = vmatprep.subr.bf16.mxu0 0
  %4566 = vmatpush1.bf16.msra.mxu0 %v4151
  %4567 = vmatprep.subr.bf16.mxu0 0
  %4568 = vmatpush1.bf16.msra.mxu0 %v4152
  %4569 = vmatprep.subr.bf16.mxu0 0
  %4570 = vmatpush1.bf16.msra.mxu0 %v4153
  %4571 = vmatprep.subr.bf16.mxu0 0
  %4572 = vmatpush1.bf16.msra.mxu0 %v4154
  %4573 = vmatprep.subr.bf16.mxu0 0
  %4574 = vmatpush1.bf16.msra.mxu0 %v4155
  %4575 = vmatprep.subr.bf16.mxu0 0
  %4576 = vmatpush1.bf16.msra.mxu0 %v4156
  %4577 = vmatprep.subr.bf16.mxu0 0
  %4578 = vmatpush1.bf16.msra.mxu0 %v4157
  %4579 = vmatprep.subr.bf16.mxu0 0
  %4580 = vmatpush1.bf16.msra.mxu0 %v4158
  %4581 = vmatprep.mubr.bf16.mxu0 %v3267
  %4582 = vmatmul.mubr.bf16.gmra.mrb[0].mxu0 %v3266
  %v4583 = vpop.f32.mrb[0].mxu0
  %v4584 = vadd.f32 %v4543, %v4583
  %v4585 = vpop.f32.mrb[0].mxu0
  %v4586 = vpop.f32.mrb[0].mxu0
  %v4587 = vadd.f32 %v4546, %v4586
  %v4588 = vpop.f32.mrb[0].mxu0
  %4589 = vdwg.mxu0
  %4590 = vmatprep.subr.bf16.mxu0 0
  %4591 = vmatpush1.bf16.msra.mxu0 %v4159
  %4592 = vmatprep.subr.bf16.mxu0 0
  %4593 = vmatpush1.bf16.msra.mxu0 %v4160
  %4594 = vmatprep.subr.bf16.mxu0 0
  %4595 = vmatpush1.bf16.msra.mxu0 %v4161
  %4596 = vmatprep.subr.bf16.mxu0 0
  %4597 = vmatpush1.bf16.msra.mxu0 %v4162
  %4598 = vmatprep.subr.bf16.mxu0 0
  %4599 = vmatpush1.bf16.msra.mxu0 %v4163
  %4600 = vmatprep.subr.bf16.mxu0 0
  %4601 = vmatpush1.bf16.msra.mxu0 %v4164
  %4602 = vmatprep.subr.bf16.mxu0 0
  %4603 = vmatpush1.bf16.msra.mxu0 %v4165
  %4604 = vmatprep.subr.bf16.mxu0 0
  %4605 = vmatpush1.bf16.msra.mxu0 %v4166
  %4606 = vmatprep.subr.bf16.mxu0 0
  %4607 = vmatpush1.bf16.msra.mxu0 %v4167
  %4608 = vmatprep.subr.bf16.mxu0 0
  %4609 = vmatpush1.bf16.msra.mxu0 %v4168
  %4610 = vmatprep.subr.bf16.mxu0 0
  %4611 = vmatpush1.bf16.msra.mxu0 %v4169
  %4612 = vmatprep.subr.bf16.mxu0 0
  %4613 = vmatpush1.bf16.msra.mxu0 %v4170
  %4614 = vmatprep.subr.bf16.mxu0 0
  %4615 = vmatpush1.bf16.msra.mxu0 %v4171
  %4616 = vmatprep.subr.bf16.mxu0 0
  %4617 = vmatpush1.bf16.msra.mxu0 %v4172
  %4618 = vmatprep.subr.bf16.mxu0 0
  %4619 = vmatpush1.bf16.msra.mxu0 %v4173
  %4620 = vmatprep.subr.bf16.mxu0 0
  %4621 = vmatpush1.bf16.msra.mxu0 %v4174
  %4622 = vmatprep.mubr.bf16.mxu0 %v3269
  %4623 = vmatmul.mubr.bf16.gmra.mrb[0].mxu0 %v3268
  %v4624 = vpop.f32.mrb[0].mxu0
  %v4625 = vadd.f32 %v4584, %v4624
  %v4626 = vpop.f32.mrb[0].mxu0
  %v4627 = vpop.f32.mrb[0].mxu0
  %v4628 = vadd.f32 %v4587, %v4627
  %v4629 = vpop.f32.mrb[0].mxu0
  %4630 = vdwg.mxu0
  %v4631 = vadd.f32 %v2594, %v4625
  %v4632 = vadd.f32 %v2595, %v4628
  %s4633 = scalar_lea.vmem %s14, 1
  %v4634 = vld [vmem:[%s4633] sm:$0x1]
  %s4635 = scalar_lea.vmem %s15, 1
  %v4636 = vld [vmem:[%s4635] sm:$0x1]
  %v4637 = vsel %vm192, %v4631, 0.0
  %4638 = vadd.xlane.f32.xlu0 %v4637
  %v4639 = vpop.xlane.xlu0 %4638
  %v4640 = vsel %vm192, %v4632, 0.0
  %4641 = vadd.xlane.f32.xlu0 %v4640
  %v4642 = vpop.xlane.xlu0 %4641
  %v4643 = vmul.f32 %v4639, %v364
  %v4644 = vmul.f32 %v4642, %v364
  %v4645 = vsub.f32 %v4631, %v4643
  %v4646 = vsub.f32 %v4632, %v4644
  %v4647 = vmul.f32 %v4645, %v4645
  %v4648 = vmul.f32 %v4646, %v4646
  %v4649 = vsel %vm192, %v4647, 0.0
  %4650 = vadd.xlane.f32.xlu0 %v4649
  %v4651 = vpop.xlane.xlu0 %4650
  %v4652 = vsel %vm192, %v4648, 0.0
  %4653 = vadd.xlane.f32.xlu0 %v4652
  %v4654 = vpop.xlane.xlu0 %4653
  %v4655 = vmul.f32 %v4651, %v364
  %v4656 = vmul.f32 %v4654, %v364
  %v4657 = vadd.f32 %v4655, 1e-05
  %v4658 = vadd.f32 %v4656, 1e-05
  %v4659 = vrsqrt.pop %v4657
  %v4660 = vrsqrt.pop %v4658
  %v4661 = vmul.f32 %v4645, %v4659
  %v4662 = vmul.f32 %v4646, %v4660
  %v4664 = vlaneseq
  %v4665 = vshrl.u32 %v4664, 7
  %v4666 = vsub.s32 0, %v4665
  %v4667 = vrot.slane %v4634, %v4666
  %v4669 = vmul.f32 %v4661, %v4667
  %v4670 = vmul.f32 %v4662, %v4667
  %v4672 = vlaneseq
  %v4673 = vshrl.u32 %v4672, 7
  %v4674 = vsub.s32 0, %v4673
  %v4675 = vrot.slane %v4636, %v4674
  %v4677 = vadd.f32 %v4669, %v4675
  %v4678 = vadd.f32 %v4670, %v4675
  %v4679 = vpack.c.bf16 %v4678, %v4677
  %v4680 = vld [vmem:[%s16] sm:$0xf]
  %v4681 = vld [vmem:[%s16 + $0x4] sm:$0xf]
  %v4682 = vld [vmem:[%s16 + $0x8] sm:$0xf]
  %v4683 = vld [vmem:[%s16 + $0xc] sm:$0xf]
  %v4684 = vld [vmem:[%s17] sm:$0x1]
  %v4686 = vlaneseq
  %v4687 = vshrl.u32 %v4686, 7
  %v4688 = vsub.s32 0, %v4687
  %v4689 = vrot.slane %v4684, %v4688
  %v4695 = vunpack.c.l.b16 %v4680
  %v4696 = vunpack.c.l.b16 %v4681
  %v4697 = vunpack.c.l.b16 %v4682
  %v4698 = vunpack.c.l.b16 %v4683
  %v4699 = vpack.c.b16 %v4696, %v4695
  %v4700 = vpack.c.b16 %v4698, %v4697
  %v4704 = vsel %vm192, %v4679, 0
  %4706 = vmatprep.subr.bf16.mxu0 0
  %4707 = vmatpush1.bf16.msra.mxu0 %v4699
  %4708 = vmatprep.subr.bf16.mxu0 0
  %4709 = vmatpush1.bf16.msra.mxu0 %v4700
  %4710 = vmatprep.subr.bf16.mxu0 0
  %4711 = vmatpush1.bf16.msra.mxu0 0
  %4712 = vmatprep.subr.bf16.mxu0 0
  %4713 = vmatpush1.bf16.msra.mxu0 0
  %4714 = vmatprep.subr.bf16.mxu0 0
  %4715 = vmatpush1.bf16.msra.mxu0 0
  %4716 = vmatprep.subr.bf16.mxu0 0
  %4717 = vmatpush1.bf16.msra.mxu0 0
  %4718 = vmatprep.subr.bf16.mxu0 0
  %4719 = vmatpush1.bf16.msra.mxu0 0
  %4720 = vmatprep.subr.bf16.mxu0 0
  %4721 = vmatpush1.bf16.msra.mxu0 0
  %4722 = vmatprep.subr.bf16.mxu0 0
  %4723 = vmatpush1.bf16.msra.mxu0 0
  %4724 = vmatprep.subr.bf16.mxu0 0
  %4725 = vmatpush1.bf16.msra.mxu0 0
  %4726 = vmatprep.subr.bf16.mxu0 0
  %4727 = vmatpush1.bf16.msra.mxu0 0
  %4728 = vmatprep.subr.bf16.mxu0 0
  %4729 = vmatpush1.bf16.msra.mxu0 0
  %4730 = vmatprep.subr.bf16.mxu0 0
  %4731 = vmatpush1.bf16.msra.mxu0 0
  %4732 = vmatprep.subr.bf16.mxu0 0
  %4733 = vmatpush1.bf16.msra.mxu0 0
  %4734 = vmatprep.subr.bf16.mxu0 0
  %4735 = vmatpush1.bf16.msra.mxu0 0
  %4736 = vmatprep.subr.bf16.mxu0 0
  %4737 = vmatpush1.bf16.msra.mxu0 0
  %4738 = vmatprep.mubr.bf16.mxu0 0
  %4739 = vmatmul.mubr.bf16.gmra.mrb[0].mxu0 %v4704
  %v4740 = vpop.f32.mrb[0].mxu0
  %v4741 = vadd.f32 %v4689, %v4740
  %v4742 = vpop.f32.mrb[0].mxu0
  %v4743 = vpop.f32.mrb[0].mxu0
  %v4744 = vadd.f32 %v4689, %v4743
  %v4745 = vpop.f32.mrb[0].mxu0
  %4746 = vdwg.mxu0
  %vm4747 = vcmask 31744
  %4748 = vst.msk [vmem:[%s18] sm:$0xff] %vm4747, %v4741
  %4749 = vst.msk [vmem:[%s18 + $0x8] sm:$0xff] %vm4747, %v4744
  // Predicated region
  $region74: #{gcn_transformer_forward.1} parent=0 // pred_check
    _
  $region75: #{gcn_transformer_forward.1} parent=0 // pred_check_branch
    %4751 = sbr.rel (0) target = $region77
  $region76: #{gcn_transformer_forward.1} parent=0 // pred_region
    _
  $region77: #{gcn_transformer_forward.1} parent=0 // pred_fallthru
    _
  // Predicated region
  $region78: #{gcn_transformer_forward.1} parent=0 // pred_check
    _
  $region79: #{gcn_transformer_forward.1} parent=0 // pred_check_branch
    %4753 = sbr.rel (0) target = $region81
  $region80: #{gcn_transformer_forward.1} parent=0 // pred_region
    _
  $region81: #{gcn_transformer_forward.1} parent=0 // pred_fallthru
    _

</llo_original>
